<compile_context>
chip_gen: v7x
topology: tpu7x:2x2x1
jax: 0.10.0
libtpu: 0.0.40
codegen_flags: <defaults>
</compile_context>

<pallas_src>
import jax
import jax.numpy as jnp
import numpy as np
from jax import lax
from jax.experimental import pallas as pl
from jax.experimental.pallas import tpu as pltpu


_MXU_DTYPE = jnp.bfloat16      # MXU operand dtype (accumulation stays f32)
_MAX_UNROLL_STEPS = 16         # full static unroll up to this many RK4 steps


# ----------------------------- Pallas kernel --------------------------------
def _swag_rk4_fused_kernel(dt_ref, hdt_ref, sdt_ref, z_ref, w1_ref, b1_ref,
                           w2_ref, b2_ref, out_ref):
    """One grid step integrates RK4 for one group of SWAG samples.

    Ref shapes (SDp = padded Sg*D, SHp = padded Sg*H, both multiples of 128):
      dt_ref/hdt_ref/sdt_ref : (T-1,)  SMEM  dt, dt/2, dt/6 per interval
      z_ref   : (B, SDp)      VMEM  initial state, tiled per sample block
      w1_ref  : (SDp, SHp)    VMEM  block-diagonal first-layer weights
      b1_ref  : (B, SHp)      VMEM  pre-broadcast first-layer biases
      w2_ref  : (SHp, SDp)    VMEM  block-diagonal second-layer weights
      b2_ref  : (B, SDp)      VMEM  pre-broadcast second-layer biases
      out_ref : (T, B, SDp)   VMEM  lane-packed trajectory for this group
    """
    T = out_ref.shape[0]

    # Cast weights to bf16 once (MXU-native operands, half the vreg footprint).
    w1 = w1_ref[...].astype(_MXU_DTYPE)
    w2 = w2_ref[...].astype(_MXU_DTYPE)
    b1 = b1_ref[...]                         # already (B, SHp): no in-loop bcast
    b2 = b2_ref[...]

    def f(zz):
        h = jnp.tanh(jnp.dot(zz.astype(_MXU_DTYPE), w1,
                             preferred_element_type=jnp.float32) + b1)
        return jnp.dot(h.astype(_MXU_DTYPE), w2,
                       preferred_element_type=jnp.float32) + b2

    def rk4_step(j, z):
        # Precomputed scalar coefficients: single SMEM reads, no re-derivation.
        dt, hdt, sdt = dt_ref[j], hdt_ref[j], sdt_ref[j]
        k1 = f(z)
        k2 = f(z + hdt * k1)
        k3 = f(z + hdt * k2)
        k4 = f(z + dt * k3)
        z = z + sdt * (k1 + 2.0 * k2 + 2.0 * k3 + k4)
        out_ref[j + 1, :, :] = z             # lane-dense (B, SDp=128k) store
        return z

    z = z_ref[...]                           # state lives in registers
    out_ref[0, :, :] = z                     # trajectory includes state at t[0]

    if T - 1 <= _MAX_UNROLL_STEPS:
        for j in range(T - 1):               # full unroll: LLO sees all work
            z = rk4_step(j, z)
    else:
        # Guard against vreg-spill blowup at large T.
        lax.fori_loop(0, T - 1, rk4_step, z, unroll=2)


# ------------------------------- wrapper -------------------------------------
def _round_up(n, m):
    return ((n + m - 1) // m) * m


def _detect_tensorcore_count():
    """Best-effort TensorCores-per-device count (2 on v7x-class chips)."""
    try:
        n = int(getattr(jax.devices()[0], "num_cores", 1))
        return max(1, n)
    except Exception:
        return 1


def swag_forward(z, t, w1_s, b1_s, w2_s, b2_s, core_groups=None):
    """SWAG ensemble forward pass.

    z    : (B, D) float32 initial state
    t    : (T,)   float32 time grid
    w1_s : (S, D, H), b1_s: (S, 1, H), w2_s: (S, H, D), b2_s: (S, 1, D)
           per-sample ODE-func parameters (model.sample() drawn outside).
    returns (S, T, B, D) float32 -- stacked per-sample RK4 trajectories,
            i.e. torch.stack([integrate_swag(z, t, 'rk4') for _ in range(S)]).
    """
    B, D = z.shape
    T = int(t.shape[0])
    S, _, H = w1_s.shape

    # ---- group split over TensorCores (v7x: 2 groups; v5e/v6e: 1) ----------
    if core_groups is None:
        core_groups = _detect_tensorcore_count()
    G = max(1, min(int(core_groups), S))
    while S % G:                              # G must divide S
        G -= 1
    Sg = S // G
    SD, SH = Sg * D, Sg * H
    SDp, SHp = _round_up(SD, 128), _round_up(SH, 128)   # lane-dense padding

    f32 = jnp.float32

    # ---- pack the per-group sample axis into lanes (plain-JAX glue) --------
    eye = jnp.eye(Sg, dtype=f32)
    w1_g = w1_s.astype(f32).reshape(G, Sg, D, H)
    w2_g = w2_s.astype(f32).reshape(G, Sg, H, D)
    # Block-diagonal weights: block (p, p) of group g holds sample g*Sg+p.
    w1_bd = jnp.einsum('pq,gpdh->gpdqh', eye, w1_g).reshape(G, SD, SH)
    w2_bd = jnp.einsum('pq,gphd->gphqd', eye, w2_g).reshape(G, SH, SD)
    # Zero-pad to 128-lane multiples (padded rows/cols are exact zeros).
    w1_bd = jnp.pad(w1_bd, ((0, 0), (0, SDp - SD), (0, SHp - SH)))
    w2_bd = jnp.pad(w2_bd, ((0, 0), (0, SHp - SH), (0, SDp - SD)))

    b1_p = jnp.pad(b1_s.astype(f32).reshape(G, SH), ((0, 0), (0, SHp - SH)))
    b2_p = jnp.pad(b2_s.astype(f32).reshape(G, SD), ((0, 0), (0, SDp - SD)))
    # Pre-broadcast biases in the wrapper (hoists broadcast_in_dim entirely).
    b1_p = jnp.broadcast_to(b1_p[:, None, :], (G, B, SHp))
    b2_p = jnp.broadcast_to(b2_p[:, None, :], (G, B, SDp))

    z_p = jnp.pad(jnp.tile(z.astype(f32), (1, Sg)), ((0, 0), (0, SDp - SD)))
    z_p = jnp.broadcast_to(z_p[None], (G, B, SDp))

    # Per-interval scalar coefficients, precomputed once (SMEM scalar reads).
    dt = (t[1:] - t[:-1]).astype(f32)
    hdt = 0.5 * dt
    sdt = dt / 6.0

    grid_spec = pltpu.PrefetchScalarGridSpec(
        num_scalar_prefetch=0,
        grid=(G,),                                   # sample groups
        in_specs=[
            pl.BlockSpec(memory_space=pltpu.MemorySpace.SMEM),    # dt
            pl.BlockSpec(memory_space=pltpu.MemorySpace.SMEM),    # dt/2
            pl.BlockSpec(memory_space=pltpu.MemorySpace.SMEM),    # dt/6
            pl.BlockSpec((None, B, SDp), lambda g: (g, 0, 0)),        # z
            pl.BlockSpec((None, SDp, SHp), lambda g: (g, 0, 0)),      # W1
            pl.BlockSpec((None, B, SHp), lambda g: (g, 0, 0)),        # b1
            pl.BlockSpec((None, SHp, SDp), lambda g: (g, 0, 0)),      # W2
            pl.BlockSpec((None, B, SDp), lambda g: (g, 0, 0)),        # b2
        ],
        out_specs=pl.BlockSpec((None, T, B, SDp), lambda g: (g, 0, 0, 0)),
    )

    out = pl.pallas_call(
        _swag_rk4_fused_kernel,
        grid_spec=grid_spec,
        out_shape=jax.ShapeDtypeStruct((G, T, B, SDp), f32),
        compiler_params=pltpu.CompilerParams(
            dimension_semantics=("parallel",)),       # groups are independent
    )(dt, hdt, sdt, z_p, w1_bd, b1_p, w2_bd, b2_p)

    # (G, T, B, SDp) -> strip lane padding -> (S, T, B, D)
    out = out[..., :SD].reshape(G, T, B, Sg, D)
    return jnp.transpose(out, (0, 3, 1, 2, 4)).reshape(S, T, B, D)


# ----------------------- pure-JAX reference (for checking) ------------------
def _ref_forward(z, t, w1_s, b1_s, w2_s, b2_s, mxu_dtype=_MXU_DTYPE):
    """Reference with the same MXU operand precision as the kernel."""
    def mm(a, b):
        return jnp.dot(a.astype(mxu_dtype), b.astype(mxu_dtype),
                       preferred_element_type=jnp.float32)

    dts = (t[1:] - t[:-1]).astype(jnp.float32)

    def one_sample(w1, b1, w2, b2):
        def f(zz):
            return mm(jnp.tanh(mm(zz, w1) + b1), w2) + b2

        def step(zc, dt):
            k1 = f(zc)
            k2 = f(zc + 0.5 * dt * k1)
            k3 = f(zc + 0.5 * dt * k2)
            k4 = f(zc + dt * k3)
            zn = zc + (dt / 6.0) * (k1 + 2.0 * k2 + 2.0 * k3 + k4)
            return zn, zn

        _, traj = lax.scan(step, z, dts)
        return jnp.concatenate([z[None], traj], axis=0)

    return jax.vmap(one_sample)(w1_s, b1_s, w2_s, b2_s)


# --------------------------------- main --------------------------------------
if __name__ == "__main__":
    # batch, state-dim, hidden, time-points, n_samples
    # (growing B toward 128 is near-free throughput on the serial RK4 chain;
    #  kept small here to match the module's toy scale)
    B, D, H, T, S = 8, 16, 32, 8, 4

    key = jax.random.PRNGKey(0)
    kz, kw1, kb1, kw2, kb2, keps = jax.random.split(key, 6)

    # Inputs
    z = jax.random.normal(kz, (B, D), dtype=jnp.float32)
    t = jnp.linspace(0.0, 1.0, T, dtype=jnp.float32)

    # SWAG mean parameters (deterministic init)
    w1_mean = jax.random.normal(kw1, (D, H), dtype=jnp.float32) / jnp.sqrt(D)
    b1_mean = jax.random.normal(kb1, (1, H), dtype=jnp.float32) * 0.1
    w2_mean = jax.random.normal(kw2, (H, D), dtype=jnp.float32) / jnp.sqrt(H)
    b2_mean = jax.random.normal(kb2, (1, D), dtype=jnp.float32) * 0.1

    # Diagonal SWAG std (fixed, deterministic)
    sigma = 0.02

    # model.sample() x n_samples -> stacked sampled weights (plain-JAX glue)
    e1, e2, e3, e4 = jax.random.split(keps, 4)
    w1_s = w1_mean[None] + sigma * jax.random.normal(e1, (S, D, H), jnp.float32)
    b1_s = b1_mean[None] + sigma * jax.random.normal(e2, (S, 1, H), jnp.float32)
    w2_s = w2_mean[None] + sigma * jax.random.normal(e3, (S, H, D), jnp.float32)
    b2_s = b2_mean[None] + sigma * jax.random.normal(e4, (S, 1, D), jnp.float32)

    pred_zt = jax.block_until_ready(swag_forward(z, t, w1_s, b1_s, w2_s, b2_s))

    # Sanity check against the pure-JAX reference (matched MXU precision).
    ref = jax.block_until_ready(_ref_forward(z, t, w1_s, b1_s, w2_s, b2_s))
    assert pred_zt.shape == (S, T, B, D), pred_zt.shape
    np.testing.assert_allclose(np.asarray(pred_zt), np.asarray(ref),
                               rtol=2e-2, atol=2e-2)

    print("KERNEL_OK")
</pallas_src>

<mosaic_0001>
module attributes {stable_mosaic.version = 11 : i64} {
  func.func @_swag_rk4_fused_kernel(%arg0: i32, %arg1: memref<7xf32, #tpu.memory_space<smem>>, %arg2: memref<7xf32, #tpu.memory_space<smem>>, %arg3: memref<7xf32, #tpu.memory_space<smem>>, %arg4: memref<1x8x128xf32, #tpu.memory_space<vmem>>, %arg5: memref<1x128x128xf32, #tpu.memory_space<vmem>>, %arg6: memref<1x8x128xf32, #tpu.memory_space<vmem>>, %arg7: memref<1x128x128xf32, #tpu.memory_space<vmem>>, %arg8: memref<1x8x128xf32, #tpu.memory_space<vmem>>, %arg9: memref<1x8x8x128xf32, #tpu.memory_space<vmem>>) attributes {dimension_semantics = [#tpu.dimension_semantics<parallel>], iteration_bounds = array<i64: 1>, scalar_prefetch = 0 : i64, scratch_operands = 0 : i64, tpu.core_type = #tpu.core_type<tc>, window_params = [{transform_indices = @transform_0, window_bounds = array<i64: 7>}, {transform_indices = @transform_1, window_bounds = array<i64: 7>}, {transform_indices = @transform_2, window_bounds = array<i64: 7>}, {transform_indices = @transform_3, window_bounds = array<i64: 1, 8, 128>}, {transform_indices = @transform_4, window_bounds = array<i64: 1, 128, 128>}, {transform_indices = @transform_5, window_bounds = array<i64: 1, 8, 128>}, {transform_indices = @transform_6, window_bounds = array<i64: 1, 128, 128>}, {transform_indices = @transform_7, window_bounds = array<i64: 1, 8, 128>}, {transform_indices = @transform_8, window_bounds = array<i64: 1, 8, 8, 128>}]} {
    %c0 = arith.constant 0 : index
    %c0_0 = arith.constant 0 : index
    %c0_1 = arith.constant 0 : index
    %0 = vector.load %arg5[%c0, %c0_0, %c0_1] : memref<1x128x128xf32, #tpu.memory_space<vmem>>, vector<1x128x128xf32>
    %1 = vector.shape_cast %0 : vector<1x128x128xf32> to vector<128x128xf32>
    %2 = arith.truncf %1 : vector<128x128xf32> to vector<128x128xbf16>
    %c0_2 = arith.constant 0 : index
    %c0_3 = arith.constant 0 : index
    %c0_4 = arith.constant 0 : index
    %3 = vector.load %arg7[%c0_2, %c0_3, %c0_4] : memref<1x128x128xf32, #tpu.memory_space<vmem>>, vector<1x128x128xf32>
    %4 = vector.shape_cast %3 : vector<1x128x128xf32> to vector<128x128xf32>
    %5 = arith.truncf %4 : vector<128x128xf32> to vector<128x128xbf16>
    %c0_5 = arith.constant 0 : index
    %c0_6 = arith.constant 0 : index
    %c0_7 = arith.constant 0 : index
    %6 = vector.load %arg6[%c0_5, %c0_6, %c0_7] : memref<1x8x128xf32, #tpu.memory_space<vmem>>, vector<1x8x128xf32>
    %7 = vector.shape_cast %6 : vector<1x8x128xf32> to vector<8x128xf32>
    %c0_8 = arith.constant 0 : index
    %c0_9 = arith.constant 0 : index
    %c0_10 = arith.constant 0 : index
    %8 = vector.load %arg8[%c0_8, %c0_9, %c0_10] : memref<1x8x128xf32, #tpu.memory_space<vmem>>, vector<1x8x128xf32>
    %9 = vector.shape_cast %8 : vector<1x8x128xf32> to vector<8x128xf32>
    %c0_11 = arith.constant 0 : index
    %c0_12 = arith.constant 0 : index
    %c0_13 = arith.constant 0 : index
    %10 = vector.load %arg4[%c0_11, %c0_12, %c0_13] : memref<1x8x128xf32, #tpu.memory_space<vmem>>, vector<1x8x128xf32>
    %11 = vector.shape_cast %10 : vector<1x8x128xf32> to vector<8x128xf32>
    %c0_14 = arith.constant 0 : index
    %c0_15 = arith.constant 0 : index
    %c0_16 = arith.constant 0 : index
    %c0_17 = arith.constant 0 : index
    %12 = vector.load %arg9[%c0_14, %c0_15, %c0_16, %c0_17] : memref<1x8x8x128xf32, #tpu.memory_space<vmem>>, vector<1x1x8x128xf32>
    %13 = vector.shape_cast %12 : vector<1x1x8x128xf32> to vector<8x128xf32>
    %14 = vector.shape_cast %11 : vector<8x128xf32> to vector<1x1x8x128xf32>
    tpu.vector_store %arg9[%c0_14, %c0_15, %c0_16, %c0_17], %14 {strides = array<i32>} : memref<1x8x8x128xf32, #tpu.memory_space<vmem>>, vector<1x1x8x128xf32>,
    %c0_18 = arith.constant 0 : index
    %15 = memref.load %arg1[%c0_18] : memref<7xf32, #tpu.memory_space<smem>>
    %c0_19 = arith.constant 0 : index
    %16 = memref.load %arg2[%c0_19] : memref<7xf32, #tpu.memory_space<smem>>
    %c0_20 = arith.constant 0 : index
    %17 = memref.load %arg3[%c0_20] : memref<7xf32, #tpu.memory_space<smem>>
    %18 = arith.truncf %11 : vector<8x128xf32> to vector<8x128xbf16>
    %cst = arith.constant dense<0.000000e+00> : vector<8x128xf32>
    %19 = tpu.matmul %18, %2, %cst {dimension_numbers = #tpu.dot_dimension_numbers<[1], [0], [0], [1], [0, 0, 1, 1], [], []>} : vector<8x128xbf16>, vector<128x128xbf16>, vector<8x128xf32> -> vector<8x128xf32>
    %20 = arith.addf %19, %7 : vector<8x128xf32>
    %21 = math.tanh %20 : vector<8x128xf32>
    %22 = arith.truncf %21 : vector<8x128xf32> to vector<8x128xbf16>
    %cst_21 = arith.constant dense<0.000000e+00> : vector<8x128xf32>
    %23 = tpu.matmul %22, %5, %cst_21 {dimension_numbers = #tpu.dot_dimension_numbers<[1], [0], [0], [1], [0, 0, 1, 1], [], []>} : vector<8x128xbf16>, vector<128x128xbf16>, vector<8x128xf32> -> vector<8x128xf32>
    %24 = arith.addf %23, %9 : vector<8x128xf32>
    %25 = vector.broadcast %16 : f32 to vector<8x128xf32>
    %26 = arith.mulf %25, %24 : vector<8x128xf32>
    %27 = arith.addf %11, %26 : vector<8x128xf32>
    %28 = arith.truncf %27 : vector<8x128xf32> to vector<8x128xbf16>
    %cst_22 = arith.constant dense<0.000000e+00> : vector<8x128xf32>
    %29 = tpu.matmul %28, %2, %cst_22 {dimension_numbers = #tpu.dot_dimension_numbers<[1], [0], [0], [1], [0, 0, 1, 1], [], []>} : vector<8x128xbf16>, vector<128x128xbf16>, vector<8x128xf32> -> vector<8x128xf32>
    %30 = arith.addf %29, %7 : vector<8x128xf32>
    %31 = math.tanh %30 : vector<8x128xf32>
    %32 = arith.truncf %31 : vector<8x128xf32> to vector<8x128xbf16>
    %cst_23 = arith.constant dense<0.000000e+00> : vector<8x128xf32>
    %33 = tpu.matmul %32, %5, %cst_23 {dimension_numbers = #tpu.dot_dimension_numbers<[1], [0], [0], [1], [0, 0, 1, 1], [], []>} : vector<8x128xbf16>, vector<128x128xbf16>, vector<8x128xf32> -> vector<8x128xf32>
    %34 = arith.addf %33, %9 : vector<8x128xf32>
    %35 = vector.broadcast %16 : f32 to vector<8x128xf32>
    %36 = arith.mulf %35, %34 : vector<8x128xf32>
    %37 = arith.addf %11, %36 : vector<8x128xf32>
    %38 = arith.truncf %37 : vector<8x128xf32> to vector<8x128xbf16>
    %cst_24 = arith.constant dense<0.000000e+00> : vector<8x128xf32>
    %39 = tpu.matmul %38, %2, %cst_24 {dimension_numbers = #tpu.dot_dimension_numbers<[1], [0], [0], [1], [0, 0, 1, 1], [], []>} : vector<8x128xbf16>, vector<128x128xbf16>, vector<8x128xf32> -> vector<8x128xf32>
    %40 = arith.addf %39, %7 : vector<8x128xf32>
    %41 = math.tanh %40 : vector<8x128xf32>
    %42 = arith.truncf %41 : vector<8x128xf32> to vector<8x128xbf16>
    %cst_25 = arith.constant dense<0.000000e+00> : vector<8x128xf32>
    %43 = tpu.matmul %42, %5, %cst_25 {dimension_numbers = #tpu.dot_dimension_numbers<[1], [0], [0], [1], [0, 0, 1, 1], [], []>} : vector<8x128xbf16>, vector<128x128xbf16>, vector<8x128xf32> -> vector<8x128xf32>
    %44 = arith.addf %43, %9 : vector<8x128xf32>
    %45 = vector.broadcast %15 : f32 to vector<8x128xf32>
    %46 = arith.mulf %45, %44 : vector<8x128xf32>
    %47 = arith.addf %11, %46 : vector<8x128xf32>
    %48 = arith.truncf %47 : vector<8x128xf32> to vector<8x128xbf16>
    %cst_26 = arith.constant dense<0.000000e+00> : vector<8x128xf32>
    %49 = tpu.matmul %48, %2, %cst_26 {dimension_numbers = #tpu.dot_dimension_numbers<[1], [0], [0], [1], [0, 0, 1, 1], [], []>} : vector<8x128xbf16>, vector<128x128xbf16>, vector<8x128xf32> -> vector<8x128xf32>
    %50 = arith.addf %49, %7 : vector<8x128xf32>
    %51 = math.tanh %50 : vector<8x128xf32>
    %52 = arith.truncf %51 : vector<8x128xf32> to vector<8x128xbf16>
    %cst_27 = arith.constant dense<0.000000e+00> : vector<8x128xf32>
    %53 = tpu.matmul %52, %5, %cst_27 {dimension_numbers = #tpu.dot_dimension_numbers<[1], [0], [0], [1], [0, 0, 1, 1], [], []>} : vector<8x128xbf16>, vector<128x128xbf16>, vector<8x128xf32> -> vector<8x128xf32>
    %54 = arith.addf %53, %9 : vector<8x128xf32>
    %cst_28 = arith.constant 2.000000e+00 : f32
    %55 = vector.broadcast %cst_28 : f32 to vector<8x128xf32>
    %56 = arith.mulf %55, %34 : vector<8x128xf32>
    %57 = arith.addf %24, %56 : vector<8x128xf32>
    %cst_29 = arith.constant 2.000000e+00 : f32
    %58 = vector.broadcast %cst_29 : f32 to vector<8x128xf32>
    %59 = arith.mulf %58, %44 : vector<8x128xf32>
    %60 = arith.addf %57, %59 : vector<8x128xf32>
    %61 = arith.addf %60, %54 : vector<8x128xf32>
    %62 = vector.broadcast %17 : f32 to vector<8x128xf32>
    %63 = arith.mulf %62, %61 : vector<8x128xf32>
    %64 = arith.addf %11, %63 : vector<8x128xf32>
    %c0_30 = arith.constant 0 : index
    %c1 = arith.constant 1 : index
    %c0_31 = arith.constant 0 : index
    %c0_32 = arith.constant 0 : index
    %65 = vector.load %arg9[%c0_30, %c1, %c0_31, %c0_32] : memref<1x8x8x128xf32, #tpu.memory_space<vmem>>, vector<1x1x8x128xf32>
    %66 = vector.shape_cast %65 : vector<1x1x8x128xf32> to vector<8x128xf32>
    %67 = vector.shape_cast %64 : vector<8x128xf32> to vector<1x1x8x128xf32>
    tpu.vector_store %arg9[%c0_30, %c1, %c0_31, %c0_32], %67 {strides = array<i32>} : memref<1x8x8x128xf32, #tpu.memory_space<vmem>>, vector<1x1x8x128xf32>,
    %c1_33 = arith.constant 1 : index
    %68 = memref.load %arg1[%c1_33] : memref<7xf32, #tpu.memory_space<smem>>
    %c1_34 = arith.constant 1 : index
    %69 = memref.load %arg2[%c1_34] : memref<7xf32, #tpu.memory_space<smem>>
    %c1_35 = arith.constant 1 : index
    %70 = memref.load %arg3[%c1_35] : memref<7xf32, #tpu.memory_space<smem>>
    %71 = arith.truncf %64 : vector<8x128xf32> to vector<8x128xbf16>
    %cst_36 = arith.constant dense<0.000000e+00> : vector<8x128xf32>
    %72 = tpu.matmul %71, %2, %cst_36 {dimension_numbers = #tpu.dot_dimension_numbers<[1], [0], [0], [1], [0, 0, 1, 1], [], []>} : vector<8x128xbf16>, vector<128x128xbf16>, vector<8x128xf32> -> vector<8x128xf32>
    %73 = arith.addf %72, %7 : vector<8x128xf32>
    %74 = math.tanh %73 : vector<8x128xf32>
    %75 = arith.truncf %74 : vector<8x128xf32> to vector<8x128xbf16>
    %cst_37 = arith.constant dense<0.000000e+00> : vector<8x128xf32>
    %76 = tpu.matmul %75, %5, %cst_37 {dimension_numbers = #tpu.dot_dimension_numbers<[1], [0], [0], [1], [0, 0, 1, 1], [], []>} : vector<8x128xbf16>, vector<128x128xbf16>, vector<8x128xf32> -> vector<8x128xf32>
    %77 = arith.addf %76, %9 : vector<8x128xf32>
    %78 = vector.broadcast %69 : f32 to vector<8x128xf32>
    %79 = arith.mulf %78, %77 : vector<8x128xf32>
    %80 = arith.addf %64, %79 : vector<8x128xf32>
    %81 = arith.truncf %80 : vector<8x128xf32> to vector<8x128xbf16>
    %cst_38 = arith.constant dense<0.000000e+00> : vector<8x128xf32>
    %82 = tpu.matmul %81, %2, %cst_38 {dimension_numbers = #tpu.dot_dimension_numbers<[1], [0], [0], [1], [0, 0, 1, 1], [], []>} : vector<8x128xbf16>, vector<128x128xbf16>, vector<8x128xf32> -> vector<8x128xf32>
    %83 = arith.addf %82, %7 : vector<8x128xf32>
    %84 = math.tanh %83 : vector<8x128xf32>
    %85 = arith.truncf %84 : vector<8x128xf32> to vector<8x128xbf16>
    %cst_39 = arith.constant dense<0.000000e+00> : vector<8x128xf32>
    %86 = tpu.matmul %85, %5, %cst_39 {dimension_numbers = #tpu.dot_dimension_numbers<[1], [0], [0], [1], [0, 0, 1, 1], [], []>} : vector<8x128xbf16>, vector<128x128xbf16>, vector<8x128xf32> -> vector<8x128xf32>
    %87 = arith.addf %86, %9 : vector<8x128xf32>
    %88 = vector.broadcast %69 : f32 to vector<8x128xf32>
    %89 = arith.mulf %88, %87 : vector<8x128xf32>
    %90 = arith.addf %64, %89 : vector<8x128xf32>
    %91 = arith.truncf %90 : vector<8x128xf32> to vector<8x128xbf16>
    %cst_40 = arith.constant dense<0.000000e+00> : vector<8x128xf32>
    %92 = tpu.matmul %91, %2, %cst_40 {dimension_numbers = #tpu.dot_dimension_numbers<[1], [0], [0], [1], [0, 0, 1, 1], [], []>} : vector<8x128xbf16>, vector<128x128xbf16>, vector<8x128xf32> -> vector<8x128xf32>
    %93 = arith.addf %92, %7 : vector<8x128xf32>
    %94 = math.tanh %93 : vector<8x128xf32>
    %95 = arith.truncf %94 : vector<8x128xf32> to vector<8x128xbf16>
    %cst_41 = arith.constant dense<0.000000e+00> : vector<8x128xf32>
    %96 = tpu.matmul %95, %5, %cst_41 {dimension_numbers = #tpu.dot_dimension_numbers<[1], [0], [0], [1], [0, 0, 1, 1], [], []>} : vector<8x128xbf16>, vector<128x128xbf16>, vector<8x128xf32> -> vector<8x128xf32>
    %97 = arith.addf %96, %9 : vector<8x128xf32>
    %98 = vector.broadcast %68 : f32 to vector<8x128xf32>
    %99 = arith.mulf %98, %97 : vector<8x128xf32>
    %100 = arith.addf %64, %99 : vector<8x128xf32>
    %101 = arith.truncf %100 : vector<8x128xf32> to vector<8x128xbf16>
    %cst_42 = arith.constant dense<0.000000e+00> : vector<8x128xf32>
    %102 = tpu.matmul %101, %2, %cst_42 {dimension_numbers = #tpu.dot_dimension_numbers<[1], [0], [0], [1], [0, 0, 1, 1], [], []>} : vector<8x128xbf16>, vector<128x128xbf16>, vector<8x128xf32> -> vector<8x128xf32>
    %103 = arith.addf %102, %7 : vector<8x128xf32>
    %104 = math.tanh %103 : vector<8x128xf32>
    %105 = arith.truncf %104 : vector<8x128xf32> to vector<8x128xbf16>
    %cst_43 = arith.constant dense<0.000000e+00> : vector<8x128xf32>
    %106 = tpu.matmul %105, %5, %cst_43 {dimension_numbers = #tpu.dot_dimension_numbers<[1], [0], [0], [1], [0, 0, 1, 1], [], []>} : vector<8x128xbf16>, vector<128x128xbf16>, vector<8x128xf32> -> vector<8x128xf32>
    %107 = arith.addf %106, %9 : vector<8x128xf32>
    %cst_44 = arith.constant 2.000000e+00 : f32
    %108 = vector.broadcast %cst_44 : f32 to vector<8x128xf32>
    %109 = arith.mulf %108, %87 : vector<8x128xf32>
    %110 = arith.addf %77, %109 : vector<8x128xf32>
    %cst_45 = arith.constant 2.000000e+00 : f32
    %111 = vector.broadcast %cst_45 : f32 to vector<8x128xf32>
    %112 = arith.mulf %111, %97 : vector<8x128xf32>
    %113 = arith.addf %110, %112 : vector<8x128xf32>
    %114 = arith.addf %113, %107 : vector<8x128xf32>
    %115 = vector.broadcast %70 : f32 to vector<8x128xf32>
    %116 = arith.mulf %115, %114 : vector<8x128xf32>
    %117 = arith.addf %64, %116 : vector<8x128xf32>
    %c0_46 = arith.constant 0 : index
    %c2 = arith.constant 2 : index
    %c0_47 = arith.constant 0 : index
    %c0_48 = arith.constant 0 : index
    %118 = vector.load %arg9[%c0_46, %c2, %c0_47, %c0_48] : memref<1x8x8x128xf32, #tpu.memory_space<vmem>>, vector<1x1x8x128xf32>
    %119 = vector.shape_cast %118 : vector<1x1x8x128xf32> to vector<8x128xf32>
    %120 = vector.shape_cast %117 : vector<8x128xf32> to vector<1x1x8x128xf32>
    tpu.vector_store %arg9[%c0_46, %c2, %c0_47, %c0_48], %120 {strides = array<i32>} : memref<1x8x8x128xf32, #tpu.memory_space<vmem>>, vector<1x1x8x128xf32>,
    %c2_49 = arith.constant 2 : index
    %121 = memref.load %arg1[%c2_49] : memref<7xf32, #tpu.memory_space<smem>>
    %c2_50 = arith.constant 2 : index
    %122 = memref.load %arg2[%c2_50] : memref<7xf32, #tpu.memory_space<smem>>
    %c2_51 = arith.constant 2 : index
    %123 = memref.load %arg3[%c2_51] : memref<7xf32, #tpu.memory_space<smem>>
    %124 = arith.truncf %117 : vector<8x128xf32> to vector<8x128xbf16>
    %cst_52 = arith.constant dense<0.000000e+00> : vector<8x128xf32>
    %125 = tpu.matmul %124, %2, %cst_52 {dimension_numbers = #tpu.dot_dimension_numbers<[1], [0], [0], [1], [0, 0, 1, 1], [], []>} : vector<8x128xbf16>, vector<128x128xbf16>, vector<8x128xf32> -> vector<8x128xf32>
    %126 = arith.addf %125, %7 : vector<8x128xf32>
    %127 = math.tanh %126 : vector<8x128xf32>
    %128 = arith.truncf %127 : vector<8x128xf32> to vector<8x128xbf16>
    %cst_53 = arith.constant dense<0.000000e+00> : vector<8x128xf32>
    %129 = tpu.matmul %128, %5, %cst_53 {dimension_numbers = #tpu.dot_dimension_numbers<[1], [0], [0], [1], [0, 0, 1, 1], [], []>} : vector<8x128xbf16>, vector<128x128xbf16>, vector<8x128xf32> -> vector<8x128xf32>
    %130 = arith.addf %129, %9 : vector<8x128xf32>
    %131 = vector.broadcast %122 : f32 to vector<8x128xf32>
    %132 = arith.mulf %131, %130 : vector<8x128xf32>
    %133 = arith.addf %117, %132 : vector<8x128xf32>
    %134 = arith.truncf %133 : vector<8x128xf32> to vector<8x128xbf16>
    %cst_54 = arith.constant dense<0.000000e+00> : vector<8x128xf32>
    %135 = tpu.matmul %134, %2, %cst_54 {dimension_numbers = #tpu.dot_dimension_numbers<[1], [0], [0], [1], [0, 0, 1, 1], [], []>} : vector<8x128xbf16>, vector<128x128xbf16>, vector<8x128xf32> -> vector<8x128xf32>
    %136 = arith.addf %135, %7 : vector<8x128xf32>
    %137 = math.tanh %136 : vector<8x128xf32>
    %138 = arith.truncf %137 : vector<8x128xf32> to vector<8x128xbf16>
    %cst_55 = arith.constant dense<0.000000e+00> : vector<8x128xf32>
    %139 = tpu.matmul %138, %5, %cst_55 {dimension_numbers = #tpu.dot_dimension_numbers<[1], [0], [0], [1], [0, 0, 1, 1], [], []>} : vector<8x128xbf16>, vector<128x128xbf16>, vector<8x128xf32> -> vector<8x128xf32>
    %140 = arith.addf %139, %9 : vector<8x128xf32>
    %141 = vector.broadcast %122 : f32 to vector<8x128xf32>
    %142 = arith.mulf %141, %140 : vector<8x128xf32>
    %143 = arith.addf %117, %142 : vector<8x128xf32>
    %144 = arith.truncf %143 : vector<8x128xf32> to vector<8x128xbf16>
    %cst_56 = arith.constant dense<0.000000e+00> : vector<8x128xf32>
    %145 = tpu.matmul %144, %2, %cst_56 {dimension_numbers = #tpu.dot_dimension_numbers<[1], [0], [0], [1], [0, 0, 1, 1], [], []>} : vector<8x128xbf16>, vector<128x128xbf16>, vector<8x128xf32> -> vector<8x128xf32>
    %146 = arith.addf %145, %7 : vector<8x128xf32>
    %147 = math.tanh %146 : vector<8x128xf32>
    %148 = arith.truncf %147 : vector<8x128xf32> to vector<8x128xbf16>
    %cst_57 = arith.constant dense<0.000000e+00> : vector<8x128xf32>
    %149 = tpu.matmul %148, %5, %cst_57 {dimension_numbers = #tpu.dot_dimension_numbers<[1], [0], [0], [1], [0, 0, 1, 1], [], []>} : vector<8x128xbf16>, vector<128x128xbf16>, vector<8x128xf32> -> vector<8x128xf32>
    %150 = arith.addf %149, %9 : vector<8x128xf32>
    %151 = vector.broadcast %121 : f32 to vector<8x128xf32>
    %152 = arith.mulf %151, %150 : vector<8x128xf32>
    %153 = arith.addf %117, %152 : vector<8x128xf32>
    %154 = arith.truncf %153 : vector<8x128xf32> to vector<8x128xbf16>
    %cst_58 = arith.constant dense<0.000000e+00> : vector<8x128xf32>
    %155 = tpu.matmul %154, %2, %cst_58 {dimension_numbers = #tpu.dot_dimension_numbers<[1], [0], [0], [1], [0, 0, 1, 1], [], []>} : vector<8x128xbf16>, vector<128x128xbf16>, vector<8x128xf32> -> vector<8x128xf32>
    %156 = arith.addf %155, %7 : vector<8x128xf32>
    %157 = math.tanh %156 : vector<8x128xf32>
    %158 = arith.truncf %157 : vector<8x128xf32> to vector<8x128xbf16>
    %cst_59 = arith.constant dense<0.000000e+00> : vector<8x128xf32>
    %159 = tpu.matmul %158, %5, %cst_59 {dimension_numbers = #tpu.dot_dimension_numbers<[1], [0], [0], [1], [0, 0, 1, 1], [], []>} : vector<8x128xbf16>, vector<128x128xbf16>, vector<8x128xf32> -> vector<8x128xf32>
    %160 = arith.addf %159, %9 : vector<8x128xf32>
    %cst_60 = arith.constant 2.000000e+00 : f32
    %161 = vector.broadcast %cst_60 : f32 to vector<8x128xf32>
    %162 = arith.mulf %161, %140 : vector<8x128xf32>
    %163 = arith.addf %130, %162 : vector<8x128xf32>
    %cst_61 = arith.constant 2.000000e+00 : f32
    %164 = vector.broadcast %cst_61 : f32 to vector<8x128xf32>
    %165 = arith.mulf %164, %150 : vector<8x128xf32>
    %166 = arith.addf %163, %165 : vector<8x128xf32>
    %167 = arith.addf %166, %160 : vector<8x128xf32>
    %168 = vector.broadcast %123 : f32 to vector<8x128xf32>
    %169 = arith.mulf %168, %167 : vector<8x128xf32>
    %170 = arith.addf %117, %169 : vector<8x128xf32>
    %c0_62 = arith.constant 0 : index
    %c3 = arith.constant 3 : index
    %c0_63 = arith.constant 0 : index
    %c0_64 = arith.constant 0 : index
    %171 = vector.load %arg9[%c0_62, %c3, %c0_63, %c0_64] : memref<1x8x8x128xf32, #tpu.memory_space<vmem>>, vector<1x1x8x128xf32>
    %172 = vector.shape_cast %171 : vector<1x1x8x128xf32> to vector<8x128xf32>
    %173 = vector.shape_cast %170 : vector<8x128xf32> to vector<1x1x8x128xf32>
    tpu.vector_store %arg9[%c0_62, %c3, %c0_63, %c0_64], %173 {strides = array<i32>} : memref<1x8x8x128xf32, #tpu.memory_space<vmem>>, vector<1x1x8x128xf32>,
    %c3_65 = arith.constant 3 : index
    %174 = memref.load %arg1[%c3_65] : memref<7xf32, #tpu.memory_space<smem>>
    %c3_66 = arith.constant 3 : index
    %175 = memref.load %arg2[%c3_66] : memref<7xf32, #tpu.memory_space<smem>>
    %c3_67 = arith.constant 3 : index
    %176 = memref.load %arg3[%c3_67] : memref<7xf32, #tpu.memory_space<smem>>
    %177 = arith.truncf %170 : vector<8x128xf32> to vector<8x128xbf16>
    %cst_68 = arith.constant dense<0.000000e+00> : vector<8x128xf32>
    %178 = tpu.matmul %177, %2, %cst_68 {dimension_numbers = #tpu.dot_dimension_numbers<[1], [0], [0], [1], [0, 0, 1, 1], [], []>} : vector<8x128xbf16>, vector<128x128xbf16>, vector<8x128xf32> -> vector<8x128xf32>
    %179 = arith.addf %178, %7 : vector<8x128xf32>
    %180 = math.tanh %179 : vector<8x128xf32>
    %181 = arith.truncf %180 : vector<8x128xf32> to vector<8x128xbf16>
    %cst_69 = arith.constant dense<0.000000e+00> : vector<8x128xf32>
    %182 = tpu.matmul %181, %5, %cst_69 {dimension_numbers = #tpu.dot_dimension_numbers<[1], [0], [0], [1], [0, 0, 1, 1], [], []>} : vector<8x128xbf16>, vector<128x128xbf16>, vector<8x128xf32> -> vector<8x128xf32>
    %183 = arith.addf %182, %9 : vector<8x128xf32>
    %184 = vector.broadcast %175 : f32 to vector<8x128xf32>
    %185 = arith.mulf %184, %183 : vector<8x128xf32>
    %186 = arith.addf %170, %185 : vector<8x128xf32>
    %187 = arith.truncf %186 : vector<8x128xf32> to vector<8x128xbf16>
    %cst_70 = arith.constant dense<0.000000e+00> : vector<8x128xf32>
    %188 = tpu.matmul %187, %2, %cst_70 {dimension_numbers = #tpu.dot_dimension_numbers<[1], [0], [0], [1], [0, 0, 1, 1], [], []>} : vector<8x128xbf16>, vector<128x128xbf16>, vector<8x128xf32> -> vector<8x128xf32>
    %189 = arith.addf %188, %7 : vector<8x128xf32>
    %190 = math.tanh %189 : vector<8x128xf32>
    %191 = arith.truncf %190 : vector<8x128xf32> to vector<8x128xbf16>
    %cst_71 = arith.constant dense<0.000000e+00> : vector<8x128xf32>
    %192 = tpu.matmul %191, %5, %cst_71 {dimension_numbers = #tpu.dot_dimension_numbers<[1], [0], [0], [1], [0, 0, 1, 1], [], []>} : vector<8x128xbf16>, vector<128x128xbf16>, vector<8x128xf32> -> vector<8x128xf32>
    %193 = arith.addf %192, %9 : vector<8x128xf32>
    %194 = vector.broadcast %175 : f32 to vector<8x128xf32>
    %195 = arith.mulf %194, %193 : vector<8x128xf32>
    %196 = arith.addf %170, %195 : vector<8x128xf32>
    %197 = arith.truncf %196 : vector<8x128xf32> to vector<8x128xbf16>
    %cst_72 = arith.constant dense<0.000000e+00> : vector<8x128xf32>
    %198 = tpu.matmul %197, %2, %cst_72 {dimension_numbers = #tpu.dot_dimension_numbers<[1], [0], [0], [1], [0, 0, 1, 1], [], []>} : vector<8x128xbf16>, vector<128x128xbf16>, vector<8x128xf32> -> vector<8x128xf32>
    %199 = arith.addf %198, %7 : vector<8x128xf32>
    %200 = math.tanh %199 : vector<8x128xf32>
    %201 = arith.truncf %200 : vector<8x128xf32> to vector<8x128xbf16>
    %cst_73 = arith.constant dense<0.000000e+00> : vector<8x128xf32>
    %202 = tpu.matmul %201, %5, %cst_73 {dimension_numbers = #tpu.dot_dimension_numbers<[1], [0], [0], [1], [0, 0, 1, 1], [], []>} : vector<8x128xbf16>, vector<128x128xbf16>, vector<8x128xf32> -> vector<8x128xf32>
    %203 = arith.addf %202, %9 : vector<8x128xf32>
    %204 = vector.broadcast %174 : f32 to vector<8x128xf32>
    %205 = arith.mulf %204, %203 : vector<8x128xf32>
    %206 = arith.addf %170, %205 : vector<8x128xf32>
    %207 = arith.truncf %206 : vector<8x128xf32> to vector<8x128xbf16>
    %cst_74 = arith.constant dense<0.000000e+00> : vector<8x128xf32>
    %208 = tpu.matmul %207, %2, %cst_74 {dimension_numbers = #tpu.dot_dimension_numbers<[1], [0], [0], [1], [0, 0, 1, 1], [], []>} : vector<8x128xbf16>, vector<128x128xbf16>, vector<8x128xf32> -> vector<8x128xf32>
    %209 = arith.addf %208, %7 : vector<8x128xf32>
    %210 = math.tanh %209 : vector<8x128xf32>
    %211 = arith.truncf %210 : vector<8x128xf32> to vector<8x128xbf16>
    %cst_75 = arith.constant dense<0.000000e+00> : vector<8x128xf32>
    %212 = tpu.matmul %211, %5, %cst_75 {dimension_numbers = #tpu.dot_dimension_numbers<[1], [0], [0], [1], [0, 0, 1, 1], [], []>} : vector<8x128xbf16>, vector<128x128xbf16>, vector<8x128xf32> -> vector<8x128xf32>
    %213 = arith.addf %212, %9 : vector<8x128xf32>
    %cst_76 = arith.constant 2.000000e+00 : f32
    %214 = vector.broadcast %cst_76 : f32 to vector<8x128xf32>
    %215 = arith.mulf %214, %193 : vector<8x128xf32>
    %216 = arith.addf %183, %215 : vector<8x128xf32>
    %cst_77 = arith.constant 2.000000e+00 : f32
    %217 = vector.broadcast %cst_77 : f32 to vector<8x128xf32>
    %218 = arith.mulf %217, %203 : vector<8x128xf32>
    %219 = arith.addf %216, %218 : vector<8x128xf32>
    %220 = arith.addf %219, %213 : vector<8x128xf32>
    %221 = vector.broadcast %176 : f32 to vector<8x128xf32>
    %222 = arith.mulf %221, %220 : vector<8x128xf32>
    %223 = arith.addf %170, %222 : vector<8x128xf32>
    %c0_78 = arith.constant 0 : index
    %c4 = arith.constant 4 : index
    %c0_79 = arith.constant 0 : index
    %c0_80 = arith.constant 0 : index
    %224 = vector.load %arg9[%c0_78, %c4, %c0_79, %c0_80] : memref<1x8x8x128xf32, #tpu.memory_space<vmem>>, vector<1x1x8x128xf32>
    %225 = vector.shape_cast %224 : vector<1x1x8x128xf32> to vector<8x128xf32>
    %226 = vector.shape_cast %223 : vector<8x128xf32> to vector<1x1x8x128xf32>
    tpu.vector_store %arg9[%c0_78, %c4, %c0_79, %c0_80], %226 {strides = array<i32>} : memref<1x8x8x128xf32, #tpu.memory_space<vmem>>, vector<1x1x8x128xf32>,
    %c4_81 = arith.constant 4 : index
    %227 = memref.load %arg1[%c4_81] : memref<7xf32, #tpu.memory_space<smem>>
    %c4_82 = arith.constant 4 : index
    %228 = memref.load %arg2[%c4_82] : memref<7xf32, #tpu.memory_space<smem>>
    %c4_83 = arith.constant 4 : index
    %229 = memref.load %arg3[%c4_83] : memref<7xf32, #tpu.memory_space<smem>>
    %230 = arith.truncf %223 : vector<8x128xf32> to vector<8x128xbf16>
    %cst_84 = arith.constant dense<0.000000e+00> : vector<8x128xf32>
    %231 = tpu.matmul %230, %2, %cst_84 {dimension_numbers = #tpu.dot_dimension_numbers<[1], [0], [0], [1], [0, 0, 1, 1], [], []>} : vector<8x128xbf16>, vector<128x128xbf16>, vector<8x128xf32> -> vector<8x128xf32>
    %232 = arith.addf %231, %7 : vector<8x128xf32>
    %233 = math.tanh %232 : vector<8x128xf32>
    %234 = arith.truncf %233 : vector<8x128xf32> to vector<8x128xbf16>
    %cst_85 = arith.constant dense<0.000000e+00> : vector<8x128xf32>
    %235 = tpu.matmul %234, %5, %cst_85 {dimension_numbers = #tpu.dot_dimension_numbers<[1], [0], [0], [1], [0, 0, 1, 1], [], []>} : vector<8x128xbf16>, vector<128x128xbf16>, vector<8x128xf32> -> vector<8x128xf32>
    %236 = arith.addf %235, %9 : vector<8x128xf32>
    %237 = vector.broadcast %228 : f32 to vector<8x128xf32>
    %238 = arith.mulf %237, %236 : vector<8x128xf32>
    %239 = arith.addf %223, %238 : vector<8x128xf32>
    %240 = arith.truncf %239 : vector<8x128xf32> to vector<8x128xbf16>
    %cst_86 = arith.constant dense<0.000000e+00> : vector<8x128xf32>
    %241 = tpu.matmul %240, %2, %cst_86 {dimension_numbers = #tpu.dot_dimension_numbers<[1], [0], [0], [1], [0, 0, 1, 1], [], []>} : vector<8x128xbf16>, vector<128x128xbf16>, vector<8x128xf32> -> vector<8x128xf32>
    %242 = arith.addf %241, %7 : vector<8x128xf32>
    %243 = math.tanh %242 : vector<8x128xf32>
    %244 = arith.truncf %243 : vector<8x128xf32> to vector<8x128xbf16>
    %cst_87 = arith.constant dense<0.000000e+00> : vector<8x128xf32>
    %245 = tpu.matmul %244, %5, %cst_87 {dimension_numbers = #tpu.dot_dimension_numbers<[1], [0], [0], [1], [0, 0, 1, 1], [], []>} : vector<8x128xbf16>, vector<128x128xbf16>, vector<8x128xf32> -> vector<8x128xf32>
    %246 = arith.addf %245, %9 : vector<8x128xf32>
    %247 = vector.broadcast %228 : f32 to vector<8x128xf32>
    %248 = arith.mulf %247, %246 : vector<8x128xf32>
    %249 = arith.addf %223, %248 : vector<8x128xf32>
    %250 = arith.truncf %249 : vector<8x128xf32> to vector<8x128xbf16>
    %cst_88 = arith.constant dense<0.000000e+00> : vector<8x128xf32>
    %251 = tpu.matmul %250, %2, %cst_88 {dimension_numbers = #tpu.dot_dimension_numbers<[1], [0], [0], [1], [0, 0, 1, 1], [], []>} : vector<8x128xbf16>, vector<128x128xbf16>, vector<8x128xf32> -> vector<8x128xf32>
    %252 = arith.addf %251, %7 : vector<8x128xf32>
    %253 = math.tanh %252 : vector<8x128xf32>
    %254 = arith.truncf %253 : vector<8x128xf32> to vector<8x128xbf16>
    %cst_89 = arith.constant dense<0.000000e+00> : vector<8x128xf32>
    %255 = tpu.matmul %254, %5, %cst_89 {dimension_numbers = #tpu.dot_dimension_numbers<[1], [0], [0], [1], [0, 0, 1, 1], [], []>} : vector<8x128xbf16>, vector<128x128xbf16>, vector<8x128xf32> -> vector<8x128xf32>
    %256 = arith.addf %255, %9 : vector<8x128xf32>
    %257 = vector.broadcast %227 : f32 to vector<8x128xf32>
    %258 = arith.mulf %257, %256 : vector<8x128xf32>
    %259 = arith.addf %223, %258 : vector<8x128xf32>
    %260 = arith.truncf %259 : vector<8x128xf32> to vector<8x128xbf16>
    %cst_90 = arith.constant dense<0.000000e+00> : vector<8x128xf32>
    %261 = tpu.matmul %260, %2, %cst_90 {dimension_numbers = #tpu.dot_dimension_numbers<[1], [0], [0], [1], [0, 0, 1, 1], [], []>} : vector<8x128xbf16>, vector<128x128xbf16>, vector<8x128xf32> -> vector<8x128xf32>
    %262 = arith.addf %261, %7 : vector<8x128xf32>
    %263 = math.tanh %262 : vector<8x128xf32>
    %264 = arith.truncf %263 : vector<8x128xf32> to vector<8x128xbf16>
    %cst_91 = arith.constant dense<0.000000e+00> : vector<8x128xf32>
    %265 = tpu.matmul %264, %5, %cst_91 {dimension_numbers = #tpu.dot_dimension_numbers<[1], [0], [0], [1], [0, 0, 1, 1], [], []>} : vector<8x128xbf16>, vector<128x128xbf16>, vector<8x128xf32> -> vector<8x128xf32>
    %266 = arith.addf %265, %9 : vector<8x128xf32>
    %cst_92 = arith.constant 2.000000e+00 : f32
    %267 = vector.broadcast %cst_92 : f32 to vector<8x128xf32>
    %268 = arith.mulf %267, %246 : vector<8x128xf32>
    %269 = arith.addf %236, %268 : vector<8x128xf32>
    %cst_93 = arith.constant 2.000000e+00 : f32
    %270 = vector.broadcast %cst_93 : f32 to vector<8x128xf32>
    %271 = arith.mulf %270, %256 : vector<8x128xf32>
    %272 = arith.addf %269, %271 : vector<8x128xf32>
    %273 = arith.addf %272, %266 : vector<8x128xf32>
    %274 = vector.broadcast %229 : f32 to vector<8x128xf32>
    %275 = arith.mulf %274, %273 : vector<8x128xf32>
    %276 = arith.addf %223, %275 : vector<8x128xf32>
    %c0_94 = arith.constant 0 : index
    %c5 = arith.constant 5 : index
    %c0_95 = arith.constant 0 : index
    %c0_96 = arith.constant 0 : index
    %277 = vector.load %arg9[%c0_94, %c5, %c0_95, %c0_96] : memref<1x8x8x128xf32, #tpu.memory_space<vmem>>, vector<1x1x8x128xf32>
    %278 = vector.shape_cast %277 : vector<1x1x8x128xf32> to vector<8x128xf32>
    %279 = vector.shape_cast %276 : vector<8x128xf32> to vector<1x1x8x128xf32>
    tpu.vector_store %arg9[%c0_94, %c5, %c0_95, %c0_96], %279 {strides = array<i32>} : memref<1x8x8x128xf32, #tpu.memory_space<vmem>>, vector<1x1x8x128xf32>,
    %c5_97 = arith.constant 5 : index
    %280 = memref.load %arg1[%c5_97] : memref<7xf32, #tpu.memory_space<smem>>
    %c5_98 = arith.constant 5 : index
    %281 = memref.load %arg2[%c5_98] : memref<7xf32, #tpu.memory_space<smem>>
    %c5_99 = arith.constant 5 : index
    %282 = memref.load %arg3[%c5_99] : memref<7xf32, #tpu.memory_space<smem>>
    %283 = arith.truncf %276 : vector<8x128xf32> to vector<8x128xbf16>
    %cst_100 = arith.constant dense<0.000000e+00> : vector<8x128xf32>
    %284 = tpu.matmul %283, %2, %cst_100 {dimension_numbers = #tpu.dot_dimension_numbers<[1], [0], [0], [1], [0, 0, 1, 1], [], []>} : vector<8x128xbf16>, vector<128x128xbf16>, vector<8x128xf32> -> vector<8x128xf32>
    %285 = arith.addf %284, %7 : vector<8x128xf32>
    %286 = math.tanh %285 : vector<8x128xf32>
    %287 = arith.truncf %286 : vector<8x128xf32> to vector<8x128xbf16>
    %cst_101 = arith.constant dense<0.000000e+00> : vector<8x128xf32>
    %288 = tpu.matmul %287, %5, %cst_101 {dimension_numbers = #tpu.dot_dimension_numbers<[1], [0], [0], [1], [0, 0, 1, 1], [], []>} : vector<8x128xbf16>, vector<128x128xbf16>, vector<8x128xf32> -> vector<8x128xf32>
    %289 = arith.addf %288, %9 : vector<8x128xf32>
    %290 = vector.broadcast %281 : f32 to vector<8x128xf32>
    %291 = arith.mulf %290, %289 : vector<8x128xf32>
    %292 = arith.addf %276, %291 : vector<8x128xf32>
    %293 = arith.truncf %292 : vector<8x128xf32> to vector<8x128xbf16>
    %cst_102 = arith.constant dense<0.000000e+00> : vector<8x128xf32>
    %294 = tpu.matmul %293, %2, %cst_102 {dimension_numbers = #tpu.dot_dimension_numbers<[1], [0], [0], [1], [0, 0, 1, 1], [], []>} : vector<8x128xbf16>, vector<128x128xbf16>, vector<8x128xf32> -> vector<8x128xf32>
    %295 = arith.addf %294, %7 : vector<8x128xf32>
    %296 = math.tanh %295 : vector<8x128xf32>
    %297 = arith.truncf %296 : vector<8x128xf32> to vector<8x128xbf16>
    %cst_103 = arith.constant dense<0.000000e+00> : vector<8x128xf32>
    %298 = tpu.matmul %297, %5, %cst_103 {dimension_numbers = #tpu.dot_dimension_numbers<[1], [0], [0], [1], [0, 0, 1, 1], [], []>} : vector<8x128xbf16>, vector<128x128xbf16>, vector<8x128xf32> -> vector<8x128xf32>
    %299 = arith.addf %298, %9 : vector<8x128xf32>
    %300 = vector.broadcast %281 : f32 to vector<8x128xf32>
    %301 = arith.mulf %300, %299 : vector<8x128xf32>
    %302 = arith.addf %276, %301 : vector<8x128xf32>
    %303 = arith.truncf %302 : vector<8x128xf32> to vector<8x128xbf16>
    %cst_104 = arith.constant dense<0.000000e+00> : vector<8x128xf32>
    %304 = tpu.matmul %303, %2, %cst_104 {dimension_numbers = #tpu.dot_dimension_numbers<[1], [0], [0], [1], [0, 0, 1, 1], [], []>} : vector<8x128xbf16>, vector<128x128xbf16>, vector<8x128xf32> -> vector<8x128xf32>
    %305 = arith.addf %304, %7 : vector<8x128xf32>
    %306 = math.tanh %305 : vector<8x128xf32>
    %307 = arith.truncf %306 : vector<8x128xf32> to vector<8x128xbf16>
    %cst_105 = arith.constant dense<0.000000e+00> : vector<8x128xf32>
    %308 = tpu.matmul %307, %5, %cst_105 {dimension_numbers = #tpu.dot_dimension_numbers<[1], [0], [0], [1], [0, 0, 1, 1], [], []>} : vector<8x128xbf16>, vector<128x128xbf16>, vector<8x128xf32> -> vector<8x128xf32>
    %309 = arith.addf %308, %9 : vector<8x128xf32>
    %310 = vector.broadcast %280 : f32 to vector<8x128xf32>
    %311 = arith.mulf %310, %309 : vector<8x128xf32>
    %312 = arith.addf %276, %311 : vector<8x128xf32>
    %313 = arith.truncf %312 : vector<8x128xf32> to vector<8x128xbf16>
    %cst_106 = arith.constant dense<0.000000e+00> : vector<8x128xf32>
    %314 = tpu.matmul %313, %2, %cst_106 {dimension_numbers = #tpu.dot_dimension_numbers<[1], [0], [0], [1], [0, 0, 1, 1], [], []>} : vector<8x128xbf16>, vector<128x128xbf16>, vector<8x128xf32> -> vector<8x128xf32>
    %315 = arith.addf %314, %7 : vector<8x128xf32>
    %316 = math.tanh %315 : vector<8x128xf32>
    %317 = arith.truncf %316 : vector<8x128xf32> to vector<8x128xbf16>
    %cst_107 = arith.constant dense<0.000000e+00> : vector<8x128xf32>
    %318 = tpu.matmul %317, %5, %cst_107 {dimension_numbers = #tpu.dot_dimension_numbers<[1], [0], [0], [1], [0, 0, 1, 1], [], []>} : vector<8x128xbf16>, vector<128x128xbf16>, vector<8x128xf32> -> vector<8x128xf32>
    %319 = arith.addf %318, %9 : vector<8x128xf32>
    %cst_108 = arith.constant 2.000000e+00 : f32
    %320 = vector.broadcast %cst_108 : f32 to vector<8x128xf32>
    %321 = arith.mulf %320, %299 : vector<8x128xf32>
    %322 = arith.addf %289, %321 : vector<8x128xf32>
    %cst_109 = arith.constant 2.000000e+00 : f32
    %323 = vector.broadcast %cst_109 : f32 to vector<8x128xf32>
    %324 = arith.mulf %323, %309 : vector<8x128xf32>
    %325 = arith.addf %322, %324 : vector<8x128xf32>
    %326 = arith.addf %325, %319 : vector<8x128xf32>
    %327 = vector.broadcast %282 : f32 to vector<8x128xf32>
    %328 = arith.mulf %327, %326 : vector<8x128xf32>
    %329 = arith.addf %276, %328 : vector<8x128xf32>
    %c0_110 = arith.constant 0 : index
    %c6 = arith.constant 6 : index
    %c0_111 = arith.constant 0 : index
    %c0_112 = arith.constant 0 : index
    %330 = vector.load %arg9[%c0_110, %c6, %c0_111, %c0_112] : memref<1x8x8x128xf32, #tpu.memory_space<vmem>>, vector<1x1x8x128xf32>
    %331 = vector.shape_cast %330 : vector<1x1x8x128xf32> to vector<8x128xf32>
    %332 = vector.shape_cast %329 : vector<8x128xf32> to vector<1x1x8x128xf32>
    tpu.vector_store %arg9[%c0_110, %c6, %c0_111, %c0_112], %332 {strides = array<i32>} : memref<1x8x8x128xf32, #tpu.memory_space<vmem>>, vector<1x1x8x128xf32>,
    %c6_113 = arith.constant 6 : index
    %333 = memref.load %arg1[%c6_113] : memref<7xf32, #tpu.memory_space<smem>>
    %c6_114 = arith.constant 6 : index
    %334 = memref.load %arg2[%c6_114] : memref<7xf32, #tpu.memory_space<smem>>
    %c6_115 = arith.constant 6 : index
    %335 = memref.load %arg3[%c6_115] : memref<7xf32, #tpu.memory_space<smem>>
    %336 = arith.truncf %329 : vector<8x128xf32> to vector<8x128xbf16>
    %cst_116 = arith.constant dense<0.000000e+00> : vector<8x128xf32>
    %337 = tpu.matmul %336, %2, %cst_116 {dimension_numbers = #tpu.dot_dimension_numbers<[1], [0], [0], [1], [0, 0, 1, 1], [], []>} : vector<8x128xbf16>, vector<128x128xbf16>, vector<8x128xf32> -> vector<8x128xf32>
    %338 = arith.addf %337, %7 : vector<8x128xf32>
    %339 = math.tanh %338 : vector<8x128xf32>
    %340 = arith.truncf %339 : vector<8x128xf32> to vector<8x128xbf16>
    %cst_117 = arith.constant dense<0.000000e+00> : vector<8x128xf32>
    %341 = tpu.matmul %340, %5, %cst_117 {dimension_numbers = #tpu.dot_dimension_numbers<[1], [0], [0], [1], [0, 0, 1, 1], [], []>} : vector<8x128xbf16>, vector<128x128xbf16>, vector<8x128xf32> -> vector<8x128xf32>
    %342 = arith.addf %341, %9 : vector<8x128xf32>
    %343 = vector.broadcast %334 : f32 to vector<8x128xf32>
    %344 = arith.mulf %343, %342 : vector<8x128xf32>
    %345 = arith.addf %329, %344 : vector<8x128xf32>
    %346 = arith.truncf %345 : vector<8x128xf32> to vector<8x128xbf16>
    %cst_118 = arith.constant dense<0.000000e+00> : vector<8x128xf32>
    %347 = tpu.matmul %346, %2, %cst_118 {dimension_numbers = #tpu.dot_dimension_numbers<[1], [0], [0], [1], [0, 0, 1, 1], [], []>} : vector<8x128xbf16>, vector<128x128xbf16>, vector<8x128xf32> -> vector<8x128xf32>
    %348 = arith.addf %347, %7 : vector<8x128xf32>
    %349 = math.tanh %348 : vector<8x128xf32>
    %350 = arith.truncf %349 : vector<8x128xf32> to vector<8x128xbf16>
    %cst_119 = arith.constant dense<0.000000e+00> : vector<8x128xf32>
    %351 = tpu.matmul %350, %5, %cst_119 {dimension_numbers = #tpu.dot_dimension_numbers<[1], [0], [0], [1], [0, 0, 1, 1], [], []>} : vector<8x128xbf16>, vector<128x128xbf16>, vector<8x128xf32> -> vector<8x128xf32>
    %352 = arith.addf %351, %9 : vector<8x128xf32>
    %353 = vector.broadcast %334 : f32 to vector<8x128xf32>
    %354 = arith.mulf %353, %352 : vector<8x128xf32>
    %355 = arith.addf %329, %354 : vector<8x128xf32>
    %356 = arith.truncf %355 : vector<8x128xf32> to vector<8x128xbf16>
    %cst_120 = arith.constant dense<0.000000e+00> : vector<8x128xf32>
    %357 = tpu.matmul %356, %2, %cst_120 {dimension_numbers = #tpu.dot_dimension_numbers<[1], [0], [0], [1], [0, 0, 1, 1], [], []>} : vector<8x128xbf16>, vector<128x128xbf16>, vector<8x128xf32> -> vector<8x128xf32>
    %358 = arith.addf %357, %7 : vector<8x128xf32>
    %359 = math.tanh %358 : vector<8x128xf32>
    %360 = arith.truncf %359 : vector<8x128xf32> to vector<8x128xbf16>
    %cst_121 = arith.constant dense<0.000000e+00> : vector<8x128xf32>
    %361 = tpu.matmul %360, %5, %cst_121 {dimension_numbers = #tpu.dot_dimension_numbers<[1], [0], [0], [1], [0, 0, 1, 1], [], []>} : vector<8x128xbf16>, vector<128x128xbf16>, vector<8x128xf32> -> vector<8x128xf32>
    %362 = arith.addf %361, %9 : vector<8x128xf32>
    %363 = vector.broadcast %333 : f32 to vector<8x128xf32>
    %364 = arith.mulf %363, %362 : vector<8x128xf32>
    %365 = arith.addf %329, %364 : vector<8x128xf32>
    %366 = arith.truncf %365 : vector<8x128xf32> to vector<8x128xbf16>
    %cst_122 = arith.constant dense<0.000000e+00> : vector<8x128xf32>
    %367 = tpu.matmul %366, %2, %cst_122 {dimension_numbers = #tpu.dot_dimension_numbers<[1], [0], [0], [1], [0, 0, 1, 1], [], []>} : vector<8x128xbf16>, vector<128x128xbf16>, vector<8x128xf32> -> vector<8x128xf32>
    %368 = arith.addf %367, %7 : vector<8x128xf32>
    %369 = math.tanh %368 : vector<8x128xf32>
    %370 = arith.truncf %369 : vector<8x128xf32> to vector<8x128xbf16>
    %cst_123 = arith.constant dense<0.000000e+00> : vector<8x128xf32>
    %371 = tpu.matmul %370, %5, %cst_123 {dimension_numbers = #tpu.dot_dimension_numbers<[1], [0], [0], [1], [0, 0, 1, 1], [], []>} : vector<8x128xbf16>, vector<128x128xbf16>, vector<8x128xf32> -> vector<8x128xf32>
    %372 = arith.addf %371, %9 : vector<8x128xf32>
    %cst_124 = arith.constant 2.000000e+00 : f32
    %373 = vector.broadcast %cst_124 : f32 to vector<8x128xf32>
    %374 = arith.mulf %373, %352 : vector<8x128xf32>
    %375 = arith.addf %342, %374 : vector<8x128xf32>
    %cst_125 = arith.constant 2.000000e+00 : f32
    %376 = vector.broadcast %cst_125 : f32 to vector<8x128xf32>
    %377 = arith.mulf %376, %362 : vector<8x128xf32>
    %378 = arith.addf %375, %377 : vector<8x128xf32>
    %379 = arith.addf %378, %372 : vector<8x128xf32>
    %380 = vector.broadcast %335 : f32 to vector<8x128xf32>
    %381 = arith.mulf %380, %379 : vector<8x128xf32>
    %382 = arith.addf %329, %381 : vector<8x128xf32>
    %c0_126 = arith.constant 0 : index
    %c7 = arith.constant 7 : index
    %c0_127 = arith.constant 0 : index
    %c0_128 = arith.constant 0 : index
    %383 = vector.load %arg9[%c0_126, %c7, %c0_127, %c0_128] : memref<1x8x8x128xf32, #tpu.memory_space<vmem>>, vector<1x1x8x128xf32>
    %384 = vector.shape_cast %383 : vector<1x1x8x128xf32> to vector<8x128xf32>
    %385 = vector.shape_cast %382 : vector<8x128xf32> to vector<1x1x8x128xf32>
    tpu.vector_store %arg9[%c0_126, %c7, %c0_127, %c0_128], %385 {strides = array<i32>} : memref<1x8x8x128xf32, #tpu.memory_space<vmem>>, vector<1x1x8x128xf32>,
    return
  }
  func.func @transform_0(%arg0: i32) -> i32 {
    %c0_i32 = arith.constant 0 : i32
    %c0_i32_0 = arith.constant 0 : i32
    return %c0_i32 : i32
  }
  func.func @transform_1(%arg0: i32) -> i32 {
    %c0_i32 = arith.constant 0 : i32
    %c0_i32_0 = arith.constant 0 : i32
    return %c0_i32 : i32
  }
  func.func @transform_2(%arg0: i32) -> i32 {
    %c0_i32 = arith.constant 0 : i32
    %c0_i32_0 = arith.constant 0 : i32
    return %c0_i32 : i32
  }
  func.func @transform_3(%arg0: i32) -> (i32, i32, i32) {
    %c0_i32 = arith.constant 0 : i32
    %c0_i32_0 = arith.constant 0 : i32
    %c0_i32_1 = arith.constant 0 : i32
    return %arg0, %c0_i32, %c0_i32_0 : i32, i32, i32
  }
  func.func @transform_4(%arg0: i32) -> (i32, i32, i32) {
    %c0_i32 = arith.constant 0 : i32
    %c0_i32_0 = arith.constant 0 : i32
    %c0_i32_1 = arith.constant 0 : i32
    return %arg0, %c0_i32, %c0_i32_0 : i32, i32, i32
  }
  func.func @transform_5(%arg0: i32) -> (i32, i32, i32) {
    %c0_i32 = arith.constant 0 : i32
    %c0_i32_0 = arith.constant 0 : i32
    %c0_i32_1 = arith.constant 0 : i32
    return %arg0, %c0_i32, %c0_i32_0 : i32, i32, i32
  }
  func.func @transform_6(%arg0: i32) -> (i32, i32, i32) {
    %c0_i32 = arith.constant 0 : i32
    %c0_i32_0 = arith.constant 0 : i32
    %c0_i32_1 = arith.constant 0 : i32
    return %arg0, %c0_i32, %c0_i32_0 : i32, i32, i32
  }
  func.func @transform_7(%arg0: i32) -> (i32, i32, i32) {
    %c0_i32 = arith.constant 0 : i32
    %c0_i32_0 = arith.constant 0 : i32
    %c0_i32_1 = arith.constant 0 : i32
    return %arg0, %c0_i32, %c0_i32_0 : i32, i32, i32
  }
  func.func @transform_8(%arg0: i32) -> (i32, i32, i32, i32) {
    %c0_i32 = arith.constant 0 : i32
    %c0_i32_0 = arith.constant 0 : i32
    %c0_i32_1 = arith.constant 0 : i32
    %c0_i32_2 = arith.constant 0 : i32
    return %arg0, %c0_i32, %c0_i32_0, %c0_i32_1 : i32, i32, i32, i32
  }
}

</mosaic_0001>

<llo_original>
// kernel: tpu_custom_call.1
$region0: #{tpu_custom_call.1}
  #allocation0 [shape = 'u32[]', space=smem, size = 0x4, offset = 0x4, fixed_abs, tag = 'smem constant byte address 0x4 - core index']
  #allocation1 [shape = 'u32[144,128]{1,0:T(1,128)}', space=vmem, size = 0x12000, scoped, tag = 'internal scratch']
  %s0 = inlined_call_operand.hbm [shape: f32[7], index: 0, kind: input, shape index: {}]
  %s1 = inlined_call_operand.vmem [shape: f32[7], index: 1, kind: input, shape index: {}]
  %s2 = inlined_call_operand.vmem [shape: f32[7], index: 2, kind: input, shape index: {}]
  %s3 = inlined_call_operand.vmem [shape: f32[1,8,128], index: 3, kind: input, shape index: {}]
  %s4 = inlined_call_operand.hbm [shape: f32[1,128,128], index: 4, kind: input, shape index: {}]
  %s5 = inlined_call_operand.vmem [shape: f32[1,8,128], index: 5, kind: input, shape index: {}]
  %s6 = inlined_call_operand.hbm [shape: f32[1,128,128], index: 6, kind: input, shape index: {}]
  %s7 = inlined_call_operand.vmem [shape: f32[1,8,128], index: 7, kind: input, shape index: {}]
  %s8 = inlined_call_operand.hbm [shape: f32[1,8,8,128], index: 8, kind: output, shape index: {}]
  %s9 = sld [smem:[#allocation0]]
  $region62: #{tpu_custom_call.1} parent=0
    _
  %s11 = ssub.s32 1, %s9
  %s12 = scalar_select 0, %s11, %s9
  $region1: #{tpu_custom_call.1} parent=0
    #allocation2 [shape = 'u8[512]{0}', space=smem, size = 0x200, scoped, tag = 'input window, operand 0, single buffered']
    #allocation3 [shape = 's32[1]{0}', space=sflag, size = 0x4, scoped, tag = 'scoped memory for tpu_custom_call.1']
    #allocation4 [shape = 's32[1]{0}', space=sflag, size = 0x4, scoped, tag = 'scoped memory for tpu_custom_call.1']
    #allocation5 [shape = 's32[1]{0}', space=sflag, size = 0x4, scoped, tag = 'scoped memory for tpu_custom_call.1']
    #allocation6 [shape = 's32[1]{0}', space=sflag, size = 0x4, scoped, tag = 'scoped memory for tpu_custom_call.1']
    #allocation7 [shape = 'u8[512]{0}', space=smem, size = 0x200, scoped, tag = 'input window, operand 1, single buffered']
    #allocation8 [shape = 'u8[512]{0}', space=smem, size = 0x200, scoped, tag = 'input window, operand 2, single buffered']
    #allocation9 [shape = 's32[1]{0}', space=sflag, size = 0x4, scoped, tag = 'scoped memory for tpu_custom_call.1']
    #allocation10 [shape = 'u8[65536]{0}', space=vmem, size = 0x10000, scoped, tag = 'input window, operand 4, single buffered']
    #allocation11 [shape = 'u8[65536]{0}', space=vmem, size = 0x10000, scoped, tag = 'input window, operand 6, single buffered']
    #allocation12 [shape = 's32[1]{0}', space=sflag, size = 0x4, scoped, tag = 'scoped memory for tpu_custom_call.1']
    #allocation13 [shape = 'u8[32768]{0}', space=vmem, size = 0x8000, scoped, tag = 'output window, operand 0, single buffered']
    %13 = vsyncpa [#allocation5], 0
    %14 = vsyncpa [#allocation6], 0
    %15 = vsyncpa [#allocation9], 0
    %16 = vsyncpa [#allocation3], 0
    %17 = vsyncpa [#allocation12], 0
    %18 = vsyncpa [#allocation4], 0
    // Predicated region
    $region2: #{tpu_custom_call.1} parent=1 // pred_check
      _
    $region3: #{tpu_custom_call.1} parent=1 // pred_check_branch
      %20 = sbr.rel (0) target = $region5
    $region4: #{tpu_custom_call.1} parent=1 // pred_region
      %s22 = ssub.s32 16, 16
      %23 = vsyncadd [#allocation5], %s22
      %26 = dma.hbm_to_smem %s0, 16, [#allocation2], [#allocation5]
    $region5: #{tpu_custom_call.1} parent=1 // pred_fallthru
      _
    // Predicated region
    $region6: #{tpu_custom_call.1} parent=1 // pred_check
      _
    $region7: #{tpu_custom_call.1} parent=1 // pred_check_branch
      %28 = sbr.rel (0) target = $region9
    $region8: #{tpu_custom_call.1} parent=1 // pred_region
      %s30 = ssub.s32 16, 16
      %31 = vsyncadd [#allocation6], %s30
      %s33 = sshll.u32 %s1, 4
      %s34 = int_to_ptr.vmem [resolvable:$true] %s33
      %36 = dma.vmem_to_smem %s34, 16, [#allocation7], [#allocation6]
    $region9: #{tpu_custom_call.1} parent=1 // pred_fallthru
      _
    // Predicated region
    $region10: #{tpu_custom_call.1} parent=1 // pred_check
      _
    $region11: #{tpu_custom_call.1} parent=1 // pred_check_branch
      %38 = sbr.rel (0) target = $region13
    $region12: #{tpu_custom_call.1} parent=1 // pred_region
      %s40 = ssub.s32 16, 16
      %41 = vsyncadd [#allocation9], %s40
      %s43 = sshll.u32 %s2, 4
      %s44 = int_to_ptr.vmem [resolvable:$true] %s43
      %46 = dma.vmem_to_smem %s44, 16, [#allocation8], [#allocation9]
    $region13: #{tpu_custom_call.1} parent=1 // pred_fallthru
      _
    // Predicated region
    $region14: #{tpu_custom_call.1} parent=1 // pred_check
      _
    $region15: #{tpu_custom_call.1} parent=1 // pred_check_branch
      %48 = sbr.rel (0) target = $region17
    $region16: #{tpu_custom_call.1} parent=1 // pred_region
      _
    $region17: #{tpu_custom_call.1} parent=1 // pred_fallthru
      _
    // Predicated region
    $region18: #{tpu_custom_call.1} parent=1 // pred_check
      _
    $region19: #{tpu_custom_call.1} parent=1 // pred_check_branch
      %50 = sbr.rel (0) target = $region21
    $region20: #{tpu_custom_call.1} parent=1 // pred_region
      %s52 = ssub.s32 2048, 2048
      %53 = vsyncadd [#allocation3], %s52
      %s54 = sshll.u32 [#allocation10], 4
      %s55 = int_to_ptr.vmem [resolvable:$true] %s54
      %60 = dma.hbm_to_vmem [thread:$0]  %s4, 2048, %s55, [#allocation3], 128, 128, 8
    $region21: #{tpu_custom_call.1} parent=1 // pred_fallthru
      _
    // Predicated region
    $region22: #{tpu_custom_call.1} parent=1 // pred_check
      _
    $region23: #{tpu_custom_call.1} parent=1 // pred_check_branch
      %62 = sbr.rel (0) target = $region25
    $region24: #{tpu_custom_call.1} parent=1 // pred_region
      _
    $region25: #{tpu_custom_call.1} parent=1 // pred_fallthru
      _
    // Predicated region
    $region26: #{tpu_custom_call.1} parent=1 // pred_check
      _
    $region27: #{tpu_custom_call.1} parent=1 // pred_check_branch
      %64 = sbr.rel (0) target = $region29
    $region28: #{tpu_custom_call.1} parent=1 // pred_region
      %s66 = ssub.s32 2048, 2048
      %67 = vsyncadd [#allocation12], %s66
      %s68 = sshll.u32 [#allocation11], 4
      %s69 = int_to_ptr.vmem [resolvable:$true] %s68
      %74 = dma.hbm_to_vmem [thread:$0]  %s6, 2048, %s69, [#allocation12], 128, 128, 8
    $region29: #{tpu_custom_call.1} parent=1 // pred_fallthru
      _
    // Predicated region
    $region30: #{tpu_custom_call.1} parent=1 // pred_check
      _
    $region31: #{tpu_custom_call.1} parent=1 // pred_check_branch
      %76 = sbr.rel (0) target = $region33
    $region32: #{tpu_custom_call.1} parent=1 // pred_region
      _
    $region33: #{tpu_custom_call.1} parent=1 // pred_fallthru
      _
    // Predicated region
    $region34: #{tpu_custom_call.1} parent=1 // pred_check
      _
    $region35: #{tpu_custom_call.1} parent=1 // pred_check_branch
      %78 = sbr.rel (0) target = $region37
    $region36: #{tpu_custom_call.1} parent=1 // pred_region
      %79 = dma.done [#allocation5], 16
    $region37: #{tpu_custom_call.1} parent=1 // pred_fallthru
      _
    // Predicated region
    $region38: #{tpu_custom_call.1} parent=1 // pred_check
      _
    $region39: #{tpu_custom_call.1} parent=1 // pred_check_branch
      %81 = sbr.rel (0) target = $region41
    $region40: #{tpu_custom_call.1} parent=1 // pred_region
      %82 = dma.done [#allocation6], 16
    $region41: #{tpu_custom_call.1} parent=1 // pred_fallthru
      _
    // Predicated region
    $region42: #{tpu_custom_call.1} parent=1 // pred_check
      _
    $region43: #{tpu_custom_call.1} parent=1 // pred_check_branch
      %84 = sbr.rel (0) target = $region45
    $region44: #{tpu_custom_call.1} parent=1 // pred_region
      %85 = dma.done [#allocation9], 16
    $region45: #{tpu_custom_call.1} parent=1 // pred_fallthru
      _
    // Predicated region
    $region46: #{tpu_custom_call.1} parent=1 // pred_check
      _
    $region47: #{tpu_custom_call.1} parent=1 // pred_check_branch
      %87 = sbr.rel (0) target = $region49
    $region48: #{tpu_custom_call.1} parent=1 // pred_region
      %88 = dma.done [#allocation3], 2048
    $region49: #{tpu_custom_call.1} parent=1 // pred_fallthru
      _
    // Predicated region
    $region50: #{tpu_custom_call.1} parent=1 // pred_check
      _
    $region51: #{tpu_custom_call.1} parent=1 // pred_check_branch
      %90 = sbr.rel (0) target = $region53
    $region52: #{tpu_custom_call.1} parent=1 // pred_region
      %91 = dma.done [#allocation12], 2048
    $region53: #{tpu_custom_call.1} parent=1 // pred_fallthru
      _
    %92 = sfence
    %v94 = vld [vmem:[#allocation10] sm:$0xff]
    %v95 = vld [vmem:[#allocation10 + $0x8] sm:$0xff]
    %v96 = vld [vmem:[#allocation10 + $0x10] sm:$0xff]
    %v97 = vld [vmem:[#allocation10 + $0x18] sm:$0xff]
    %v98 = vld [vmem:[#allocation10 + $0x20] sm:$0xff]
    %v99 = vld [vmem:[#allocation10 + $0x28] sm:$0xff]
    %v100 = vld [vmem:[#allocation10 + $0x30] sm:$0xff]
    %v101 = vld [vmem:[#allocation10 + $0x38] sm:$0xff]
    %v102 = vld [vmem:[#allocation10 + $0x40] sm:$0xff]
    %v103 = vld [vmem:[#allocation10 + $0x48] sm:$0xff]
    %v104 = vld [vmem:[#allocation10 + $0x50] sm:$0xff]
    %v105 = vld [vmem:[#allocation10 + $0x58] sm:$0xff]
    %v106 = vld [vmem:[#allocation10 + $0x60] sm:$0xff]
    %v107 = vld [vmem:[#allocation10 + $0x68] sm:$0xff]
    %v108 = vld [vmem:[#allocation10 + $0x70] sm:$0xff]
    %v109 = vld [vmem:[#allocation10 + $0x78] sm:$0xff]
    %v110 = vpack.c.bf16 %v95, %v94
    %v111 = vpack.c.bf16 %v97, %v96
    %v112 = vpack.c.bf16 %v99, %v98
    %v113 = vpack.c.bf16 %v101, %v100
    %v114 = vpack.c.bf16 %v103, %v102
    %v115 = vpack.c.bf16 %v105, %v104
    %v116 = vpack.c.bf16 %v107, %v106
    %v117 = vpack.c.bf16 %v109, %v108
    %v118 = vld [vmem:[#allocation11] sm:$0xff]
    %v119 = vld [vmem:[#allocation11 + $0x8] sm:$0xff]
    %v120 = vld [vmem:[#allocation11 + $0x10] sm:$0xff]
    %v121 = vld [vmem:[#allocation11 + $0x18] sm:$0xff]
    %v122 = vld [vmem:[#allocation11 + $0x20] sm:$0xff]
    %v123 = vld [vmem:[#allocation11 + $0x28] sm:$0xff]
    %v124 = vld [vmem:[#allocation11 + $0x30] sm:$0xff]
    %v125 = vld [vmem:[#allocation11 + $0x38] sm:$0xff]
    %v126 = vld [vmem:[#allocation11 + $0x40] sm:$0xff]
    %v127 = vld [vmem:[#allocation11 + $0x48] sm:$0xff]
    %v128 = vld [vmem:[#allocation11 + $0x50] sm:$0xff]
    %v129 = vld [vmem:[#allocation11 + $0x58] sm:$0xff]
    %v130 = vld [vmem:[#allocation11 + $0x60] sm:$0xff]
    %v131 = vld [vmem:[#allocation11 + $0x68] sm:$0xff]
    %v132 = vld [vmem:[#allocation11 + $0x70] sm:$0xff]
    %v133 = vld [vmem:[#allocation11 + $0x78] sm:$0xff]
    %v134 = vpack.c.bf16 %v119, %v118
    %v135 = vpack.c.bf16 %v121, %v120
    %v136 = vpack.c.bf16 %v123, %v122
    %v137 = vpack.c.bf16 %v125, %v124
    %v138 = vpack.c.bf16 %v127, %v126
    %v139 = vpack.c.bf16 %v129, %v128
    %v140 = vpack.c.bf16 %v131, %v130
    %v141 = vpack.c.bf16 %v133, %v132
    %v142 = vld [vmem:[%s5] sm:$0xff]
    %v143 = vld [vmem:[%s7] sm:$0xff]
    %v144 = vld [vmem:[%s3] sm:$0xff]
    %145 = vst [vmem:[#allocation13] sm:$0xff] %v144
    %s146 = sld [smem:[#allocation2]]
    %s147 = sld [smem:[#allocation7]]
    %s148 = sld [smem:[#allocation8]]
    %v149 = vpack.c.bf16 %v144, %v144
    %150 = vmatprep.subr.bf16.mxu0 0
    %151 = vmatpush1.bf16.msra.mxu0 %v110
    %152 = vmatprep.subr.bf16.mxu0 0
    %153 = vmatpush1.bf16.msra.mxu0 %v111
    %154 = vmatprep.subr.bf16.mxu0 0
    %155 = vmatpush1.bf16.msra.mxu0 %v112
    %156 = vmatprep.subr.bf16.mxu0 0
    %157 = vmatpush1.bf16.msra.mxu0 %v113
    %158 = vmatprep.subr.bf16.mxu0 0
    %159 = vmatpush1.bf16.msra.mxu0 %v114
    %160 = vmatprep.subr.bf16.mxu0 0
    %161 = vmatpush1.bf16.msra.mxu0 %v115
    %162 = vmatprep.subr.bf16.mxu0 0
    %163 = vmatpush1.bf16.msra.mxu0 %v116
    %164 = vmatprep.subr.bf16.mxu0 0
    %165 = vmatpush1.bf16.msra.mxu0 %v117
    %166 = vmatprep.subr.bf16.mxu0 0
    %167 = vmatpush1.bf16.msra.mxu0 0
    %168 = vmatprep.subr.bf16.mxu0 0
    %169 = vmatpush1.bf16.msra.mxu0 0
    %170 = vmatprep.subr.bf16.mxu0 0
    %171 = vmatpush1.bf16.msra.mxu0 0
    %172 = vmatprep.subr.bf16.mxu0 0
    %173 = vmatpush1.bf16.msra.mxu0 0
    %174 = vmatprep.subr.bf16.mxu0 0
    %175 = vmatpush1.bf16.msra.mxu0 0
    %176 = vmatprep.subr.bf16.mxu0 0
    %177 = vmatpush1.bf16.msra.mxu0 0
    %178 = vmatprep.subr.bf16.mxu0 0
    %179 = vmatpush1.bf16.msra.mxu0 0
    %180 = vmatprep.subr.bf16.mxu0 0
    %181 = vmatpush1.bf16.msra.mxu0 0
    %182 = vmatprep.mubr.bf16.mxu0 0
    %183 = vmatmul.mubr.bf16.gmra.mrb[0].mxu0 %v149
    %v184 = vpop.f32.mrb[0].mxu0
    %v185 = vadd.f32 %v142, %v184
    %v186 = vpop.f32.mrb[0].mxu0
    %v187 = vpop.f32.mrb[0].mxu0
    %v188 = vpop.f32.mrb[0].mxu0
    %189 = vdwg.mxu0
    %v190 = vtanh.pop %v185
    %v191 = vpack.c.bf16 %v190, %v190
    %192 = vmatprep.subr.bf16.mxu0 0
    %193 = vmatpush1.bf16.msra.mxu0 %v134
    %194 = vmatprep.subr.bf16.mxu0 0
    %195 = vmatpush1.bf16.msra.mxu0 %v135
    %196 = vmatprep.subr.bf16.mxu0 0
    %197 = vmatpush1.bf16.msra.mxu0 %v136
    %198 = vmatprep.subr.bf16.mxu0 0
    %199 = vmatpush1.bf16.msra.mxu0 %v137
    %200 = vmatprep.subr.bf16.mxu0 0
    %201 = vmatpush1.bf16.msra.mxu0 %v138
    %202 = vmatprep.subr.bf16.mxu0 0
    %203 = vmatpush1.bf16.msra.mxu0 %v139
    %204 = vmatprep.subr.bf16.mxu0 0
    %205 = vmatpush1.bf16.msra.mxu0 %v140
    %206 = vmatprep.subr.bf16.mxu0 0
    %207 = vmatpush1.bf16.msra.mxu0 %v141
    %208 = vmatprep.subr.bf16.mxu0 0
    %209 = vmatpush1.bf16.msra.mxu0 0
    %210 = vmatprep.subr.bf16.mxu0 0
    %211 = vmatpush1.bf16.msra.mxu0 0
    %212 = vmatprep.subr.bf16.mxu0 0
    %213 = vmatpush1.bf16.msra.mxu0 0
    %214 = vmatprep.subr.bf16.mxu0 0
    %215 = vmatpush1.bf16.msra.mxu0 0
    %216 = vmatprep.subr.bf16.mxu0 0
    %217 = vmatpush1.bf16.msra.mxu0 0
    %218 = vmatprep.subr.bf16.mxu0 0
    %219 = vmatpush1.bf16.msra.mxu0 0
    %220 = vmatprep.subr.bf16.mxu0 0
    %221 = vmatpush1.bf16.msra.mxu0 0
    %222 = vmatprep.subr.bf16.mxu0 0
    %223 = vmatpush1.bf16.msra.mxu0 0
    %224 = vmatprep.mubr.bf16.mxu0 0
    %225 = vmatmul.mubr.bf16.gmra.mrb[0].mxu0 %v191
    %v226 = vpop.f32.mrb[0].mxu0
    %v227 = vadd.f32 %v143, %v226
    %v228 = vpop.f32.mrb[0].mxu0
    %v229 = vpop.f32.mrb[0].mxu0
    %v230 = vpop.f32.mrb[0].mxu0
    %231 = vdwg.mxu0
    %v232 = vstv %s147
    %v233 = vmul.f32 %v232, %v227
    %v234 = vadd.f32 %v144, %v233
    %v235 = vpack.c.bf16 %v234, %v234
    %236 = vmatprep.subr.bf16.mxu0 0
    %237 = vmatpush1.bf16.msra.mxu0 %v110
    %238 = vmatprep.subr.bf16.mxu0 0
    %239 = vmatpush1.bf16.msra.mxu0 %v111
    %240 = vmatprep.subr.bf16.mxu0 0
    %241 = vmatpush1.bf16.msra.mxu0 %v112
    %242 = vmatprep.subr.bf16.mxu0 0
    %243 = vmatpush1.bf16.msra.mxu0 %v113
    %244 = vmatprep.subr.bf16.mxu0 0
    %245 = vmatpush1.bf16.msra.mxu0 %v114
    %246 = vmatprep.subr.bf16.mxu0 0
    %247 = vmatpush1.bf16.msra.mxu0 %v115
    %248 = vmatprep.subr.bf16.mxu0 0
    %249 = vmatpush1.bf16.msra.mxu0 %v116
    %250 = vmatprep.subr.bf16.mxu0 0
    %251 = vmatpush1.bf16.msra.mxu0 %v117
    %252 = vmatprep.subr.bf16.mxu0 0
    %253 = vmatpush1.bf16.msra.mxu0 0
    %254 = vmatprep.subr.bf16.mxu0 0
    %255 = vmatpush1.bf16.msra.mxu0 0
    %256 = vmatprep.subr.bf16.mxu0 0
    %257 = vmatpush1.bf16.msra.mxu0 0
    %258 = vmatprep.subr.bf16.mxu0 0
    %259 = vmatpush1.bf16.msra.mxu0 0
    %260 = vmatprep.subr.bf16.mxu0 0
    %261 = vmatpush1.bf16.msra.mxu0 0
    %262 = vmatprep.subr.bf16.mxu0 0
    %263 = vmatpush1.bf16.msra.mxu0 0
    %264 = vmatprep.subr.bf16.mxu0 0
    %265 = vmatpush1.bf16.msra.mxu0 0
    %266 = vmatprep.subr.bf16.mxu0 0
    %267 = vmatpush1.bf16.msra.mxu0 0
    %268 = vmatprep.mubr.bf16.mxu0 0
    %269 = vmatmul.mubr.bf16.gmra.mrb[0].mxu0 %v235
    %v270 = vpop.f32.mrb[0].mxu0
    %v271 = vadd.f32 %v142, %v270
    %v272 = vpop.f32.mrb[0].mxu0
    %v273 = vpop.f32.mrb[0].mxu0
    %v274 = vpop.f32.mrb[0].mxu0
    %275 = vdwg.mxu0
    %v276 = vtanh.pop %v271
    %v277 = vpack.c.bf16 %v276, %v276
    %278 = vmatprep.subr.bf16.mxu0 0
    %279 = vmatpush1.bf16.msra.mxu0 %v134
    %280 = vmatprep.subr.bf16.mxu0 0
    %281 = vmatpush1.bf16.msra.mxu0 %v135
    %282 = vmatprep.subr.bf16.mxu0 0
    %283 = vmatpush1.bf16.msra.mxu0 %v136
    %284 = vmatprep.subr.bf16.mxu0 0
    %285 = vmatpush1.bf16.msra.mxu0 %v137
    %286 = vmatprep.subr.bf16.mxu0 0
    %287 = vmatpush1.bf16.msra.mxu0 %v138
    %288 = vmatprep.subr.bf16.mxu0 0
    %289 = vmatpush1.bf16.msra.mxu0 %v139
    %290 = vmatprep.subr.bf16.mxu0 0
    %291 = vmatpush1.bf16.msra.mxu0 %v140
    %292 = vmatprep.subr.bf16.mxu0 0
    %293 = vmatpush1.bf16.msra.mxu0 %v141
    %294 = vmatprep.subr.bf16.mxu0 0
    %295 = vmatpush1.bf16.msra.mxu0 0
    %296 = vmatprep.subr.bf16.mxu0 0
    %297 = vmatpush1.bf16.msra.mxu0 0
    %298 = vmatprep.subr.bf16.mxu0 0
    %299 = vmatpush1.bf16.msra.mxu0 0
    %300 = vmatprep.subr.bf16.mxu0 0
    %301 = vmatpush1.bf16.msra.mxu0 0
    %302 = vmatprep.subr.bf16.mxu0 0
    %303 = vmatpush1.bf16.msra.mxu0 0
    %304 = vmatprep.subr.bf16.mxu0 0
    %305 = vmatpush1.bf16.msra.mxu0 0
    %306 = vmatprep.subr.bf16.mxu0 0
    %307 = vmatpush1.bf16.msra.mxu0 0
    %308 = vmatprep.subr.bf16.mxu0 0
    %309 = vmatpush1.bf16.msra.mxu0 0
    %310 = vmatprep.mubr.bf16.mxu0 0
    %311 = vmatmul.mubr.bf16.gmra.mrb[0].mxu0 %v277
    %v312 = vpop.f32.mrb[0].mxu0
    %v313 = vadd.f32 %v143, %v312
    %v314 = vpop.f32.mrb[0].mxu0
    %v315 = vpop.f32.mrb[0].mxu0
    %v316 = vpop.f32.mrb[0].mxu0
    %317 = vdwg.mxu0
    %v318 = vmul.f32 %v232, %v313
    %v319 = vadd.f32 %v144, %v318
    %v320 = vpack.c.bf16 %v319, %v319
    %321 = vmatprep.subr.bf16.mxu0 0
    %322 = vmatpush1.bf16.msra.mxu0 %v110
    %323 = vmatprep.subr.bf16.mxu0 0
    %324 = vmatpush1.bf16.msra.mxu0 %v111
    %325 = vmatprep.subr.bf16.mxu0 0
    %326 = vmatpush1.bf16.msra.mxu0 %v112
    %327 = vmatprep.subr.bf16.mxu0 0
    %328 = vmatpush1.bf16.msra.mxu0 %v113
    %329 = vmatprep.subr.bf16.mxu0 0
    %330 = vmatpush1.bf16.msra.mxu0 %v114
    %331 = vmatprep.subr.bf16.mxu0 0
    %332 = vmatpush1.bf16.msra.mxu0 %v115
    %333 = vmatprep.subr.bf16.mxu0 0
    %334 = vmatpush1.bf16.msra.mxu0 %v116
    %335 = vmatprep.subr.bf16.mxu0 0
    %336 = vmatpush1.bf16.msra.mxu0 %v117
    %337 = vmatprep.subr.bf16.mxu0 0
    %338 = vmatpush1.bf16.msra.mxu0 0
    %339 = vmatprep.subr.bf16.mxu0 0
    %340 = vmatpush1.bf16.msra.mxu0 0
    %341 = vmatprep.subr.bf16.mxu0 0
    %342 = vmatpush1.bf16.msra.mxu0 0
    %343 = vmatprep.subr.bf16.mxu0 0
    %344 = vmatpush1.bf16.msra.mxu0 0
    %345 = vmatprep.subr.bf16.mxu0 0
    %346 = vmatpush1.bf16.msra.mxu0 0
    %347 = vmatprep.subr.bf16.mxu0 0
    %348 = vmatpush1.bf16.msra.mxu0 0
    %349 = vmatprep.subr.bf16.mxu0 0
    %350 = vmatpush1.bf16.msra.mxu0 0
    %351 = vmatprep.subr.bf16.mxu0 0
    %352 = vmatpush1.bf16.msra.mxu0 0
    %353 = vmatprep.mubr.bf16.mxu0 0
    %354 = vmatmul.mubr.bf16.gmra.mrb[0].mxu0 %v320
    %v355 = vpop.f32.mrb[0].mxu0
    %v356 = vadd.f32 %v142, %v355
    %v357 = vpop.f32.mrb[0].mxu0
    %v358 = vpop.f32.mrb[0].mxu0
    %v359 = vpop.f32.mrb[0].mxu0
    %360 = vdwg.mxu0
    %v361 = vtanh.pop %v356
    %v362 = vpack.c.bf16 %v361, %v361
    %363 = vmatprep.subr.bf16.mxu0 0
    %364 = vmatpush1.bf16.msra.mxu0 %v134
    %365 = vmatprep.subr.bf16.mxu0 0
    %366 = vmatpush1.bf16.msra.mxu0 %v135
    %367 = vmatprep.subr.bf16.mxu0 0
    %368 = vmatpush1.bf16.msra.mxu0 %v136
    %369 = vmatprep.subr.bf16.mxu0 0
    %370 = vmatpush1.bf16.msra.mxu0 %v137
    %371 = vmatprep.subr.bf16.mxu0 0
    %372 = vmatpush1.bf16.msra.mxu0 %v138
    %373 = vmatprep.subr.bf16.mxu0 0
    %374 = vmatpush1.bf16.msra.mxu0 %v139
    %375 = vmatprep.subr.bf16.mxu0 0
    %376 = vmatpush1.bf16.msra.mxu0 %v140
    %377 = vmatprep.subr.bf16.mxu0 0
    %378 = vmatpush1.bf16.msra.mxu0 %v141
    %379 = vmatprep.subr.bf16.mxu0 0
    %380 = vmatpush1.bf16.msra.mxu0 0
    %381 = vmatprep.subr.bf16.mxu0 0
    %382 = vmatpush1.bf16.msra.mxu0 0
    %383 = vmatprep.subr.bf16.mxu0 0
    %384 = vmatpush1.bf16.msra.mxu0 0
    %385 = vmatprep.subr.bf16.mxu0 0
    %386 = vmatpush1.bf16.msra.mxu0 0
    %387 = vmatprep.subr.bf16.mxu0 0
    %388 = vmatpush1.bf16.msra.mxu0 0
    %389 = vmatprep.subr.bf16.mxu0 0
    %390 = vmatpush1.bf16.msra.mxu0 0
    %391 = vmatprep.subr.bf16.mxu0 0
    %392 = vmatpush1.bf16.msra.mxu0 0
    %393 = vmatprep.subr.bf16.mxu0 0
    %394 = vmatpush1.bf16.msra.mxu0 0
    %395 = vmatprep.mubr.bf16.mxu0 0
    %396 = vmatmul.mubr.bf16.gmra.mrb[0].mxu0 %v362
    %v397 = vpop.f32.mrb[0].mxu0
    %v398 = vadd.f32 %v143, %v397
    %v399 = vpop.f32.mrb[0].mxu0
    %v400 = vpop.f32.mrb[0].mxu0
    %v401 = vpop.f32.mrb[0].mxu0
    %402 = vdwg.mxu0
    %v403 = vstv %s146
    %v404 = vmul.f32 %v403, %v398
    %v405 = vadd.f32 %v144, %v404
    %v406 = vpack.c.bf16 %v405, %v405
    %407 = vmatprep.subr.bf16.mxu0 0
    %408 = vmatpush1.bf16.msra.mxu0 %v110
    %409 = vmatprep.subr.bf16.mxu0 0
    %410 = vmatpush1.bf16.msra.mxu0 %v111
    %411 = vmatprep.subr.bf16.mxu0 0
    %412 = vmatpush1.bf16.msra.mxu0 %v112
    %413 = vmatprep.subr.bf16.mxu0 0
    %414 = vmatpush1.bf16.msra.mxu0 %v113
    %415 = vmatprep.subr.bf16.mxu0 0
    %416 = vmatpush1.bf16.msra.mxu0 %v114
    %417 = vmatprep.subr.bf16.mxu0 0
    %418 = vmatpush1.bf16.msra.mxu0 %v115
    %419 = vmatprep.subr.bf16.mxu0 0
    %420 = vmatpush1.bf16.msra.mxu0 %v116
    %421 = vmatprep.subr.bf16.mxu0 0
    %422 = vmatpush1.bf16.msra.mxu0 %v117
    %423 = vmatprep.subr.bf16.mxu0 0
    %424 = vmatpush1.bf16.msra.mxu0 0
    %425 = vmatprep.subr.bf16.mxu0 0
    %426 = vmatpush1.bf16.msra.mxu0 0
    %427 = vmatprep.subr.bf16.mxu0 0
    %428 = vmatpush1.bf16.msra.mxu0 0
    %429 = vmatprep.subr.bf16.mxu0 0
    %430 = vmatpush1.bf16.msra.mxu0 0
    %431 = vmatprep.subr.bf16.mxu0 0
    %432 = vmatpush1.bf16.msra.mxu0 0
    %433 = vmatprep.subr.bf16.mxu0 0
    %434 = vmatpush1.bf16.msra.mxu0 0
    %435 = vmatprep.subr.bf16.mxu0 0
    %436 = vmatpush1.bf16.msra.mxu0 0
    %437 = vmatprep.subr.bf16.mxu0 0
    %438 = vmatpush1.bf16.msra.mxu0 0
    %439 = vmatprep.mubr.bf16.mxu0 0
    %440 = vmatmul.mubr.bf16.gmra.mrb[0].mxu0 %v406
    %v441 = vpop.f32.mrb[0].mxu0
    %v442 = vadd.f32 %v142, %v441
    %v443 = vpop.f32.mrb[0].mxu0
    %v444 = vpop.f32.mrb[0].mxu0
    %v445 = vpop.f32.mrb[0].mxu0
    %446 = vdwg.mxu0
    %v447 = vtanh.pop %v442
    %v448 = vpack.c.bf16 %v447, %v447
    %449 = vmatprep.subr.bf16.mxu0 0
    %450 = vmatpush1.bf16.msra.mxu0 %v134
    %451 = vmatprep.subr.bf16.mxu0 0
    %452 = vmatpush1.bf16.msra.mxu0 %v135
    %453 = vmatprep.subr.bf16.mxu0 0
    %454 = vmatpush1.bf16.msra.mxu0 %v136
    %455 = vmatprep.subr.bf16.mxu0 0
    %456 = vmatpush1.bf16.msra.mxu0 %v137
    %457 = vmatprep.subr.bf16.mxu0 0
    %458 = vmatpush1.bf16.msra.mxu0 %v138
    %459 = vmatprep.subr.bf16.mxu0 0
    %460 = vmatpush1.bf16.msra.mxu0 %v139
    %461 = vmatprep.subr.bf16.mxu0 0
    %462 = vmatpush1.bf16.msra.mxu0 %v140
    %463 = vmatprep.subr.bf16.mxu0 0
    %464 = vmatpush1.bf16.msra.mxu0 %v141
    %465 = vmatprep.subr.bf16.mxu0 0
    %466 = vmatpush1.bf16.msra.mxu0 0
    %467 = vmatprep.subr.bf16.mxu0 0
    %468 = vmatpush1.bf16.msra.mxu0 0
    %469 = vmatprep.subr.bf16.mxu0 0
    %470 = vmatpush1.bf16.msra.mxu0 0
    %471 = vmatprep.subr.bf16.mxu0 0
    %472 = vmatpush1.bf16.msra.mxu0 0
    %473 = vmatprep.subr.bf16.mxu0 0
    %474 = vmatpush1.bf16.msra.mxu0 0
    %475 = vmatprep.subr.bf16.mxu0 0
    %476 = vmatpush1.bf16.msra.mxu0 0
    %477 = vmatprep.subr.bf16.mxu0 0
    %478 = vmatpush1.bf16.msra.mxu0 0
    %479 = vmatprep.subr.bf16.mxu0 0
    %480 = vmatpush1.bf16.msra.mxu0 0
    %481 = vmatprep.mubr.bf16.mxu0 0
    %482 = vmatmul.mubr.bf16.gmra.mrb[0].mxu0 %v448
    %v483 = vpop.f32.mrb[0].mxu0
    %v484 = vadd.f32 %v143, %v483
    %v485 = vpop.f32.mrb[0].mxu0
    %v486 = vpop.f32.mrb[0].mxu0
    %v487 = vpop.f32.mrb[0].mxu0
    %488 = vdwg.mxu0
    %v489 = vmul.f32 %v313, 2.0
    %v490 = vadd.f32 %v227, %v489
    %v491 = vmul.f32 %v398, 2.0
    %v492 = vadd.f32 %v490, %v491
    %v493 = vadd.f32 %v492, %v484
    %v494 = vstv %s148
    %v495 = vmul.f32 %v494, %v493
    %v496 = vadd.f32 %v144, %v495
    %s497 = scalar_lea.vmem [#allocation13], 8
    %498 = vst [vmem:[%s497] sm:$0xff] %v496
    %s499 = sld [smem:[#allocation2 + $0x1]]
    %s500 = sld [smem:[#allocation7 + $0x1]]
    %s501 = sld [smem:[#allocation8 + $0x1]]
    %v502 = vpack.c.bf16 %v496, %v496
    %503 = vmatprep.subr.bf16.mxu0 0
    %504 = vmatpush1.bf16.msra.mxu0 %v110
    %505 = vmatprep.subr.bf16.mxu0 0
    %506 = vmatpush1.bf16.msra.mxu0 %v111
    %507 = vmatprep.subr.bf16.mxu0 0
    %508 = vmatpush1.bf16.msra.mxu0 %v112
    %509 = vmatprep.subr.bf16.mxu0 0
    %510 = vmatpush1.bf16.msra.mxu0 %v113
    %511 = vmatprep.subr.bf16.mxu0 0
    %512 = vmatpush1.bf16.msra.mxu0 %v114
    %513 = vmatprep.subr.bf16.mxu0 0
    %514 = vmatpush1.bf16.msra.mxu0 %v115
    %515 = vmatprep.subr.bf16.mxu0 0
    %516 = vmatpush1.bf16.msra.mxu0 %v116
    %517 = vmatprep.subr.bf16.mxu0 0
    %518 = vmatpush1.bf16.msra.mxu0 %v117
    %519 = vmatprep.subr.bf16.mxu0 0
    %520 = vmatpush1.bf16.msra.mxu0 0
    %521 = vmatprep.subr.bf16.mxu0 0
    %522 = vmatpush1.bf16.msra.mxu0 0
    %523 = vmatprep.subr.bf16.mxu0 0
    %524 = vmatpush1.bf16.msra.mxu0 0
    %525 = vmatprep.subr.bf16.mxu0 0
    %526 = vmatpush1.bf16.msra.mxu0 0
    %527 = vmatprep.subr.bf16.mxu0 0
    %528 = vmatpush1.bf16.msra.mxu0 0
    %529 = vmatprep.subr.bf16.mxu0 0
    %530 = vmatpush1.bf16.msra.mxu0 0
    %531 = vmatprep.subr.bf16.mxu0 0
    %532 = vmatpush1.bf16.msra.mxu0 0
    %533 = vmatprep.subr.bf16.mxu0 0
    %534 = vmatpush1.bf16.msra.mxu0 0
    %535 = vmatprep.mubr.bf16.mxu0 0
    %536 = vmatmul.mubr.bf16.gmra.mrb[0].mxu0 %v502
    %v537 = vpop.f32.mrb[0].mxu0
    %v538 = vadd.f32 %v142, %v537
    %v539 = vpop.f32.mrb[0].mxu0
    %v540 = vpop.f32.mrb[0].mxu0
    %v541 = vpop.f32.mrb[0].mxu0
    %542 = vdwg.mxu0
    %v543 = vtanh.pop %v538
    %v544 = vpack.c.bf16 %v543, %v543
    %545 = vmatprep.subr.bf16.mxu0 0
    %546 = vmatpush1.bf16.msra.mxu0 %v134
    %547 = vmatprep.subr.bf16.mxu0 0
    %548 = vmatpush1.bf16.msra.mxu0 %v135
    %549 = vmatprep.subr.bf16.mxu0 0
    %550 = vmatpush1.bf16.msra.mxu0 %v136
    %551 = vmatprep.subr.bf16.mxu0 0
    %552 = vmatpush1.bf16.msra.mxu0 %v137
    %553 = vmatprep.subr.bf16.mxu0 0
    %554 = vmatpush1.bf16.msra.mxu0 %v138
    %555 = vmatprep.subr.bf16.mxu0 0
    %556 = vmatpush1.bf16.msra.mxu0 %v139
    %557 = vmatprep.subr.bf16.mxu0 0
    %558 = vmatpush1.bf16.msra.mxu0 %v140
    %559 = vmatprep.subr.bf16.mxu0 0
    %560 = vmatpush1.bf16.msra.mxu0 %v141
    %561 = vmatprep.subr.bf16.mxu0 0
    %562 = vmatpush1.bf16.msra.mxu0 0
    %563 = vmatprep.subr.bf16.mxu0 0
    %564 = vmatpush1.bf16.msra.mxu0 0
    %565 = vmatprep.subr.bf16.mxu0 0
    %566 = vmatpush1.bf16.msra.mxu0 0
    %567 = vmatprep.subr.bf16.mxu0 0
    %568 = vmatpush1.bf16.msra.mxu0 0
    %569 = vmatprep.subr.bf16.mxu0 0
    %570 = vmatpush1.bf16.msra.mxu0 0
    %571 = vmatprep.subr.bf16.mxu0 0
    %572 = vmatpush1.bf16.msra.mxu0 0
    %573 = vmatprep.subr.bf16.mxu0 0
    %574 = vmatpush1.bf16.msra.mxu0 0
    %575 = vmatprep.subr.bf16.mxu0 0
    %576 = vmatpush1.bf16.msra.mxu0 0
    %577 = vmatprep.mubr.bf16.mxu0 0
    %578 = vmatmul.mubr.bf16.gmra.mrb[0].mxu0 %v544
    %v579 = vpop.f32.mrb[0].mxu0
    %v580 = vadd.f32 %v143, %v579
    %v581 = vpop.f32.mrb[0].mxu0
    %v582 = vpop.f32.mrb[0].mxu0
    %v583 = vpop.f32.mrb[0].mxu0
    %584 = vdwg.mxu0
    %v585 = vstv %s500
    %v586 = vmul.f32 %v585, %v580
    %v587 = vadd.f32 %v496, %v586
    %v588 = vpack.c.bf16 %v587, %v587
    %589 = vmatprep.subr.bf16.mxu0 0
    %590 = vmatpush1.bf16.msra.mxu0 %v110
    %591 = vmatprep.subr.bf16.mxu0 0
    %592 = vmatpush1.bf16.msra.mxu0 %v111
    %593 = vmatprep.subr.bf16.mxu0 0
    %594 = vmatpush1.bf16.msra.mxu0 %v112
    %595 = vmatprep.subr.bf16.mxu0 0
    %596 = vmatpush1.bf16.msra.mxu0 %v113
    %597 = vmatprep.subr.bf16.mxu0 0
    %598 = vmatpush1.bf16.msra.mxu0 %v114
    %599 = vmatprep.subr.bf16.mxu0 0
    %600 = vmatpush1.bf16.msra.mxu0 %v115
    %601 = vmatprep.subr.bf16.mxu0 0
    %602 = vmatpush1.bf16.msra.mxu0 %v116
    %603 = vmatprep.subr.bf16.mxu0 0
    %604 = vmatpush1.bf16.msra.mxu0 %v117
    %605 = vmatprep.subr.bf16.mxu0 0
    %606 = vmatpush1.bf16.msra.mxu0 0
    %607 = vmatprep.subr.bf16.mxu0 0
    %608 = vmatpush1.bf16.msra.mxu0 0
    %609 = vmatprep.subr.bf16.mxu0 0
    %610 = vmatpush1.bf16.msra.mxu0 0
    %611 = vmatprep.subr.bf16.mxu0 0
    %612 = vmatpush1.bf16.msra.mxu0 0
    %613 = vmatprep.subr.bf16.mxu0 0
    %614 = vmatpush1.bf16.msra.mxu0 0
    %615 = vmatprep.subr.bf16.mxu0 0
    %616 = vmatpush1.bf16.msra.mxu0 0
    %617 = vmatprep.subr.bf16.mxu0 0
    %618 = vmatpush1.bf16.msra.mxu0 0
    %619 = vmatprep.subr.bf16.mxu0 0
    %620 = vmatpush1.bf16.msra.mxu0 0
    %621 = vmatprep.mubr.bf16.mxu0 0
    %622 = vmatmul.mubr.bf16.gmra.mrb[0].mxu0 %v588
    %v623 = vpop.f32.mrb[0].mxu0
    %v624 = vadd.f32 %v142, %v623
    %v625 = vpop.f32.mrb[0].mxu0
    %v626 = vpop.f32.mrb[0].mxu0
    %v627 = vpop.f32.mrb[0].mxu0
    %628 = vdwg.mxu0
    %v629 = vtanh.pop %v624
    %v630 = vpack.c.bf16 %v629, %v629
    %631 = vmatprep.subr.bf16.mxu0 0
    %632 = vmatpush1.bf16.msra.mxu0 %v134
    %633 = vmatprep.subr.bf16.mxu0 0
    %634 = vmatpush1.bf16.msra.mxu0 %v135
    %635 = vmatprep.subr.bf16.mxu0 0
    %636 = vmatpush1.bf16.msra.mxu0 %v136
    %637 = vmatprep.subr.bf16.mxu0 0
    %638 = vmatpush1.bf16.msra.mxu0 %v137
    %639 = vmatprep.subr.bf16.mxu0 0
    %640 = vmatpush1.bf16.msra.mxu0 %v138
    %641 = vmatprep.subr.bf16.mxu0 0
    %642 = vmatpush1.bf16.msra.mxu0 %v139
    %643 = vmatprep.subr.bf16.mxu0 0
    %644 = vmatpush1.bf16.msra.mxu0 %v140
    %645 = vmatprep.subr.bf16.mxu0 0
    %646 = vmatpush1.bf16.msra.mxu0 %v141
    %647 = vmatprep.subr.bf16.mxu0 0
    %648 = vmatpush1.bf16.msra.mxu0 0
    %649 = vmatprep.subr.bf16.mxu0 0
    %650 = vmatpush1.bf16.msra.mxu0 0
    %651 = vmatprep.subr.bf16.mxu0 0
    %652 = vmatpush1.bf16.msra.mxu0 0
    %653 = vmatprep.subr.bf16.mxu0 0
    %654 = vmatpush1.bf16.msra.mxu0 0
    %655 = vmatprep.subr.bf16.mxu0 0
    %656 = vmatpush1.bf16.msra.mxu0 0
    %657 = vmatprep.subr.bf16.mxu0 0
    %658 = vmatpush1.bf16.msra.mxu0 0
    %659 = vmatprep.subr.bf16.mxu0 0
    %660 = vmatpush1.bf16.msra.mxu0 0
    %661 = vmatprep.subr.bf16.mxu0 0
    %662 = vmatpush1.bf16.msra.mxu0 0
    %663 = vmatprep.mubr.bf16.mxu0 0
    %664 = vmatmul.mubr.bf16.gmra.mrb[0].mxu0 %v630
    %v665 = vpop.f32.mrb[0].mxu0
    %v666 = vadd.f32 %v143, %v665
    %v667 = vpop.f32.mrb[0].mxu0
    %v668 = vpop.f32.mrb[0].mxu0
    %v669 = vpop.f32.mrb[0].mxu0
    %670 = vdwg.mxu0
    %v671 = vmul.f32 %v585, %v666
    %v672 = vadd.f32 %v496, %v671
    %v673 = vpack.c.bf16 %v672, %v672
    %674 = vmatprep.subr.bf16.mxu0 0
    %675 = vmatpush1.bf16.msra.mxu0 %v110
    %676 = vmatprep.subr.bf16.mxu0 0
    %677 = vmatpush1.bf16.msra.mxu0 %v111
    %678 = vmatprep.subr.bf16.mxu0 0
    %679 = vmatpush1.bf16.msra.mxu0 %v112
    %680 = vmatprep.subr.bf16.mxu0 0
    %681 = vmatpush1.bf16.msra.mxu0 %v113
    %682 = vmatprep.subr.bf16.mxu0 0
    %683 = vmatpush1.bf16.msra.mxu0 %v114
    %684 = vmatprep.subr.bf16.mxu0 0
    %685 = vmatpush1.bf16.msra.mxu0 %v115
    %686 = vmatprep.subr.bf16.mxu0 0
    %687 = vmatpush1.bf16.msra.mxu0 %v116
    %688 = vmatprep.subr.bf16.mxu0 0
    %689 = vmatpush1.bf16.msra.mxu0 %v117
    %690 = vmatprep.subr.bf16.mxu0 0
    %691 = vmatpush1.bf16.msra.mxu0 0
    %692 = vmatprep.subr.bf16.mxu0 0
    %693 = vmatpush1.bf16.msra.mxu0 0
    %694 = vmatprep.subr.bf16.mxu0 0
    %695 = vmatpush1.bf16.msra.mxu0 0
    %696 = vmatprep.subr.bf16.mxu0 0
    %697 = vmatpush1.bf16.msra.mxu0 0
    %698 = vmatprep.subr.bf16.mxu0 0
    %699 = vmatpush1.bf16.msra.mxu0 0
    %700 = vmatprep.subr.bf16.mxu0 0
    %701 = vmatpush1.bf16.msra.mxu0 0
    %702 = vmatprep.subr.bf16.mxu0 0
    %703 = vmatpush1.bf16.msra.mxu0 0
    %704 = vmatprep.subr.bf16.mxu0 0
    %705 = vmatpush1.bf16.msra.mxu0 0
    %706 = vmatprep.mubr.bf16.mxu0 0
    %707 = vmatmul.mubr.bf16.gmra.mrb[0].mxu0 %v673
    %v708 = vpop.f32.mrb[0].mxu0
    %v709 = vadd.f32 %v142, %v708
    %v710 = vpop.f32.mrb[0].mxu0
    %v711 = vpop.f32.mrb[0].mxu0
    %v712 = vpop.f32.mrb[0].mxu0
    %713 = vdwg.mxu0
    %v714 = vtanh.pop %v709
    %v715 = vpack.c.bf16 %v714, %v714
    %716 = vmatprep.subr.bf16.mxu0 0
    %717 = vmatpush1.bf16.msra.mxu0 %v134
    %718 = vmatprep.subr.bf16.mxu0 0
    %719 = vmatpush1.bf16.msra.mxu0 %v135
    %720 = vmatprep.subr.bf16.mxu0 0
    %721 = vmatpush1.bf16.msra.mxu0 %v136
    %722 = vmatprep.subr.bf16.mxu0 0
    %723 = vmatpush1.bf16.msra.mxu0 %v137
    %724 = vmatprep.subr.bf16.mxu0 0
    %725 = vmatpush1.bf16.msra.mxu0 %v138
    %726 = vmatprep.subr.bf16.mxu0 0
    %727 = vmatpush1.bf16.msra.mxu0 %v139
    %728 = vmatprep.subr.bf16.mxu0 0
    %729 = vmatpush1.bf16.msra.mxu0 %v140
    %730 = vmatprep.subr.bf16.mxu0 0
    %731 = vmatpush1.bf16.msra.mxu0 %v141
    %732 = vmatprep.subr.bf16.mxu0 0
    %733 = vmatpush1.bf16.msra.mxu0 0
    %734 = vmatprep.subr.bf16.mxu0 0
    %735 = vmatpush1.bf16.msra.mxu0 0
    %736 = vmatprep.subr.bf16.mxu0 0
    %737 = vmatpush1.bf16.msra.mxu0 0
    %738 = vmatprep.subr.bf16.mxu0 0
    %739 = vmatpush1.bf16.msra.mxu0 0
    %740 = vmatprep.subr.bf16.mxu0 0
    %741 = vmatpush1.bf16.msra.mxu0 0
    %742 = vmatprep.subr.bf16.mxu0 0
    %743 = vmatpush1.bf16.msra.mxu0 0
    %744 = vmatprep.subr.bf16.mxu0 0
    %745 = vmatpush1.bf16.msra.mxu0 0
    %746 = vmatprep.subr.bf16.mxu0 0
    %747 = vmatpush1.bf16.msra.mxu0 0
    %748 = vmatprep.mubr.bf16.mxu0 0
    %749 = vmatmul.mubr.bf16.gmra.mrb[0].mxu0 %v715
    %v750 = vpop.f32.mrb[0].mxu0
    %v751 = vadd.f32 %v143, %v750
    %v752 = vpop.f32.mrb[0].mxu0
    %v753 = vpop.f32.mrb[0].mxu0
    %v754 = vpop.f32.mrb[0].mxu0
    %755 = vdwg.mxu0
    %v756 = vstv %s499
    %v757 = vmul.f32 %v756, %v751
    %v758 = vadd.f32 %v496, %v757
    %v759 = vpack.c.bf16 %v758, %v758
    %760 = vmatprep.subr.bf16.mxu0 0
    %761 = vmatpush1.bf16.msra.mxu0 %v110
    %762 = vmatprep.subr.bf16.mxu0 0
    %763 = vmatpush1.bf16.msra.mxu0 %v111
    %764 = vmatprep.subr.bf16.mxu0 0
    %765 = vmatpush1.bf16.msra.mxu0 %v112
    %766 = vmatprep.subr.bf16.mxu0 0
    %767 = vmatpush1.bf16.msra.mxu0 %v113
    %768 = vmatprep.subr.bf16.mxu0 0
    %769 = vmatpush1.bf16.msra.mxu0 %v114
    %770 = vmatprep.subr.bf16.mxu0 0
    %771 = vmatpush1.bf16.msra.mxu0 %v115
    %772 = vmatprep.subr.bf16.mxu0 0
    %773 = vmatpush1.bf16.msra.mxu0 %v116
    %774 = vmatprep.subr.bf16.mxu0 0
    %775 = vmatpush1.bf16.msra.mxu0 %v117
    %776 = vmatprep.subr.bf16.mxu0 0
    %777 = vmatpush1.bf16.msra.mxu0 0
    %778 = vmatprep.subr.bf16.mxu0 0
    %779 = vmatpush1.bf16.msra.mxu0 0
    %780 = vmatprep.subr.bf16.mxu0 0
    %781 = vmatpush1.bf16.msra.mxu0 0
    %782 = vmatprep.subr.bf16.mxu0 0
    %783 = vmatpush1.bf16.msra.mxu0 0
    %784 = vmatprep.subr.bf16.mxu0 0
    %785 = vmatpush1.bf16.msra.mxu0 0
    %786 = vmatprep.subr.bf16.mxu0 0
    %787 = vmatpush1.bf16.msra.mxu0 0
    %788 = vmatprep.subr.bf16.mxu0 0
    %789 = vmatpush1.bf16.msra.mxu0 0
    %790 = vmatprep.subr.bf16.mxu0 0
    %791 = vmatpush1.bf16.msra.mxu0 0
    %792 = vmatprep.mubr.bf16.mxu0 0
    %793 = vmatmul.mubr.bf16.gmra.mrb[0].mxu0 %v759
    %v794 = vpop.f32.mrb[0].mxu0
    %v795 = vadd.f32 %v142, %v794
    %v796 = vpop.f32.mrb[0].mxu0
    %v797 = vpop.f32.mrb[0].mxu0
    %v798 = vpop.f32.mrb[0].mxu0
    %799 = vdwg.mxu0
    %v800 = vtanh.pop %v795
    %v801 = vpack.c.bf16 %v800, %v800
    %802 = vmatprep.subr.bf16.mxu0 0
    %803 = vmatpush1.bf16.msra.mxu0 %v134
    %804 = vmatprep.subr.bf16.mxu0 0
    %805 = vmatpush1.bf16.msra.mxu0 %v135
    %806 = vmatprep.subr.bf16.mxu0 0
    %807 = vmatpush1.bf16.msra.mxu0 %v136
    %808 = vmatprep.subr.bf16.mxu0 0
    %809 = vmatpush1.bf16.msra.mxu0 %v137
    %810 = vmatprep.subr.bf16.mxu0 0
    %811 = vmatpush1.bf16.msra.mxu0 %v138
    %812 = vmatprep.subr.bf16.mxu0 0
    %813 = vmatpush1.bf16.msra.mxu0 %v139
    %814 = vmatprep.subr.bf16.mxu0 0
    %815 = vmatpush1.bf16.msra.mxu0 %v140
    %816 = vmatprep.subr.bf16.mxu0 0
    %817 = vmatpush1.bf16.msra.mxu0 %v141
    %818 = vmatprep.subr.bf16.mxu0 0
    %819 = vmatpush1.bf16.msra.mxu0 0
    %820 = vmatprep.subr.bf16.mxu0 0
    %821 = vmatpush1.bf16.msra.mxu0 0
    %822 = vmatprep.subr.bf16.mxu0 0
    %823 = vmatpush1.bf16.msra.mxu0 0
    %824 = vmatprep.subr.bf16.mxu0 0
    %825 = vmatpush1.bf16.msra.mxu0 0
    %826 = vmatprep.subr.bf16.mxu0 0
    %827 = vmatpush1.bf16.msra.mxu0 0
    %828 = vmatprep.subr.bf16.mxu0 0
    %829 = vmatpush1.bf16.msra.mxu0 0
    %830 = vmatprep.subr.bf16.mxu0 0
    %831 = vmatpush1.bf16.msra.mxu0 0
    %832 = vmatprep.subr.bf16.mxu0 0
    %833 = vmatpush1.bf16.msra.mxu0 0
    %834 = vmatprep.mubr.bf16.mxu0 0
    %835 = vmatmul.mubr.bf16.gmra.mrb[0].mxu0 %v801
    %v836 = vpop.f32.mrb[0].mxu0
    %v837 = vadd.f32 %v143, %v836
    %v838 = vpop.f32.mrb[0].mxu0
    %v839 = vpop.f32.mrb[0].mxu0
    %v840 = vpop.f32.mrb[0].mxu0
    %841 = vdwg.mxu0
    %v842 = vmul.f32 %v666, 2.0
    %v843 = vadd.f32 %v580, %v842
    %v844 = vmul.f32 %v751, 2.0
    %v845 = vadd.f32 %v843, %v844
    %v846 = vadd.f32 %v845, %v837
    %v847 = vstv %s501
    %v848 = vmul.f32 %v847, %v846
    %v849 = vadd.f32 %v496, %v848
    %s850 = scalar_lea.vmem [#allocation13], 16
    %851 = vst [vmem:[%s850] sm:$0xff] %v849
    %s852 = sld [smem:[#allocation2 + $0x2]]
    %s853 = sld [smem:[#allocation7 + $0x2]]
    %s854 = sld [smem:[#allocation8 + $0x2]]
    %v855 = vpack.c.bf16 %v849, %v849
    %856 = vmatprep.subr.bf16.mxu0 0
    %857 = vmatpush1.bf16.msra.mxu0 %v110
    %858 = vmatprep.subr.bf16.mxu0 0
    %859 = vmatpush1.bf16.msra.mxu0 %v111
    %860 = vmatprep.subr.bf16.mxu0 0
    %861 = vmatpush1.bf16.msra.mxu0 %v112
    %862 = vmatprep.subr.bf16.mxu0 0
    %863 = vmatpush1.bf16.msra.mxu0 %v113
    %864 = vmatprep.subr.bf16.mxu0 0
    %865 = vmatpush1.bf16.msra.mxu0 %v114
    %866 = vmatprep.subr.bf16.mxu0 0
    %867 = vmatpush1.bf16.msra.mxu0 %v115
    %868 = vmatprep.subr.bf16.mxu0 0
    %869 = vmatpush1.bf16.msra.mxu0 %v116
    %870 = vmatprep.subr.bf16.mxu0 0
    %871 = vmatpush1.bf16.msra.mxu0 %v117
    %872 = vmatprep.subr.bf16.mxu0 0
    %873 = vmatpush1.bf16.msra.mxu0 0
    %874 = vmatprep.subr.bf16.mxu0 0
    %875 = vmatpush1.bf16.msra.mxu0 0
    %876 = vmatprep.subr.bf16.mxu0 0
    %877 = vmatpush1.bf16.msra.mxu0 0
    %878 = vmatprep.subr.bf16.mxu0 0
    %879 = vmatpush1.bf16.msra.mxu0 0
    %880 = vmatprep.subr.bf16.mxu0 0
    %881 = vmatpush1.bf16.msra.mxu0 0
    %882 = vmatprep.subr.bf16.mxu0 0
    %883 = vmatpush1.bf16.msra.mxu0 0
    %884 = vmatprep.subr.bf16.mxu0 0
    %885 = vmatpush1.bf16.msra.mxu0 0
    %886 = vmatprep.subr.bf16.mxu0 0
    %887 = vmatpush1.bf16.msra.mxu0 0
    %888 = vmatprep.mubr.bf16.mxu0 0
    %889 = vmatmul.mubr.bf16.gmra.mrb[0].mxu0 %v855
    %v890 = vpop.f32.mrb[0].mxu0
    %v891 = vadd.f32 %v142, %v890
    %v892 = vpop.f32.mrb[0].mxu0
    %v893 = vpop.f32.mrb[0].mxu0
    %v894 = vpop.f32.mrb[0].mxu0
    %895 = vdwg.mxu0
    %v896 = vtanh.pop %v891
    %v897 = vpack.c.bf16 %v896, %v896
    %898 = vmatprep.subr.bf16.mxu0 0
    %899 = vmatpush1.bf16.msra.mxu0 %v134
    %900 = vmatprep.subr.bf16.mxu0 0
    %901 = vmatpush1.bf16.msra.mxu0 %v135
    %902 = vmatprep.subr.bf16.mxu0 0
    %903 = vmatpush1.bf16.msra.mxu0 %v136
    %904 = vmatprep.subr.bf16.mxu0 0
    %905 = vmatpush1.bf16.msra.mxu0 %v137
    %906 = vmatprep.subr.bf16.mxu0 0
    %907 = vmatpush1.bf16.msra.mxu0 %v138
    %908 = vmatprep.subr.bf16.mxu0 0
    %909 = vmatpush1.bf16.msra.mxu0 %v139
    %910 = vmatprep.subr.bf16.mxu0 0
    %911 = vmatpush1.bf16.msra.mxu0 %v140
    %912 = vmatprep.subr.bf16.mxu0 0
    %913 = vmatpush1.bf16.msra.mxu0 %v141
    %914 = vmatprep.subr.bf16.mxu0 0
    %915 = vmatpush1.bf16.msra.mxu0 0
    %916 = vmatprep.subr.bf16.mxu0 0
    %917 = vmatpush1.bf16.msra.mxu0 0
    %918 = vmatprep.subr.bf16.mxu0 0
    %919 = vmatpush1.bf16.msra.mxu0 0
    %920 = vmatprep.subr.bf16.mxu0 0
    %921 = vmatpush1.bf16.msra.mxu0 0
    %922 = vmatprep.subr.bf16.mxu0 0
    %923 = vmatpush1.bf16.msra.mxu0 0
    %924 = vmatprep.subr.bf16.mxu0 0
    %925 = vmatpush1.bf16.msra.mxu0 0
    %926 = vmatprep.subr.bf16.mxu0 0
    %927 = vmatpush1.bf16.msra.mxu0 0
    %928 = vmatprep.subr.bf16.mxu0 0
    %929 = vmatpush1.bf16.msra.mxu0 0
    %930 = vmatprep.mubr.bf16.mxu0 0
    %931 = vmatmul.mubr.bf16.gmra.mrb[0].mxu0 %v897
    %v932 = vpop.f32.mrb[0].mxu0
    %v933 = vadd.f32 %v143, %v932
    %v934 = vpop.f32.mrb[0].mxu0
    %v935 = vpop.f32.mrb[0].mxu0
    %v936 = vpop.f32.mrb[0].mxu0
    %937 = vdwg.mxu0
    %v938 = vstv %s853
    %v939 = vmul.f32 %v938, %v933
    %v940 = vadd.f32 %v849, %v939
    %v941 = vpack.c.bf16 %v940, %v940
    %942 = vmatprep.subr.bf16.mxu0 0
    %943 = vmatpush1.bf16.msra.mxu0 %v110
    %944 = vmatprep.subr.bf16.mxu0 0
    %945 = vmatpush1.bf16.msra.mxu0 %v111
    %946 = vmatprep.subr.bf16.mxu0 0
    %947 = vmatpush1.bf16.msra.mxu0 %v112
    %948 = vmatprep.subr.bf16.mxu0 0
    %949 = vmatpush1.bf16.msra.mxu0 %v113
    %950 = vmatprep.subr.bf16.mxu0 0
    %951 = vmatpush1.bf16.msra.mxu0 %v114
    %952 = vmatprep.subr.bf16.mxu0 0
    %953 = vmatpush1.bf16.msra.mxu0 %v115
    %954 = vmatprep.subr.bf16.mxu0 0
    %955 = vmatpush1.bf16.msra.mxu0 %v116
    %956 = vmatprep.subr.bf16.mxu0 0
    %957 = vmatpush1.bf16.msra.mxu0 %v117
    %958 = vmatprep.subr.bf16.mxu0 0
    %959 = vmatpush1.bf16.msra.mxu0 0
    %960 = vmatprep.subr.bf16.mxu0 0
    %961 = vmatpush1.bf16.msra.mxu0 0
    %962 = vmatprep.subr.bf16.mxu0 0
    %963 = vmatpush1.bf16.msra.mxu0 0
    %964 = vmatprep.subr.bf16.mxu0 0
    %965 = vmatpush1.bf16.msra.mxu0 0
    %966 = vmatprep.subr.bf16.mxu0 0
    %967 = vmatpush1.bf16.msra.mxu0 0
    %968 = vmatprep.subr.bf16.mxu0 0
    %969 = vmatpush1.bf16.msra.mxu0 0
    %970 = vmatprep.subr.bf16.mxu0 0
    %971 = vmatpush1.bf16.msra.mxu0 0
    %972 = vmatprep.subr.bf16.mxu0 0
    %973 = vmatpush1.bf16.msra.mxu0 0
    %974 = vmatprep.mubr.bf16.mxu0 0
    %975 = vmatmul.mubr.bf16.gmra.mrb[0].mxu0 %v941
    %v976 = vpop.f32.mrb[0].mxu0
    %v977 = vadd.f32 %v142, %v976
    %v978 = vpop.f32.mrb[0].mxu0
    %v979 = vpop.f32.mrb[0].mxu0
    %v980 = vpop.f32.mrb[0].mxu0
    %981 = vdwg.mxu0
    %v982 = vtanh.pop %v977
    %v983 = vpack.c.bf16 %v982, %v982
    %984 = vmatprep.subr.bf16.mxu0 0
    %985 = vmatpush1.bf16.msra.mxu0 %v134
    %986 = vmatprep.subr.bf16.mxu0 0
    %987 = vmatpush1.bf16.msra.mxu0 %v135
    %988 = vmatprep.subr.bf16.mxu0 0
    %989 = vmatpush1.bf16.msra.mxu0 %v136
    %990 = vmatprep.subr.bf16.mxu0 0
    %991 = vmatpush1.bf16.msra.mxu0 %v137
    %992 = vmatprep.subr.bf16.mxu0 0
    %993 = vmatpush1.bf16.msra.mxu0 %v138
    %994 = vmatprep.subr.bf16.mxu0 0
    %995 = vmatpush1.bf16.msra.mxu0 %v139
    %996 = vmatprep.subr.bf16.mxu0 0
    %997 = vmatpush1.bf16.msra.mxu0 %v140
    %998 = vmatprep.subr.bf16.mxu0 0
    %999 = vmatpush1.bf16.msra.mxu0 %v141
    %1000 = vmatprep.subr.bf16.mxu0 0
    %1001 = vmatpush1.bf16.msra.mxu0 0
    %1002 = vmatprep.subr.bf16.mxu0 0
    %1003 = vmatpush1.bf16.msra.mxu0 0
    %1004 = vmatprep.subr.bf16.mxu0 0
    %1005 = vmatpush1.bf16.msra.mxu0 0
    %1006 = vmatprep.subr.bf16.mxu0 0
    %1007 = vmatpush1.bf16.msra.mxu0 0
    %1008 = vmatprep.subr.bf16.mxu0 0
    %1009 = vmatpush1.bf16.msra.mxu0 0
    %1010 = vmatprep.subr.bf16.mxu0 0
    %1011 = vmatpush1.bf16.msra.mxu0 0
    %1012 = vmatprep.subr.bf16.mxu0 0
    %1013 = vmatpush1.bf16.msra.mxu0 0
    %1014 = vmatprep.subr.bf16.mxu0 0
    %1015 = vmatpush1.bf16.msra.mxu0 0
    %1016 = vmatprep.mubr.bf16.mxu0 0
    %1017 = vmatmul.mubr.bf16.gmra.mrb[0].mxu0 %v983
    %v1018 = vpop.f32.mrb[0].mxu0
    %v1019 = vadd.f32 %v143, %v1018
    %v1020 = vpop.f32.mrb[0].mxu0
    %v1021 = vpop.f32.mrb[0].mxu0
    %v1022 = vpop.f32.mrb[0].mxu0
    %1023 = vdwg.mxu0
    %v1024 = vmul.f32 %v938, %v1019
    %v1025 = vadd.f32 %v849, %v1024
    %v1026 = vpack.c.bf16 %v1025, %v1025
    %1027 = vmatprep.subr.bf16.mxu0 0
    %1028 = vmatpush1.bf16.msra.mxu0 %v110
    %1029 = vmatprep.subr.bf16.mxu0 0
    %1030 = vmatpush1.bf16.msra.mxu0 %v111
    %1031 = vmatprep.subr.bf16.mxu0 0
    %1032 = vmatpush1.bf16.msra.mxu0 %v112
    %1033 = vmatprep.subr.bf16.mxu0 0
    %1034 = vmatpush1.bf16.msra.mxu0 %v113
    %1035 = vmatprep.subr.bf16.mxu0 0
    %1036 = vmatpush1.bf16.msra.mxu0 %v114
    %1037 = vmatprep.subr.bf16.mxu0 0
    %1038 = vmatpush1.bf16.msra.mxu0 %v115
    %1039 = vmatprep.subr.bf16.mxu0 0
    %1040 = vmatpush1.bf16.msra.mxu0 %v116
    %1041 = vmatprep.subr.bf16.mxu0 0
    %1042 = vmatpush1.bf16.msra.mxu0 %v117
    %1043 = vmatprep.subr.bf16.mxu0 0
    %1044 = vmatpush1.bf16.msra.mxu0 0
    %1045 = vmatprep.subr.bf16.mxu0 0
    %1046 = vmatpush1.bf16.msra.mxu0 0
    %1047 = vmatprep.subr.bf16.mxu0 0
    %1048 = vmatpush1.bf16.msra.mxu0 0
    %1049 = vmatprep.subr.bf16.mxu0 0
    %1050 = vmatpush1.bf16.msra.mxu0 0
    %1051 = vmatprep.subr.bf16.mxu0 0
    %1052 = vmatpush1.bf16.msra.mxu0 0
    %1053 = vmatprep.subr.bf16.mxu0 0
    %1054 = vmatpush1.bf16.msra.mxu0 0
    %1055 = vmatprep.subr.bf16.mxu0 0
    %1056 = vmatpush1.bf16.msra.mxu0 0
    %1057 = vmatprep.subr.bf16.mxu0 0
    %1058 = vmatpush1.bf16.msra.mxu0 0
    %1059 = vmatprep.mubr.bf16.mxu0 0
    %1060 = vmatmul.mubr.bf16.gmra.mrb[0].mxu0 %v1026
    %v1061 = vpop.f32.mrb[0].mxu0
    %v1062 = vadd.f32 %v142, %v1061
    %v1063 = vpop.f32.mrb[0].mxu0
    %v1064 = vpop.f32.mrb[0].mxu0
    %v1065 = vpop.f32.mrb[0].mxu0
    %1066 = vdwg.mxu0
    %v1067 = vtanh.pop %v1062
    %v1068 = vpack.c.bf16 %v1067, %v1067
    %1069 = vmatprep.subr.bf16.mxu0 0
    %1070 = vmatpush1.bf16.msra.mxu0 %v134
    %1071 = vmatprep.subr.bf16.mxu0 0
    %1072 = vmatpush1.bf16.msra.mxu0 %v135
    %1073 = vmatprep.subr.bf16.mxu0 0
    %1074 = vmatpush1.bf16.msra.mxu0 %v136
    %1075 = vmatprep.subr.bf16.mxu0 0
    %1076 = vmatpush1.bf16.msra.mxu0 %v137
    %1077 = vmatprep.subr.bf16.mxu0 0
    %1078 = vmatpush1.bf16.msra.mxu0 %v138
    %1079 = vmatprep.subr.bf16.mxu0 0
    %1080 = vmatpush1.bf16.msra.mxu0 %v139
    %1081 = vmatprep.subr.bf16.mxu0 0
    %1082 = vmatpush1.bf16.msra.mxu0 %v140
    %1083 = vmatprep.subr.bf16.mxu0 0
    %1084 = vmatpush1.bf16.msra.mxu0 %v141
    %1085 = vmatprep.subr.bf16.mxu0 0
    %1086 = vmatpush1.bf16.msra.mxu0 0
    %1087 = vmatprep.subr.bf16.mxu0 0
    %1088 = vmatpush1.bf16.msra.mxu0 0
    %1089 = vmatprep.subr.bf16.mxu0 0
    %1090 = vmatpush1.bf16.msra.mxu0 0
    %1091 = vmatprep.subr.bf16.mxu0 0
    %1092 = vmatpush1.bf16.msra.mxu0 0
    %1093 = vmatprep.subr.bf16.mxu0 0
    %1094 = vmatpush1.bf16.msra.mxu0 0
    %1095 = vmatprep.subr.bf16.mxu0 0
    %1096 = vmatpush1.bf16.msra.mxu0 0
    %1097 = vmatprep.subr.bf16.mxu0 0
    %1098 = vmatpush1.bf16.msra.mxu0 0
    %1099 = vmatprep.subr.bf16.mxu0 0
    %1100 = vmatpush1.bf16.msra.mxu0 0
    %1101 = vmatprep.mubr.bf16.mxu0 0
    %1102 = vmatmul.mubr.bf16.gmra.mrb[0].mxu0 %v1068
    %v1103 = vpop.f32.mrb[0].mxu0
    %v1104 = vadd.f32 %v143, %v1103
    %v1105 = vpop.f32.mrb[0].mxu0
    %v1106 = vpop.f32.mrb[0].mxu0
    %v1107 = vpop.f32.mrb[0].mxu0
    %1108 = vdwg.mxu0
    %v1109 = vstv %s852
    %v1110 = vmul.f32 %v1109, %v1104
    %v1111 = vadd.f32 %v849, %v1110
    %v1112 = vpack.c.bf16 %v1111, %v1111
    %1113 = vmatprep.subr.bf16.mxu0 0
    %1114 = vmatpush1.bf16.msra.mxu0 %v110
    %1115 = vmatprep.subr.bf16.mxu0 0
    %1116 = vmatpush1.bf16.msra.mxu0 %v111
    %1117 = vmatprep.subr.bf16.mxu0 0
    %1118 = vmatpush1.bf16.msra.mxu0 %v112
    %1119 = vmatprep.subr.bf16.mxu0 0
    %1120 = vmatpush1.bf16.msra.mxu0 %v113
    %1121 = vmatprep.subr.bf16.mxu0 0
    %1122 = vmatpush1.bf16.msra.mxu0 %v114
    %1123 = vmatprep.subr.bf16.mxu0 0
    %1124 = vmatpush1.bf16.msra.mxu0 %v115
    %1125 = vmatprep.subr.bf16.mxu0 0
    %1126 = vmatpush1.bf16.msra.mxu0 %v116
    %1127 = vmatprep.subr.bf16.mxu0 0
    %1128 = vmatpush1.bf16.msra.mxu0 %v117
    %1129 = vmatprep.subr.bf16.mxu0 0
    %1130 = vmatpush1.bf16.msra.mxu0 0
    %1131 = vmatprep.subr.bf16.mxu0 0
    %1132 = vmatpush1.bf16.msra.mxu0 0
    %1133 = vmatprep.subr.bf16.mxu0 0
    %1134 = vmatpush1.bf16.msra.mxu0 0
    %1135 = vmatprep.subr.bf16.mxu0 0
    %1136 = vmatpush1.bf16.msra.mxu0 0
    %1137 = vmatprep.subr.bf16.mxu0 0
    %1138 = vmatpush1.bf16.msra.mxu0 0
    %1139 = vmatprep.subr.bf16.mxu0 0
    %1140 = vmatpush1.bf16.msra.mxu0 0
    %1141 = vmatprep.subr.bf16.mxu0 0
    %1142 = vmatpush1.bf16.msra.mxu0 0
    %1143 = vmatprep.subr.bf16.mxu0 0
    %1144 = vmatpush1.bf16.msra.mxu0 0
    %1145 = vmatprep.mubr.bf16.mxu0 0
    %1146 = vmatmul.mubr.bf16.gmra.mrb[0].mxu0 %v1112
    %v1147 = vpop.f32.mrb[0].mxu0
    %v1148 = vadd.f32 %v142, %v1147
    %v1149 = vpop.f32.mrb[0].mxu0
    %v1150 = vpop.f32.mrb[0].mxu0
    %v1151 = vpop.f32.mrb[0].mxu0
    %1152 = vdwg.mxu0
    %v1153 = vtanh.pop %v1148
    %v1154 = vpack.c.bf16 %v1153, %v1153
    %1155 = vmatprep.subr.bf16.mxu0 0
    %1156 = vmatpush1.bf16.msra.mxu0 %v134
    %1157 = vmatprep.subr.bf16.mxu0 0
    %1158 = vmatpush1.bf16.msra.mxu0 %v135
    %1159 = vmatprep.subr.bf16.mxu0 0
    %1160 = vmatpush1.bf16.msra.mxu0 %v136
    %1161 = vmatprep.subr.bf16.mxu0 0
    %1162 = vmatpush1.bf16.msra.mxu0 %v137
    %1163 = vmatprep.subr.bf16.mxu0 0
    %1164 = vmatpush1.bf16.msra.mxu0 %v138
    %1165 = vmatprep.subr.bf16.mxu0 0
    %1166 = vmatpush1.bf16.msra.mxu0 %v139
    %1167 = vmatprep.subr.bf16.mxu0 0
    %1168 = vmatpush1.bf16.msra.mxu0 %v140
    %1169 = vmatprep.subr.bf16.mxu0 0
    %1170 = vmatpush1.bf16.msra.mxu0 %v141
    %1171 = vmatprep.subr.bf16.mxu0 0
    %1172 = vmatpush1.bf16.msra.mxu0 0
    %1173 = vmatprep.subr.bf16.mxu0 0
    %1174 = vmatpush1.bf16.msra.mxu0 0
    %1175 = vmatprep.subr.bf16.mxu0 0
    %1176 = vmatpush1.bf16.msra.mxu0 0
    %1177 = vmatprep.subr.bf16.mxu0 0
    %1178 = vmatpush1.bf16.msra.mxu0 0
    %1179 = vmatprep.subr.bf16.mxu0 0
    %1180 = vmatpush1.bf16.msra.mxu0 0
    %1181 = vmatprep.subr.bf16.mxu0 0
    %1182 = vmatpush1.bf16.msra.mxu0 0
    %1183 = vmatprep.subr.bf16.mxu0 0
    %1184 = vmatpush1.bf16.msra.mxu0 0
    %1185 = vmatprep.subr.bf16.mxu0 0
    %1186 = vmatpush1.bf16.msra.mxu0 0
    %1187 = vmatprep.mubr.bf16.mxu0 0
    %1188 = vmatmul.mubr.bf16.gmra.mrb[0].mxu0 %v1154
    %v1189 = vpop.f32.mrb[0].mxu0
    %v1190 = vadd.f32 %v143, %v1189
    %v1191 = vpop.f32.mrb[0].mxu0
    %v1192 = vpop.f32.mrb[0].mxu0
    %v1193 = vpop.f32.mrb[0].mxu0
    %1194 = vdwg.mxu0
    %v1195 = vmul.f32 %v1019, 2.0
    %v1196 = vadd.f32 %v933, %v1195
    %v1197 = vmul.f32 %v1104, 2.0
    %v1198 = vadd.f32 %v1196, %v1197
    %v1199 = vadd.f32 %v1198, %v1190
    %v1200 = vstv %s854
    %v1201 = vmul.f32 %v1200, %v1199
    %v1202 = vadd.f32 %v849, %v1201
    %s1203 = scalar_lea.vmem [#allocation13], 24
    %1204 = vst [vmem:[%s1203] sm:$0xff] %v1202
    %s1205 = sld [smem:[#allocation2 + $0x3]]
    %s1206 = sld [smem:[#allocation7 + $0x3]]
    %s1207 = sld [smem:[#allocation8 + $0x3]]
    %v1208 = vpack.c.bf16 %v1202, %v1202
    %1209 = vmatprep.subr.bf16.mxu0 0
    %1210 = vmatpush1.bf16.msra.mxu0 %v110
    %1211 = vmatprep.subr.bf16.mxu0 0
    %1212 = vmatpush1.bf16.msra.mxu0 %v111
    %1213 = vmatprep.subr.bf16.mxu0 0
    %1214 = vmatpush1.bf16.msra.mxu0 %v112
    %1215 = vmatprep.subr.bf16.mxu0 0
    %1216 = vmatpush1.bf16.msra.mxu0 %v113
    %1217 = vmatprep.subr.bf16.mxu0 0
    %1218 = vmatpush1.bf16.msra.mxu0 %v114
    %1219 = vmatprep.subr.bf16.mxu0 0
    %1220 = vmatpush1.bf16.msra.mxu0 %v115
    %1221 = vmatprep.subr.bf16.mxu0 0
    %1222 = vmatpush1.bf16.msra.mxu0 %v116
    %1223 = vmatprep.subr.bf16.mxu0 0
    %1224 = vmatpush1.bf16.msra.mxu0 %v117
    %1225 = vmatprep.subr.bf16.mxu0 0
    %1226 = vmatpush1.bf16.msra.mxu0 0
    %1227 = vmatprep.subr.bf16.mxu0 0
    %1228 = vmatpush1.bf16.msra.mxu0 0
    %1229 = vmatprep.subr.bf16.mxu0 0
    %1230 = vmatpush1.bf16.msra.mxu0 0
    %1231 = vmatprep.subr.bf16.mxu0 0
    %1232 = vmatpush1.bf16.msra.mxu0 0
    %1233 = vmatprep.subr.bf16.mxu0 0
    %1234 = vmatpush1.bf16.msra.mxu0 0
    %1235 = vmatprep.subr.bf16.mxu0 0
    %1236 = vmatpush1.bf16.msra.mxu0 0
    %1237 = vmatprep.subr.bf16.mxu0 0
    %1238 = vmatpush1.bf16.msra.mxu0 0
    %1239 = vmatprep.subr.bf16.mxu0 0
    %1240 = vmatpush1.bf16.msra.mxu0 0
    %1241 = vmatprep.mubr.bf16.mxu0 0
    %1242 = vmatmul.mubr.bf16.gmra.mrb[0].mxu0 %v1208
    %v1243 = vpop.f32.mrb[0].mxu0
    %v1244 = vadd.f32 %v142, %v1243
    %v1245 = vpop.f32.mrb[0].mxu0
    %v1246 = vpop.f32.mrb[0].mxu0
    %v1247 = vpop.f32.mrb[0].mxu0
    %1248 = vdwg.mxu0
    %v1249 = vtanh.pop %v1244
    %v1250 = vpack.c.bf16 %v1249, %v1249
    %1251 = vmatprep.subr.bf16.mxu0 0
    %1252 = vmatpush1.bf16.msra.mxu0 %v134
    %1253 = vmatprep.subr.bf16.mxu0 0
    %1254 = vmatpush1.bf16.msra.mxu0 %v135
    %1255 = vmatprep.subr.bf16.mxu0 0
    %1256 = vmatpush1.bf16.msra.mxu0 %v136
    %1257 = vmatprep.subr.bf16.mxu0 0
    %1258 = vmatpush1.bf16.msra.mxu0 %v137
    %1259 = vmatprep.subr.bf16.mxu0 0
    %1260 = vmatpush1.bf16.msra.mxu0 %v138
    %1261 = vmatprep.subr.bf16.mxu0 0
    %1262 = vmatpush1.bf16.msra.mxu0 %v139
    %1263 = vmatprep.subr.bf16.mxu0 0
    %1264 = vmatpush1.bf16.msra.mxu0 %v140
    %1265 = vmatprep.subr.bf16.mxu0 0
    %1266 = vmatpush1.bf16.msra.mxu0 %v141
    %1267 = vmatprep.subr.bf16.mxu0 0
    %1268 = vmatpush1.bf16.msra.mxu0 0
    %1269 = vmatprep.subr.bf16.mxu0 0
    %1270 = vmatpush1.bf16.msra.mxu0 0
    %1271 = vmatprep.subr.bf16.mxu0 0
    %1272 = vmatpush1.bf16.msra.mxu0 0
    %1273 = vmatprep.subr.bf16.mxu0 0
    %1274 = vmatpush1.bf16.msra.mxu0 0
    %1275 = vmatprep.subr.bf16.mxu0 0
    %1276 = vmatpush1.bf16.msra.mxu0 0
    %1277 = vmatprep.subr.bf16.mxu0 0
    %1278 = vmatpush1.bf16.msra.mxu0 0
    %1279 = vmatprep.subr.bf16.mxu0 0
    %1280 = vmatpush1.bf16.msra.mxu0 0
    %1281 = vmatprep.subr.bf16.mxu0 0
    %1282 = vmatpush1.bf16.msra.mxu0 0
    %1283 = vmatprep.mubr.bf16.mxu0 0
    %1284 = vmatmul.mubr.bf16.gmra.mrb[0].mxu0 %v1250
    %v1285 = vpop.f32.mrb[0].mxu0
    %v1286 = vadd.f32 %v143, %v1285
    %v1287 = vpop.f32.mrb[0].mxu0
    %v1288 = vpop.f32.mrb[0].mxu0
    %v1289 = vpop.f32.mrb[0].mxu0
    %1290 = vdwg.mxu0
    %v1291 = vstv %s1206
    %v1292 = vmul.f32 %v1291, %v1286
    %v1293 = vadd.f32 %v1202, %v1292
    %v1294 = vpack.c.bf16 %v1293, %v1293
    %1295 = vmatprep.subr.bf16.mxu0 0
    %1296 = vmatpush1.bf16.msra.mxu0 %v110
    %1297 = vmatprep.subr.bf16.mxu0 0
    %1298 = vmatpush1.bf16.msra.mxu0 %v111
    %1299 = vmatprep.subr.bf16.mxu0 0
    %1300 = vmatpush1.bf16.msra.mxu0 %v112
    %1301 = vmatprep.subr.bf16.mxu0 0
    %1302 = vmatpush1.bf16.msra.mxu0 %v113
    %1303 = vmatprep.subr.bf16.mxu0 0
    %1304 = vmatpush1.bf16.msra.mxu0 %v114
    %1305 = vmatprep.subr.bf16.mxu0 0
    %1306 = vmatpush1.bf16.msra.mxu0 %v115
    %1307 = vmatprep.subr.bf16.mxu0 0
    %1308 = vmatpush1.bf16.msra.mxu0 %v116
    %1309 = vmatprep.subr.bf16.mxu0 0
    %1310 = vmatpush1.bf16.msra.mxu0 %v117
    %1311 = vmatprep.subr.bf16.mxu0 0
    %1312 = vmatpush1.bf16.msra.mxu0 0
    %1313 = vmatprep.subr.bf16.mxu0 0
    %1314 = vmatpush1.bf16.msra.mxu0 0
    %1315 = vmatprep.subr.bf16.mxu0 0
    %1316 = vmatpush1.bf16.msra.mxu0 0
    %1317 = vmatprep.subr.bf16.mxu0 0
    %1318 = vmatpush1.bf16.msra.mxu0 0
    %1319 = vmatprep.subr.bf16.mxu0 0
    %1320 = vmatpush1.bf16.msra.mxu0 0
    %1321 = vmatprep.subr.bf16.mxu0 0
    %1322 = vmatpush1.bf16.msra.mxu0 0
    %1323 = vmatprep.subr.bf16.mxu0 0
    %1324 = vmatpush1.bf16.msra.mxu0 0
    %1325 = vmatprep.subr.bf16.mxu0 0
    %1326 = vmatpush1.bf16.msra.mxu0 0
    %1327 = vmatprep.mubr.bf16.mxu0 0
    %1328 = vmatmul.mubr.bf16.gmra.mrb[0].mxu0 %v1294
    %v1329 = vpop.f32.mrb[0].mxu0
    %v1330 = vadd.f32 %v142, %v1329
    %v1331 = vpop.f32.mrb[0].mxu0
    %v1332 = vpop.f32.mrb[0].mxu0
    %v1333 = vpop.f32.mrb[0].mxu0
    %1334 = vdwg.mxu0
    %v1335 = vtanh.pop %v1330
    %v1336 = vpack.c.bf16 %v1335, %v1335
    %1337 = vmatprep.subr.bf16.mxu0 0
    %1338 = vmatpush1.bf16.msra.mxu0 %v134
    %1339 = vmatprep.subr.bf16.mxu0 0
    %1340 = vmatpush1.bf16.msra.mxu0 %v135
    %1341 = vmatprep.subr.bf16.mxu0 0
    %1342 = vmatpush1.bf16.msra.mxu0 %v136
    %1343 = vmatprep.subr.bf16.mxu0 0
    %1344 = vmatpush1.bf16.msra.mxu0 %v137
    %1345 = vmatprep.subr.bf16.mxu0 0
    %1346 = vmatpush1.bf16.msra.mxu0 %v138
    %1347 = vmatprep.subr.bf16.mxu0 0
    %1348 = vmatpush1.bf16.msra.mxu0 %v139
    %1349 = vmatprep.subr.bf16.mxu0 0
    %1350 = vmatpush1.bf16.msra.mxu0 %v140
    %1351 = vmatprep.subr.bf16.mxu0 0
    %1352 = vmatpush1.bf16.msra.mxu0 %v141
    %1353 = vmatprep.subr.bf16.mxu0 0
    %1354 = vmatpush1.bf16.msra.mxu0 0
    %1355 = vmatprep.subr.bf16.mxu0 0
    %1356 = vmatpush1.bf16.msra.mxu0 0
    %1357 = vmatprep.subr.bf16.mxu0 0
    %1358 = vmatpush1.bf16.msra.mxu0 0
    %1359 = vmatprep.subr.bf16.mxu0 0
    %1360 = vmatpush1.bf16.msra.mxu0 0
    %1361 = vmatprep.subr.bf16.mxu0 0
    %1362 = vmatpush1.bf16.msra.mxu0 0
    %1363 = vmatprep.subr.bf16.mxu0 0
    %1364 = vmatpush1.bf16.msra.mxu0 0
    %1365 = vmatprep.subr.bf16.mxu0 0
    %1366 = vmatpush1.bf16.msra.mxu0 0
    %1367 = vmatprep.subr.bf16.mxu0 0
    %1368 = vmatpush1.bf16.msra.mxu0 0
    %1369 = vmatprep.mubr.bf16.mxu0 0
    %1370 = vmatmul.mubr.bf16.gmra.mrb[0].mxu0 %v1336
    %v1371 = vpop.f32.mrb[0].mxu0
    %v1372 = vadd.f32 %v143, %v1371
    %v1373 = vpop.f32.mrb[0].mxu0
    %v1374 = vpop.f32.mrb[0].mxu0
    %v1375 = vpop.f32.mrb[0].mxu0
    %1376 = vdwg.mxu0
    %v1377 = vmul.f32 %v1291, %v1372
    %v1378 = vadd.f32 %v1202, %v1377
    %v1379 = vpack.c.bf16 %v1378, %v1378
    %1380 = vmatprep.subr.bf16.mxu0 0
    %1381 = vmatpush1.bf16.msra.mxu0 %v110
    %1382 = vmatprep.subr.bf16.mxu0 0
    %1383 = vmatpush1.bf16.msra.mxu0 %v111
    %1384 = vmatprep.subr.bf16.mxu0 0
    %1385 = vmatpush1.bf16.msra.mxu0 %v112
    %1386 = vmatprep.subr.bf16.mxu0 0
    %1387 = vmatpush1.bf16.msra.mxu0 %v113
    %1388 = vmatprep.subr.bf16.mxu0 0
    %1389 = vmatpush1.bf16.msra.mxu0 %v114
    %1390 = vmatprep.subr.bf16.mxu0 0
    %1391 = vmatpush1.bf16.msra.mxu0 %v115
    %1392 = vmatprep.subr.bf16.mxu0 0
    %1393 = vmatpush1.bf16.msra.mxu0 %v116
    %1394 = vmatprep.subr.bf16.mxu0 0
    %1395 = vmatpush1.bf16.msra.mxu0 %v117
    %1396 = vmatprep.subr.bf16.mxu0 0
    %1397 = vmatpush1.bf16.msra.mxu0 0
    %1398 = vmatprep.subr.bf16.mxu0 0
    %1399 = vmatpush1.bf16.msra.mxu0 0
    %1400 = vmatprep.subr.bf16.mxu0 0
    %1401 = vmatpush1.bf16.msra.mxu0 0
    %1402 = vmatprep.subr.bf16.mxu0 0
    %1403 = vmatpush1.bf16.msra.mxu0 0
    %1404 = vmatprep.subr.bf16.mxu0 0
    %1405 = vmatpush1.bf16.msra.mxu0 0
    %1406 = vmatprep.subr.bf16.mxu0 0
    %1407 = vmatpush1.bf16.msra.mxu0 0
    %1408 = vmatprep.subr.bf16.mxu0 0
    %1409 = vmatpush1.bf16.msra.mxu0 0
    %1410 = vmatprep.subr.bf16.mxu0 0
    %1411 = vmatpush1.bf16.msra.mxu0 0
    %1412 = vmatprep.mubr.bf16.mxu0 0
    %1413 = vmatmul.mubr.bf16.gmra.mrb[0].mxu0 %v1379
    %v1414 = vpop.f32.mrb[0].mxu0
    %v1415 = vadd.f32 %v142, %v1414
    %v1416 = vpop.f32.mrb[0].mxu0
    %v1417 = vpop.f32.mrb[0].mxu0
    %v1418 = vpop.f32.mrb[0].mxu0
    %1419 = vdwg.mxu0
    %v1420 = vtanh.pop %v1415
    %v1421 = vpack.c.bf16 %v1420, %v1420
    %1422 = vmatprep.subr.bf16.mxu0 0
    %1423 = vmatpush1.bf16.msra.mxu0 %v134
    %1424 = vmatprep.subr.bf16.mxu0 0
    %1425 = vmatpush1.bf16.msra.mxu0 %v135
    %1426 = vmatprep.subr.bf16.mxu0 0
    %1427 = vmatpush1.bf16.msra.mxu0 %v136
    %1428 = vmatprep.subr.bf16.mxu0 0
    %1429 = vmatpush1.bf16.msra.mxu0 %v137
    %1430 = vmatprep.subr.bf16.mxu0 0
    %1431 = vmatpush1.bf16.msra.mxu0 %v138
    %1432 = vmatprep.subr.bf16.mxu0 0
    %1433 = vmatpush1.bf16.msra.mxu0 %v139
    %1434 = vmatprep.subr.bf16.mxu0 0
    %1435 = vmatpush1.bf16.msra.mxu0 %v140
    %1436 = vmatprep.subr.bf16.mxu0 0
    %1437 = vmatpush1.bf16.msra.mxu0 %v141
    %1438 = vmatprep.subr.bf16.mxu0 0
    %1439 = vmatpush1.bf16.msra.mxu0 0
    %1440 = vmatprep.subr.bf16.mxu0 0
    %1441 = vmatpush1.bf16.msra.mxu0 0
    %1442 = vmatprep.subr.bf16.mxu0 0
    %1443 = vmatpush1.bf16.msra.mxu0 0
    %1444 = vmatprep.subr.bf16.mxu0 0
    %1445 = vmatpush1.bf16.msra.mxu0 0
    %1446 = vmatprep.subr.bf16.mxu0 0
    %1447 = vmatpush1.bf16.msra.mxu0 0
    %1448 = vmatprep.subr.bf16.mxu0 0
    %1449 = vmatpush1.bf16.msra.mxu0 0
    %1450 = vmatprep.subr.bf16.mxu0 0
    %1451 = vmatpush1.bf16.msra.mxu0 0
    %1452 = vmatprep.subr.bf16.mxu0 0
    %1453 = vmatpush1.bf16.msra.mxu0 0
    %1454 = vmatprep.mubr.bf16.mxu0 0
    %1455 = vmatmul.mubr.bf16.gmra.mrb[0].mxu0 %v1421
    %v1456 = vpop.f32.mrb[0].mxu0
    %v1457 = vadd.f32 %v143, %v1456
    %v1458 = vpop.f32.mrb[0].mxu0
    %v1459 = vpop.f32.mrb[0].mxu0
    %v1460 = vpop.f32.mrb[0].mxu0
    %1461 = vdwg.mxu0
    %v1462 = vstv %s1205
    %v1463 = vmul.f32 %v1462, %v1457
    %v1464 = vadd.f32 %v1202, %v1463
    %v1465 = vpack.c.bf16 %v1464, %v1464
    %1466 = vmatprep.subr.bf16.mxu0 0
    %1467 = vmatpush1.bf16.msra.mxu0 %v110
    %1468 = vmatprep.subr.bf16.mxu0 0
    %1469 = vmatpush1.bf16.msra.mxu0 %v111
    %1470 = vmatprep.subr.bf16.mxu0 0
    %1471 = vmatpush1.bf16.msra.mxu0 %v112
    %1472 = vmatprep.subr.bf16.mxu0 0
    %1473 = vmatpush1.bf16.msra.mxu0 %v113
    %1474 = vmatprep.subr.bf16.mxu0 0
    %1475 = vmatpush1.bf16.msra.mxu0 %v114
    %1476 = vmatprep.subr.bf16.mxu0 0
    %1477 = vmatpush1.bf16.msra.mxu0 %v115
    %1478 = vmatprep.subr.bf16.mxu0 0
    %1479 = vmatpush1.bf16.msra.mxu0 %v116
    %1480 = vmatprep.subr.bf16.mxu0 0
    %1481 = vmatpush1.bf16.msra.mxu0 %v117
    %1482 = vmatprep.subr.bf16.mxu0 0
    %1483 = vmatpush1.bf16.msra.mxu0 0
    %1484 = vmatprep.subr.bf16.mxu0 0
    %1485 = vmatpush1.bf16.msra.mxu0 0
    %1486 = vmatprep.subr.bf16.mxu0 0
    %1487 = vmatpush1.bf16.msra.mxu0 0
    %1488 = vmatprep.subr.bf16.mxu0 0
    %1489 = vmatpush1.bf16.msra.mxu0 0
    %1490 = vmatprep.subr.bf16.mxu0 0
    %1491 = vmatpush1.bf16.msra.mxu0 0
    %1492 = vmatprep.subr.bf16.mxu0 0
    %1493 = vmatpush1.bf16.msra.mxu0 0
    %1494 = vmatprep.subr.bf16.mxu0 0
    %1495 = vmatpush1.bf16.msra.mxu0 0
    %1496 = vmatprep.subr.bf16.mxu0 0
    %1497 = vmatpush1.bf16.msra.mxu0 0
    %1498 = vmatprep.mubr.bf16.mxu0 0
    %1499 = vmatmul.mubr.bf16.gmra.mrb[0].mxu0 %v1465
    %v1500 = vpop.f32.mrb[0].mxu0
    %v1501 = vadd.f32 %v142, %v1500
    %v1502 = vpop.f32.mrb[0].mxu0
    %v1503 = vpop.f32.mrb[0].mxu0
    %v1504 = vpop.f32.mrb[0].mxu0
    %1505 = vdwg.mxu0
    %v1506 = vtanh.pop %v1501
    %v1507 = vpack.c.bf16 %v1506, %v1506
    %1508 = vmatprep.subr.bf16.mxu0 0
    %1509 = vmatpush1.bf16.msra.mxu0 %v134
    %1510 = vmatprep.subr.bf16.mxu0 0
    %1511 = vmatpush1.bf16.msra.mxu0 %v135
    %1512 = vmatprep.subr.bf16.mxu0 0
    %1513 = vmatpush1.bf16.msra.mxu0 %v136
    %1514 = vmatprep.subr.bf16.mxu0 0
    %1515 = vmatpush1.bf16.msra.mxu0 %v137
    %1516 = vmatprep.subr.bf16.mxu0 0
    %1517 = vmatpush1.bf16.msra.mxu0 %v138
    %1518 = vmatprep.subr.bf16.mxu0 0
    %1519 = vmatpush1.bf16.msra.mxu0 %v139
    %1520 = vmatprep.subr.bf16.mxu0 0
    %1521 = vmatpush1.bf16.msra.mxu0 %v140
    %1522 = vmatprep.subr.bf16.mxu0 0
    %1523 = vmatpush1.bf16.msra.mxu0 %v141
    %1524 = vmatprep.subr.bf16.mxu0 0
    %1525 = vmatpush1.bf16.msra.mxu0 0
    %1526 = vmatprep.subr.bf16.mxu0 0
    %1527 = vmatpush1.bf16.msra.mxu0 0
    %1528 = vmatprep.subr.bf16.mxu0 0
    %1529 = vmatpush1.bf16.msra.mxu0 0
    %1530 = vmatprep.subr.bf16.mxu0 0
    %1531 = vmatpush1.bf16.msra.mxu0 0
    %1532 = vmatprep.subr.bf16.mxu0 0
    %1533 = vmatpush1.bf16.msra.mxu0 0
    %1534 = vmatprep.subr.bf16.mxu0 0
    %1535 = vmatpush1.bf16.msra.mxu0 0
    %1536 = vmatprep.subr.bf16.mxu0 0
    %1537 = vmatpush1.bf16.msra.mxu0 0
    %1538 = vmatprep.subr.bf16.mxu0 0
    %1539 = vmatpush1.bf16.msra.mxu0 0
    %1540 = vmatprep.mubr.bf16.mxu0 0
    %1541 = vmatmul.mubr.bf16.gmra.mrb[0].mxu0 %v1507
    %v1542 = vpop.f32.mrb[0].mxu0
    %v1543 = vadd.f32 %v143, %v1542
    %v1544 = vpop.f32.mrb[0].mxu0
    %v1545 = vpop.f32.mrb[0].mxu0
    %v1546 = vpop.f32.mrb[0].mxu0
    %1547 = vdwg.mxu0
    %v1548 = vmul.f32 %v1372, 2.0
    %v1549 = vadd.f32 %v1286, %v1548
    %v1550 = vmul.f32 %v1457, 2.0
    %v1551 = vadd.f32 %v1549, %v1550
    %v1552 = vadd.f32 %v1551, %v1543
    %v1553 = vstv %s1207
    %v1554 = vmul.f32 %v1553, %v1552
    %v1555 = vadd.f32 %v1202, %v1554
    %s1556 = scalar_lea.vmem [#allocation13], 32
    %1557 = vst [vmem:[%s1556] sm:$0xff] %v1555
    %s1558 = sld [smem:[#allocation2 + $0x4]]
    %s1559 = sld [smem:[#allocation7 + $0x4]]
    %s1560 = sld [smem:[#allocation8 + $0x4]]
    %v1561 = vpack.c.bf16 %v1555, %v1555
    %1562 = vmatprep.subr.bf16.mxu0 0
    %1563 = vmatpush1.bf16.msra.mxu0 %v110
    %1564 = vmatprep.subr.bf16.mxu0 0
    %1565 = vmatpush1.bf16.msra.mxu0 %v111
    %1566 = vmatprep.subr.bf16.mxu0 0
    %1567 = vmatpush1.bf16.msra.mxu0 %v112
    %1568 = vmatprep.subr.bf16.mxu0 0
    %1569 = vmatpush1.bf16.msra.mxu0 %v113
    %1570 = vmatprep.subr.bf16.mxu0 0
    %1571 = vmatpush1.bf16.msra.mxu0 %v114
    %1572 = vmatprep.subr.bf16.mxu0 0
    %1573 = vmatpush1.bf16.msra.mxu0 %v115
    %1574 = vmatprep.subr.bf16.mxu0 0
    %1575 = vmatpush1.bf16.msra.mxu0 %v116
    %1576 = vmatprep.subr.bf16.mxu0 0
    %1577 = vmatpush1.bf16.msra.mxu0 %v117
    %1578 = vmatprep.subr.bf16.mxu0 0
    %1579 = vmatpush1.bf16.msra.mxu0 0
    %1580 = vmatprep.subr.bf16.mxu0 0
    %1581 = vmatpush1.bf16.msra.mxu0 0
    %1582 = vmatprep.subr.bf16.mxu0 0
    %1583 = vmatpush1.bf16.msra.mxu0 0
    %1584 = vmatprep.subr.bf16.mxu0 0
    %1585 = vmatpush1.bf16.msra.mxu0 0
    %1586 = vmatprep.subr.bf16.mxu0 0
    %1587 = vmatpush1.bf16.msra.mxu0 0
    %1588 = vmatprep.subr.bf16.mxu0 0
    %1589 = vmatpush1.bf16.msra.mxu0 0
    %1590 = vmatprep.subr.bf16.mxu0 0
    %1591 = vmatpush1.bf16.msra.mxu0 0
    %1592 = vmatprep.subr.bf16.mxu0 0
    %1593 = vmatpush1.bf16.msra.mxu0 0
    %1594 = vmatprep.mubr.bf16.mxu0 0
    %1595 = vmatmul.mubr.bf16.gmra.mrb[0].mxu0 %v1561
    %v1596 = vpop.f32.mrb[0].mxu0
    %v1597 = vadd.f32 %v142, %v1596
    %v1598 = vpop.f32.mrb[0].mxu0
    %v1599 = vpop.f32.mrb[0].mxu0
    %v1600 = vpop.f32.mrb[0].mxu0
    %1601 = vdwg.mxu0
    %v1602 = vtanh.pop %v1597
    %v1603 = vpack.c.bf16 %v1602, %v1602
    %1604 = vmatprep.subr.bf16.mxu0 0
    %1605 = vmatpush1.bf16.msra.mxu0 %v134
    %1606 = vmatprep.subr.bf16.mxu0 0
    %1607 = vmatpush1.bf16.msra.mxu0 %v135
    %1608 = vmatprep.subr.bf16.mxu0 0
    %1609 = vmatpush1.bf16.msra.mxu0 %v136
    %1610 = vmatprep.subr.bf16.mxu0 0
    %1611 = vmatpush1.bf16.msra.mxu0 %v137
    %1612 = vmatprep.subr.bf16.mxu0 0
    %1613 = vmatpush1.bf16.msra.mxu0 %v138
    %1614 = vmatprep.subr.bf16.mxu0 0
    %1615 = vmatpush1.bf16.msra.mxu0 %v139
    %1616 = vmatprep.subr.bf16.mxu0 0
    %1617 = vmatpush1.bf16.msra.mxu0 %v140
    %1618 = vmatprep.subr.bf16.mxu0 0
    %1619 = vmatpush1.bf16.msra.mxu0 %v141
    %1620 = vmatprep.subr.bf16.mxu0 0
    %1621 = vmatpush1.bf16.msra.mxu0 0
    %1622 = vmatprep.subr.bf16.mxu0 0
    %1623 = vmatpush1.bf16.msra.mxu0 0
    %1624 = vmatprep.subr.bf16.mxu0 0
    %1625 = vmatpush1.bf16.msra.mxu0 0
    %1626 = vmatprep.subr.bf16.mxu0 0
    %1627 = vmatpush1.bf16.msra.mxu0 0
    %1628 = vmatprep.subr.bf16.mxu0 0
    %1629 = vmatpush1.bf16.msra.mxu0 0
    %1630 = vmatprep.subr.bf16.mxu0 0
    %1631 = vmatpush1.bf16.msra.mxu0 0
    %1632 = vmatprep.subr.bf16.mxu0 0
    %1633 = vmatpush1.bf16.msra.mxu0 0
    %1634 = vmatprep.subr.bf16.mxu0 0
    %1635 = vmatpush1.bf16.msra.mxu0 0
    %1636 = vmatprep.mubr.bf16.mxu0 0
    %1637 = vmatmul.mubr.bf16.gmra.mrb[0].mxu0 %v1603
    %v1638 = vpop.f32.mrb[0].mxu0
    %v1639 = vadd.f32 %v143, %v1638
    %v1640 = vpop.f32.mrb[0].mxu0
    %v1641 = vpop.f32.mrb[0].mxu0
    %v1642 = vpop.f32.mrb[0].mxu0
    %1643 = vdwg.mxu0
    %v1644 = vstv %s1559
    %v1645 = vmul.f32 %v1644, %v1639
    %v1646 = vadd.f32 %v1555, %v1645
    %v1647 = vpack.c.bf16 %v1646, %v1646
    %1648 = vmatprep.subr.bf16.mxu0 0
    %1649 = vmatpush1.bf16.msra.mxu0 %v110
    %1650 = vmatprep.subr.bf16.mxu0 0
    %1651 = vmatpush1.bf16.msra.mxu0 %v111
    %1652 = vmatprep.subr.bf16.mxu0 0
    %1653 = vmatpush1.bf16.msra.mxu0 %v112
    %1654 = vmatprep.subr.bf16.mxu0 0
    %1655 = vmatpush1.bf16.msra.mxu0 %v113
    %1656 = vmatprep.subr.bf16.mxu0 0
    %1657 = vmatpush1.bf16.msra.mxu0 %v114
    %1658 = vmatprep.subr.bf16.mxu0 0
    %1659 = vmatpush1.bf16.msra.mxu0 %v115
    %1660 = vmatprep.subr.bf16.mxu0 0
    %1661 = vmatpush1.bf16.msra.mxu0 %v116
    %1662 = vmatprep.subr.bf16.mxu0 0
    %1663 = vmatpush1.bf16.msra.mxu0 %v117
    %1664 = vmatprep.subr.bf16.mxu0 0
    %1665 = vmatpush1.bf16.msra.mxu0 0
    %1666 = vmatprep.subr.bf16.mxu0 0
    %1667 = vmatpush1.bf16.msra.mxu0 0
    %1668 = vmatprep.subr.bf16.mxu0 0
    %1669 = vmatpush1.bf16.msra.mxu0 0
    %1670 = vmatprep.subr.bf16.mxu0 0
    %1671 = vmatpush1.bf16.msra.mxu0 0
    %1672 = vmatprep.subr.bf16.mxu0 0
    %1673 = vmatpush1.bf16.msra.mxu0 0
    %1674 = vmatprep.subr.bf16.mxu0 0
    %1675 = vmatpush1.bf16.msra.mxu0 0
    %1676 = vmatprep.subr.bf16.mxu0 0
    %1677 = vmatpush1.bf16.msra.mxu0 0
    %1678 = vmatprep.subr.bf16.mxu0 0
    %1679 = vmatpush1.bf16.msra.mxu0 0
    %1680 = vmatprep.mubr.bf16.mxu0 0
    %1681 = vmatmul.mubr.bf16.gmra.mrb[0].mxu0 %v1647
    %v1682 = vpop.f32.mrb[0].mxu0
    %v1683 = vadd.f32 %v142, %v1682
    %v1684 = vpop.f32.mrb[0].mxu0
    %v1685 = vpop.f32.mrb[0].mxu0
    %v1686 = vpop.f32.mrb[0].mxu0
    %1687 = vdwg.mxu0
    %v1688 = vtanh.pop %v1683
    %v1689 = vpack.c.bf16 %v1688, %v1688
    %1690 = vmatprep.subr.bf16.mxu0 0
    %1691 = vmatpush1.bf16.msra.mxu0 %v134
    %1692 = vmatprep.subr.bf16.mxu0 0
    %1693 = vmatpush1.bf16.msra.mxu0 %v135
    %1694 = vmatprep.subr.bf16.mxu0 0
    %1695 = vmatpush1.bf16.msra.mxu0 %v136
    %1696 = vmatprep.subr.bf16.mxu0 0
    %1697 = vmatpush1.bf16.msra.mxu0 %v137
    %1698 = vmatprep.subr.bf16.mxu0 0
    %1699 = vmatpush1.bf16.msra.mxu0 %v138
    %1700 = vmatprep.subr.bf16.mxu0 0
    %1701 = vmatpush1.bf16.msra.mxu0 %v139
    %1702 = vmatprep.subr.bf16.mxu0 0
    %1703 = vmatpush1.bf16.msra.mxu0 %v140
    %1704 = vmatprep.subr.bf16.mxu0 0
    %1705 = vmatpush1.bf16.msra.mxu0 %v141
    %1706 = vmatprep.subr.bf16.mxu0 0
    %1707 = vmatpush1.bf16.msra.mxu0 0
    %1708 = vmatprep.subr.bf16.mxu0 0
    %1709 = vmatpush1.bf16.msra.mxu0 0
    %1710 = vmatprep.subr.bf16.mxu0 0
    %1711 = vmatpush1.bf16.msra.mxu0 0
    %1712 = vmatprep.subr.bf16.mxu0 0
    %1713 = vmatpush1.bf16.msra.mxu0 0
    %1714 = vmatprep.subr.bf16.mxu0 0
    %1715 = vmatpush1.bf16.msra.mxu0 0
    %1716 = vmatprep.subr.bf16.mxu0 0
    %1717 = vmatpush1.bf16.msra.mxu0 0
    %1718 = vmatprep.subr.bf16.mxu0 0
    %1719 = vmatpush1.bf16.msra.mxu0 0
    %1720 = vmatprep.subr.bf16.mxu0 0
    %1721 = vmatpush1.bf16.msra.mxu0 0
    %1722 = vmatprep.mubr.bf16.mxu0 0
    %1723 = vmatmul.mubr.bf16.gmra.mrb[0].mxu0 %v1689
    %v1724 = vpop.f32.mrb[0].mxu0
    %v1725 = vadd.f32 %v143, %v1724
    %v1726 = vpop.f32.mrb[0].mxu0
    %v1727 = vpop.f32.mrb[0].mxu0
    %v1728 = vpop.f32.mrb[0].mxu0
    %1729 = vdwg.mxu0
    %v1730 = vmul.f32 %v1644, %v1725
    %v1731 = vadd.f32 %v1555, %v1730
    %v1732 = vpack.c.bf16 %v1731, %v1731
    %1733 = vmatprep.subr.bf16.mxu0 0
    %1734 = vmatpush1.bf16.msra.mxu0 %v110
    %1735 = vmatprep.subr.bf16.mxu0 0
    %1736 = vmatpush1.bf16.msra.mxu0 %v111
    %1737 = vmatprep.subr.bf16.mxu0 0
    %1738 = vmatpush1.bf16.msra.mxu0 %v112
    %1739 = vmatprep.subr.bf16.mxu0 0
    %1740 = vmatpush1.bf16.msra.mxu0 %v113
    %1741 = vmatprep.subr.bf16.mxu0 0
    %1742 = vmatpush1.bf16.msra.mxu0 %v114
    %1743 = vmatprep.subr.bf16.mxu0 0
    %1744 = vmatpush1.bf16.msra.mxu0 %v115
    %1745 = vmatprep.subr.bf16.mxu0 0
    %1746 = vmatpush1.bf16.msra.mxu0 %v116
    %1747 = vmatprep.subr.bf16.mxu0 0
    %1748 = vmatpush1.bf16.msra.mxu0 %v117
    %1749 = vmatprep.subr.bf16.mxu0 0
    %1750 = vmatpush1.bf16.msra.mxu0 0
    %1751 = vmatprep.subr.bf16.mxu0 0
    %1752 = vmatpush1.bf16.msra.mxu0 0
    %1753 = vmatprep.subr.bf16.mxu0 0
    %1754 = vmatpush1.bf16.msra.mxu0 0
    %1755 = vmatprep.subr.bf16.mxu0 0
    %1756 = vmatpush1.bf16.msra.mxu0 0
    %1757 = vmatprep.subr.bf16.mxu0 0
    %1758 = vmatpush1.bf16.msra.mxu0 0
    %1759 = vmatprep.subr.bf16.mxu0 0
    %1760 = vmatpush1.bf16.msra.mxu0 0
    %1761 = vmatprep.subr.bf16.mxu0 0
    %1762 = vmatpush1.bf16.msra.mxu0 0
    %1763 = vmatprep.subr.bf16.mxu0 0
    %1764 = vmatpush1.bf16.msra.mxu0 0
    %1765 = vmatprep.mubr.bf16.mxu0 0
    %1766 = vmatmul.mubr.bf16.gmra.mrb[0].mxu0 %v1732
    %v1767 = vpop.f32.mrb[0].mxu0
    %v1768 = vadd.f32 %v142, %v1767
    %v1769 = vpop.f32.mrb[0].mxu0
    %v1770 = vpop.f32.mrb[0].mxu0
    %v1771 = vpop.f32.mrb[0].mxu0
    %1772 = vdwg.mxu0
    %v1773 = vtanh.pop %v1768
    %v1774 = vpack.c.bf16 %v1773, %v1773
    %1775 = vmatprep.subr.bf16.mxu0 0
    %1776 = vmatpush1.bf16.msra.mxu0 %v134
    %1777 = vmatprep.subr.bf16.mxu0 0
    %1778 = vmatpush1.bf16.msra.mxu0 %v135
    %1779 = vmatprep.subr.bf16.mxu0 0
    %1780 = vmatpush1.bf16.msra.mxu0 %v136
    %1781 = vmatprep.subr.bf16.mxu0 0
    %1782 = vmatpush1.bf16.msra.mxu0 %v137
    %1783 = vmatprep.subr.bf16.mxu0 0
    %1784 = vmatpush1.bf16.msra.mxu0 %v138
    %1785 = vmatprep.subr.bf16.mxu0 0
    %1786 = vmatpush1.bf16.msra.mxu0 %v139
    %1787 = vmatprep.subr.bf16.mxu0 0
    %1788 = vmatpush1.bf16.msra.mxu0 %v140
    %1789 = vmatprep.subr.bf16.mxu0 0
    %1790 = vmatpush1.bf16.msra.mxu0 %v141
    %1791 = vmatprep.subr.bf16.mxu0 0
    %1792 = vmatpush1.bf16.msra.mxu0 0
    %1793 = vmatprep.subr.bf16.mxu0 0
    %1794 = vmatpush1.bf16.msra.mxu0 0
    %1795 = vmatprep.subr.bf16.mxu0 0
    %1796 = vmatpush1.bf16.msra.mxu0 0
    %1797 = vmatprep.subr.bf16.mxu0 0
    %1798 = vmatpush1.bf16.msra.mxu0 0
    %1799 = vmatprep.subr.bf16.mxu0 0
    %1800 = vmatpush1.bf16.msra.mxu0 0
    %1801 = vmatprep.subr.bf16.mxu0 0
    %1802 = vmatpush1.bf16.msra.mxu0 0
    %1803 = vmatprep.subr.bf16.mxu0 0
    %1804 = vmatpush1.bf16.msra.mxu0 0
    %1805 = vmatprep.subr.bf16.mxu0 0
    %1806 = vmatpush1.bf16.msra.mxu0 0
    %1807 = vmatprep.mubr.bf16.mxu0 0
    %1808 = vmatmul.mubr.bf16.gmra.mrb[0].mxu0 %v1774
    %v1809 = vpop.f32.mrb[0].mxu0
    %v1810 = vadd.f32 %v143, %v1809
    %v1811 = vpop.f32.mrb[0].mxu0
    %v1812 = vpop.f32.mrb[0].mxu0
    %v1813 = vpop.f32.mrb[0].mxu0
    %1814 = vdwg.mxu0
    %v1815 = vstv %s1558
    %v1816 = vmul.f32 %v1815, %v1810
    %v1817 = vadd.f32 %v1555, %v1816
    %v1818 = vpack.c.bf16 %v1817, %v1817
    %1819 = vmatprep.subr.bf16.mxu0 0
    %1820 = vmatpush1.bf16.msra.mxu0 %v110
    %1821 = vmatprep.subr.bf16.mxu0 0
    %1822 = vmatpush1.bf16.msra.mxu0 %v111
    %1823 = vmatprep.subr.bf16.mxu0 0
    %1824 = vmatpush1.bf16.msra.mxu0 %v112
    %1825 = vmatprep.subr.bf16.mxu0 0
    %1826 = vmatpush1.bf16.msra.mxu0 %v113
    %1827 = vmatprep.subr.bf16.mxu0 0
    %1828 = vmatpush1.bf16.msra.mxu0 %v114
    %1829 = vmatprep.subr.bf16.mxu0 0
    %1830 = vmatpush1.bf16.msra.mxu0 %v115
    %1831 = vmatprep.subr.bf16.mxu0 0
    %1832 = vmatpush1.bf16.msra.mxu0 %v116
    %1833 = vmatprep.subr.bf16.mxu0 0
    %1834 = vmatpush1.bf16.msra.mxu0 %v117
    %1835 = vmatprep.subr.bf16.mxu0 0
    %1836 = vmatpush1.bf16.msra.mxu0 0
    %1837 = vmatprep.subr.bf16.mxu0 0
    %1838 = vmatpush1.bf16.msra.mxu0 0
    %1839 = vmatprep.subr.bf16.mxu0 0
    %1840 = vmatpush1.bf16.msra.mxu0 0
    %1841 = vmatprep.subr.bf16.mxu0 0
    %1842 = vmatpush1.bf16.msra.mxu0 0
    %1843 = vmatprep.subr.bf16.mxu0 0
    %1844 = vmatpush1.bf16.msra.mxu0 0
    %1845 = vmatprep.subr.bf16.mxu0 0
    %1846 = vmatpush1.bf16.msra.mxu0 0
    %1847 = vmatprep.subr.bf16.mxu0 0
    %1848 = vmatpush1.bf16.msra.mxu0 0
    %1849 = vmatprep.subr.bf16.mxu0 0
    %1850 = vmatpush1.bf16.msra.mxu0 0
    %1851 = vmatprep.mubr.bf16.mxu0 0
    %1852 = vmatmul.mubr.bf16.gmra.mrb[0].mxu0 %v1818
    %v1853 = vpop.f32.mrb[0].mxu0
    %v1854 = vadd.f32 %v142, %v1853
    %v1855 = vpop.f32.mrb[0].mxu0
    %v1856 = vpop.f32.mrb[0].mxu0
    %v1857 = vpop.f32.mrb[0].mxu0
    %1858 = vdwg.mxu0
    %v1859 = vtanh.pop %v1854
    %v1860 = vpack.c.bf16 %v1859, %v1859
    %1861 = vmatprep.subr.bf16.mxu0 0
    %1862 = vmatpush1.bf16.msra.mxu0 %v134
    %1863 = vmatprep.subr.bf16.mxu0 0
    %1864 = vmatpush1.bf16.msra.mxu0 %v135
    %1865 = vmatprep.subr.bf16.mxu0 0
    %1866 = vmatpush1.bf16.msra.mxu0 %v136
    %1867 = vmatprep.subr.bf16.mxu0 0
    %1868 = vmatpush1.bf16.msra.mxu0 %v137
    %1869 = vmatprep.subr.bf16.mxu0 0
    %1870 = vmatpush1.bf16.msra.mxu0 %v138
    %1871 = vmatprep.subr.bf16.mxu0 0
    %1872 = vmatpush1.bf16.msra.mxu0 %v139
    %1873 = vmatprep.subr.bf16.mxu0 0
    %1874 = vmatpush1.bf16.msra.mxu0 %v140
    %1875 = vmatprep.subr.bf16.mxu0 0
    %1876 = vmatpush1.bf16.msra.mxu0 %v141
    %1877 = vmatprep.subr.bf16.mxu0 0
    %1878 = vmatpush1.bf16.msra.mxu0 0
    %1879 = vmatprep.subr.bf16.mxu0 0
    %1880 = vmatpush1.bf16.msra.mxu0 0
    %1881 = vmatprep.subr.bf16.mxu0 0
    %1882 = vmatpush1.bf16.msra.mxu0 0
    %1883 = vmatprep.subr.bf16.mxu0 0
    %1884 = vmatpush1.bf16.msra.mxu0 0
    %1885 = vmatprep.subr.bf16.mxu0 0
    %1886 = vmatpush1.bf16.msra.mxu0 0
    %1887 = vmatprep.subr.bf16.mxu0 0
    %1888 = vmatpush1.bf16.msra.mxu0 0
    %1889 = vmatprep.subr.bf16.mxu0 0
    %1890 = vmatpush1.bf16.msra.mxu0 0
    %1891 = vmatprep.subr.bf16.mxu0 0
    %1892 = vmatpush1.bf16.msra.mxu0 0
    %1893 = vmatprep.mubr.bf16.mxu0 0
    %1894 = vmatmul.mubr.bf16.gmra.mrb[0].mxu0 %v1860
    %v1895 = vpop.f32.mrb[0].mxu0
    %v1896 = vadd.f32 %v143, %v1895
    %v1897 = vpop.f32.mrb[0].mxu0
    %v1898 = vpop.f32.mrb[0].mxu0
    %v1899 = vpop.f32.mrb[0].mxu0
    %1900 = vdwg.mxu0
    %v1901 = vmul.f32 %v1725, 2.0
    %v1902 = vadd.f32 %v1639, %v1901
    %v1903 = vmul.f32 %v1810, 2.0
    %v1904 = vadd.f32 %v1902, %v1903
    %v1905 = vadd.f32 %v1904, %v1896
    %v1906 = vstv %s1560
    %v1907 = vmul.f32 %v1906, %v1905
    %v1908 = vadd.f32 %v1555, %v1907
    %s1909 = scalar_lea.vmem [#allocation13], 40
    %1910 = vst [vmem:[%s1909] sm:$0xff] %v1908
    %s1911 = sld [smem:[#allocation2 + $0x5]]
    %s1912 = sld [smem:[#allocation7 + $0x5]]
    %s1913 = sld [smem:[#allocation8 + $0x5]]
    %v1914 = vpack.c.bf16 %v1908, %v1908
    %1915 = vmatprep.subr.bf16.mxu0 0
    %1916 = vmatpush1.bf16.msra.mxu0 %v110
    %1917 = vmatprep.subr.bf16.mxu0 0
    %1918 = vmatpush1.bf16.msra.mxu0 %v111
    %1919 = vmatprep.subr.bf16.mxu0 0
    %1920 = vmatpush1.bf16.msra.mxu0 %v112
    %1921 = vmatprep.subr.bf16.mxu0 0
    %1922 = vmatpush1.bf16.msra.mxu0 %v113
    %1923 = vmatprep.subr.bf16.mxu0 0
    %1924 = vmatpush1.bf16.msra.mxu0 %v114
    %1925 = vmatprep.subr.bf16.mxu0 0
    %1926 = vmatpush1.bf16.msra.mxu0 %v115
    %1927 = vmatprep.subr.bf16.mxu0 0
    %1928 = vmatpush1.bf16.msra.mxu0 %v116
    %1929 = vmatprep.subr.bf16.mxu0 0
    %1930 = vmatpush1.bf16.msra.mxu0 %v117
    %1931 = vmatprep.subr.bf16.mxu0 0
    %1932 = vmatpush1.bf16.msra.mxu0 0
    %1933 = vmatprep.subr.bf16.mxu0 0
    %1934 = vmatpush1.bf16.msra.mxu0 0
    %1935 = vmatprep.subr.bf16.mxu0 0
    %1936 = vmatpush1.bf16.msra.mxu0 0
    %1937 = vmatprep.subr.bf16.mxu0 0
    %1938 = vmatpush1.bf16.msra.mxu0 0
    %1939 = vmatprep.subr.bf16.mxu0 0
    %1940 = vmatpush1.bf16.msra.mxu0 0
    %1941 = vmatprep.subr.bf16.mxu0 0
    %1942 = vmatpush1.bf16.msra.mxu0 0
    %1943 = vmatprep.subr.bf16.mxu0 0
    %1944 = vmatpush1.bf16.msra.mxu0 0
    %1945 = vmatprep.subr.bf16.mxu0 0
    %1946 = vmatpush1.bf16.msra.mxu0 0
    %1947 = vmatprep.mubr.bf16.mxu0 0
    %1948 = vmatmul.mubr.bf16.gmra.mrb[0].mxu0 %v1914
    %v1949 = vpop.f32.mrb[0].mxu0
    %v1950 = vadd.f32 %v142, %v1949
    %v1951 = vpop.f32.mrb[0].mxu0
    %v1952 = vpop.f32.mrb[0].mxu0
    %v1953 = vpop.f32.mrb[0].mxu0
    %1954 = vdwg.mxu0
    %v1955 = vtanh.pop %v1950
    %v1956 = vpack.c.bf16 %v1955, %v1955
    %1957 = vmatprep.subr.bf16.mxu0 0
    %1958 = vmatpush1.bf16.msra.mxu0 %v134
    %1959 = vmatprep.subr.bf16.mxu0 0
    %1960 = vmatpush1.bf16.msra.mxu0 %v135
    %1961 = vmatprep.subr.bf16.mxu0 0
    %1962 = vmatpush1.bf16.msra.mxu0 %v136
    %1963 = vmatprep.subr.bf16.mxu0 0
    %1964 = vmatpush1.bf16.msra.mxu0 %v137
    %1965 = vmatprep.subr.bf16.mxu0 0
    %1966 = vmatpush1.bf16.msra.mxu0 %v138
    %1967 = vmatprep.subr.bf16.mxu0 0
    %1968 = vmatpush1.bf16.msra.mxu0 %v139
    %1969 = vmatprep.subr.bf16.mxu0 0
    %1970 = vmatpush1.bf16.msra.mxu0 %v140
    %1971 = vmatprep.subr.bf16.mxu0 0
    %1972 = vmatpush1.bf16.msra.mxu0 %v141
    %1973 = vmatprep.subr.bf16.mxu0 0
    %1974 = vmatpush1.bf16.msra.mxu0 0
    %1975 = vmatprep.subr.bf16.mxu0 0
    %1976 = vmatpush1.bf16.msra.mxu0 0
    %1977 = vmatprep.subr.bf16.mxu0 0
    %1978 = vmatpush1.bf16.msra.mxu0 0
    %1979 = vmatprep.subr.bf16.mxu0 0
    %1980 = vmatpush1.bf16.msra.mxu0 0
    %1981 = vmatprep.subr.bf16.mxu0 0
    %1982 = vmatpush1.bf16.msra.mxu0 0
    %1983 = vmatprep.subr.bf16.mxu0 0
    %1984 = vmatpush1.bf16.msra.mxu0 0
    %1985 = vmatprep.subr.bf16.mxu0 0
    %1986 = vmatpush1.bf16.msra.mxu0 0
    %1987 = vmatprep.subr.bf16.mxu0 0
    %1988 = vmatpush1.bf16.msra.mxu0 0
    %1989 = vmatprep.mubr.bf16.mxu0 0
    %1990 = vmatmul.mubr.bf16.gmra.mrb[0].mxu0 %v1956
    %v1991 = vpop.f32.mrb[0].mxu0
    %v1992 = vadd.f32 %v143, %v1991
    %v1993 = vpop.f32.mrb[0].mxu0
    %v1994 = vpop.f32.mrb[0].mxu0
    %v1995 = vpop.f32.mrb[0].mxu0
    %1996 = vdwg.mxu0
    %v1997 = vstv %s1912
    %v1998 = vmul.f32 %v1997, %v1992
    %v1999 = vadd.f32 %v1908, %v1998
    %v2000 = vpack.c.bf16 %v1999, %v1999
    %2001 = vmatprep.subr.bf16.mxu0 0
    %2002 = vmatpush1.bf16.msra.mxu0 %v110
    %2003 = vmatprep.subr.bf16.mxu0 0
    %2004 = vmatpush1.bf16.msra.mxu0 %v111
    %2005 = vmatprep.subr.bf16.mxu0 0
    %2006 = vmatpush1.bf16.msra.mxu0 %v112
    %2007 = vmatprep.subr.bf16.mxu0 0
    %2008 = vmatpush1.bf16.msra.mxu0 %v113
    %2009 = vmatprep.subr.bf16.mxu0 0
    %2010 = vmatpush1.bf16.msra.mxu0 %v114
    %2011 = vmatprep.subr.bf16.mxu0 0
    %2012 = vmatpush1.bf16.msra.mxu0 %v115
    %2013 = vmatprep.subr.bf16.mxu0 0
    %2014 = vmatpush1.bf16.msra.mxu0 %v116
    %2015 = vmatprep.subr.bf16.mxu0 0
    %2016 = vmatpush1.bf16.msra.mxu0 %v117
    %2017 = vmatprep.subr.bf16.mxu0 0
    %2018 = vmatpush1.bf16.msra.mxu0 0
    %2019 = vmatprep.subr.bf16.mxu0 0
    %2020 = vmatpush1.bf16.msra.mxu0 0
    %2021 = vmatprep.subr.bf16.mxu0 0
    %2022 = vmatpush1.bf16.msra.mxu0 0
    %2023 = vmatprep.subr.bf16.mxu0 0
    %2024 = vmatpush1.bf16.msra.mxu0 0
    %2025 = vmatprep.subr.bf16.mxu0 0
    %2026 = vmatpush1.bf16.msra.mxu0 0
    %2027 = vmatprep.subr.bf16.mxu0 0
    %2028 = vmatpush1.bf16.msra.mxu0 0
    %2029 = vmatprep.subr.bf16.mxu0 0
    %2030 = vmatpush1.bf16.msra.mxu0 0
    %2031 = vmatprep.subr.bf16.mxu0 0
    %2032 = vmatpush1.bf16.msra.mxu0 0
    %2033 = vmatprep.mubr.bf16.mxu0 0
    %2034 = vmatmul.mubr.bf16.gmra.mrb[0].mxu0 %v2000
    %v2035 = vpop.f32.mrb[0].mxu0
    %v2036 = vadd.f32 %v142, %v2035
    %v2037 = vpop.f32.mrb[0].mxu0
    %v2038 = vpop.f32.mrb[0].mxu0
    %v2039 = vpop.f32.mrb[0].mxu0
    %2040 = vdwg.mxu0
    %v2041 = vtanh.pop %v2036
    %v2042 = vpack.c.bf16 %v2041, %v2041
    %2043 = vmatprep.subr.bf16.mxu0 0
    %2044 = vmatpush1.bf16.msra.mxu0 %v134
    %2045 = vmatprep.subr.bf16.mxu0 0
    %2046 = vmatpush1.bf16.msra.mxu0 %v135
    %2047 = vmatprep.subr.bf16.mxu0 0
    %2048 = vmatpush1.bf16.msra.mxu0 %v136
    %2049 = vmatprep.subr.bf16.mxu0 0
    %2050 = vmatpush1.bf16.msra.mxu0 %v137
    %2051 = vmatprep.subr.bf16.mxu0 0
    %2052 = vmatpush1.bf16.msra.mxu0 %v138
    %2053 = vmatprep.subr.bf16.mxu0 0
    %2054 = vmatpush1.bf16.msra.mxu0 %v139
    %2055 = vmatprep.subr.bf16.mxu0 0
    %2056 = vmatpush1.bf16.msra.mxu0 %v140
    %2057 = vmatprep.subr.bf16.mxu0 0
    %2058 = vmatpush1.bf16.msra.mxu0 %v141
    %2059 = vmatprep.subr.bf16.mxu0 0
    %2060 = vmatpush1.bf16.msra.mxu0 0
    %2061 = vmatprep.subr.bf16.mxu0 0
    %2062 = vmatpush1.bf16.msra.mxu0 0
    %2063 = vmatprep.subr.bf16.mxu0 0
    %2064 = vmatpush1.bf16.msra.mxu0 0
    %2065 = vmatprep.subr.bf16.mxu0 0
    %2066 = vmatpush1.bf16.msra.mxu0 0
    %2067 = vmatprep.subr.bf16.mxu0 0
    %2068 = vmatpush1.bf16.msra.mxu0 0
    %2069 = vmatprep.subr.bf16.mxu0 0
    %2070 = vmatpush1.bf16.msra.mxu0 0
    %2071 = vmatprep.subr.bf16.mxu0 0
    %2072 = vmatpush1.bf16.msra.mxu0 0
    %2073 = vmatprep.subr.bf16.mxu0 0
    %2074 = vmatpush1.bf16.msra.mxu0 0
    %2075 = vmatprep.mubr.bf16.mxu0 0
    %2076 = vmatmul.mubr.bf16.gmra.mrb[0].mxu0 %v2042
    %v2077 = vpop.f32.mrb[0].mxu0
    %v2078 = vadd.f32 %v143, %v2077
    %v2079 = vpop.f32.mrb[0].mxu0
    %v2080 = vpop.f32.mrb[0].mxu0
    %v2081 = vpop.f32.mrb[0].mxu0
    %2082 = vdwg.mxu0
    %v2083 = vmul.f32 %v1997, %v2078
    %v2084 = vadd.f32 %v1908, %v2083
    %v2085 = vpack.c.bf16 %v2084, %v2084
    %2086 = vmatprep.subr.bf16.mxu0 0
    %2087 = vmatpush1.bf16.msra.mxu0 %v110
    %2088 = vmatprep.subr.bf16.mxu0 0
    %2089 = vmatpush1.bf16.msra.mxu0 %v111
    %2090 = vmatprep.subr.bf16.mxu0 0
    %2091 = vmatpush1.bf16.msra.mxu0 %v112
    %2092 = vmatprep.subr.bf16.mxu0 0
    %2093 = vmatpush1.bf16.msra.mxu0 %v113
    %2094 = vmatprep.subr.bf16.mxu0 0
    %2095 = vmatpush1.bf16.msra.mxu0 %v114
    %2096 = vmatprep.subr.bf16.mxu0 0
    %2097 = vmatpush1.bf16.msra.mxu0 %v115
    %2098 = vmatprep.subr.bf16.mxu0 0
    %2099 = vmatpush1.bf16.msra.mxu0 %v116
    %2100 = vmatprep.subr.bf16.mxu0 0
    %2101 = vmatpush1.bf16.msra.mxu0 %v117
    %2102 = vmatprep.subr.bf16.mxu0 0
    %2103 = vmatpush1.bf16.msra.mxu0 0
    %2104 = vmatprep.subr.bf16.mxu0 0
    %2105 = vmatpush1.bf16.msra.mxu0 0
    %2106 = vmatprep.subr.bf16.mxu0 0
    %2107 = vmatpush1.bf16.msra.mxu0 0
    %2108 = vmatprep.subr.bf16.mxu0 0
    %2109 = vmatpush1.bf16.msra.mxu0 0
    %2110 = vmatprep.subr.bf16.mxu0 0
    %2111 = vmatpush1.bf16.msra.mxu0 0
    %2112 = vmatprep.subr.bf16.mxu0 0
    %2113 = vmatpush1.bf16.msra.mxu0 0
    %2114 = vmatprep.subr.bf16.mxu0 0
    %2115 = vmatpush1.bf16.msra.mxu0 0
    %2116 = vmatprep.subr.bf16.mxu0 0
    %2117 = vmatpush1.bf16.msra.mxu0 0
    %2118 = vmatprep.mubr.bf16.mxu0 0
    %2119 = vmatmul.mubr.bf16.gmra.mrb[0].mxu0 %v2085
    %v2120 = vpop.f32.mrb[0].mxu0
    %v2121 = vadd.f32 %v142, %v2120
    %v2122 = vpop.f32.mrb[0].mxu0
    %v2123 = vpop.f32.mrb[0].mxu0
    %v2124 = vpop.f32.mrb[0].mxu0
    %2125 = vdwg.mxu0
    %v2126 = vtanh.pop %v2121
    %v2127 = vpack.c.bf16 %v2126, %v2126
    %2128 = vmatprep.subr.bf16.mxu0 0
    %2129 = vmatpush1.bf16.msra.mxu0 %v134
    %2130 = vmatprep.subr.bf16.mxu0 0
    %2131 = vmatpush1.bf16.msra.mxu0 %v135
    %2132 = vmatprep.subr.bf16.mxu0 0
    %2133 = vmatpush1.bf16.msra.mxu0 %v136
    %2134 = vmatprep.subr.bf16.mxu0 0
    %2135 = vmatpush1.bf16.msra.mxu0 %v137
    %2136 = vmatprep.subr.bf16.mxu0 0
    %2137 = vmatpush1.bf16.msra.mxu0 %v138
    %2138 = vmatprep.subr.bf16.mxu0 0
    %2139 = vmatpush1.bf16.msra.mxu0 %v139
    %2140 = vmatprep.subr.bf16.mxu0 0
    %2141 = vmatpush1.bf16.msra.mxu0 %v140
    %2142 = vmatprep.subr.bf16.mxu0 0
    %2143 = vmatpush1.bf16.msra.mxu0 %v141
    %2144 = vmatprep.subr.bf16.mxu0 0
    %2145 = vmatpush1.bf16.msra.mxu0 0
    %2146 = vmatprep.subr.bf16.mxu0 0
    %2147 = vmatpush1.bf16.msra.mxu0 0
    %2148 = vmatprep.subr.bf16.mxu0 0
    %2149 = vmatpush1.bf16.msra.mxu0 0
    %2150 = vmatprep.subr.bf16.mxu0 0
    %2151 = vmatpush1.bf16.msra.mxu0 0
    %2152 = vmatprep.subr.bf16.mxu0 0
    %2153 = vmatpush1.bf16.msra.mxu0 0
    %2154 = vmatprep.subr.bf16.mxu0 0
    %2155 = vmatpush1.bf16.msra.mxu0 0
    %2156 = vmatprep.subr.bf16.mxu0 0
    %2157 = vmatpush1.bf16.msra.mxu0 0
    %2158 = vmatprep.subr.bf16.mxu0 0
    %2159 = vmatpush1.bf16.msra.mxu0 0
    %2160 = vmatprep.mubr.bf16.mxu0 0
    %2161 = vmatmul.mubr.bf16.gmra.mrb[0].mxu0 %v2127
    %v2162 = vpop.f32.mrb[0].mxu0
    %v2163 = vadd.f32 %v143, %v2162
    %v2164 = vpop.f32.mrb[0].mxu0
    %v2165 = vpop.f32.mrb[0].mxu0
    %v2166 = vpop.f32.mrb[0].mxu0
    %2167 = vdwg.mxu0
    %v2168 = vstv %s1911
    %v2169 = vmul.f32 %v2168, %v2163
    %v2170 = vadd.f32 %v1908, %v2169
    %v2171 = vpack.c.bf16 %v2170, %v2170
    %2172 = vmatprep.subr.bf16.mxu0 0
    %2173 = vmatpush1.bf16.msra.mxu0 %v110
    %2174 = vmatprep.subr.bf16.mxu0 0
    %2175 = vmatpush1.bf16.msra.mxu0 %v111
    %2176 = vmatprep.subr.bf16.mxu0 0
    %2177 = vmatpush1.bf16.msra.mxu0 %v112
    %2178 = vmatprep.subr.bf16.mxu0 0
    %2179 = vmatpush1.bf16.msra.mxu0 %v113
    %2180 = vmatprep.subr.bf16.mxu0 0
    %2181 = vmatpush1.bf16.msra.mxu0 %v114
    %2182 = vmatprep.subr.bf16.mxu0 0
    %2183 = vmatpush1.bf16.msra.mxu0 %v115
    %2184 = vmatprep.subr.bf16.mxu0 0
    %2185 = vmatpush1.bf16.msra.mxu0 %v116
    %2186 = vmatprep.subr.bf16.mxu0 0
    %2187 = vmatpush1.bf16.msra.mxu0 %v117
    %2188 = vmatprep.subr.bf16.mxu0 0
    %2189 = vmatpush1.bf16.msra.mxu0 0
    %2190 = vmatprep.subr.bf16.mxu0 0
    %2191 = vmatpush1.bf16.msra.mxu0 0
    %2192 = vmatprep.subr.bf16.mxu0 0
    %2193 = vmatpush1.bf16.msra.mxu0 0
    %2194 = vmatprep.subr.bf16.mxu0 0
    %2195 = vmatpush1.bf16.msra.mxu0 0
    %2196 = vmatprep.subr.bf16.mxu0 0
    %2197 = vmatpush1.bf16.msra.mxu0 0
    %2198 = vmatprep.subr.bf16.mxu0 0
    %2199 = vmatpush1.bf16.msra.mxu0 0
    %2200 = vmatprep.subr.bf16.mxu0 0
    %2201 = vmatpush1.bf16.msra.mxu0 0
    %2202 = vmatprep.subr.bf16.mxu0 0
    %2203 = vmatpush1.bf16.msra.mxu0 0
    %2204 = vmatprep.mubr.bf16.mxu0 0
    %2205 = vmatmul.mubr.bf16.gmra.mrb[0].mxu0 %v2171
    %v2206 = vpop.f32.mrb[0].mxu0
    %v2207 = vadd.f32 %v142, %v2206
    %v2208 = vpop.f32.mrb[0].mxu0
    %v2209 = vpop.f32.mrb[0].mxu0
    %v2210 = vpop.f32.mrb[0].mxu0
    %2211 = vdwg.mxu0
    %v2212 = vtanh.pop %v2207
    %v2213 = vpack.c.bf16 %v2212, %v2212
    %2214 = vmatprep.subr.bf16.mxu0 0
    %2215 = vmatpush1.bf16.msra.mxu0 %v134
    %2216 = vmatprep.subr.bf16.mxu0 0
    %2217 = vmatpush1.bf16.msra.mxu0 %v135
    %2218 = vmatprep.subr.bf16.mxu0 0
    %2219 = vmatpush1.bf16.msra.mxu0 %v136
    %2220 = vmatprep.subr.bf16.mxu0 0
    %2221 = vmatpush1.bf16.msra.mxu0 %v137
    %2222 = vmatprep.subr.bf16.mxu0 0
    %2223 = vmatpush1.bf16.msra.mxu0 %v138
    %2224 = vmatprep.subr.bf16.mxu0 0
    %2225 = vmatpush1.bf16.msra.mxu0 %v139
    %2226 = vmatprep.subr.bf16.mxu0 0
    %2227 = vmatpush1.bf16.msra.mxu0 %v140
    %2228 = vmatprep.subr.bf16.mxu0 0
    %2229 = vmatpush1.bf16.msra.mxu0 %v141
    %2230 = vmatprep.subr.bf16.mxu0 0
    %2231 = vmatpush1.bf16.msra.mxu0 0
    %2232 = vmatprep.subr.bf16.mxu0 0
    %2233 = vmatpush1.bf16.msra.mxu0 0
    %2234 = vmatprep.subr.bf16.mxu0 0
    %2235 = vmatpush1.bf16.msra.mxu0 0
    %2236 = vmatprep.subr.bf16.mxu0 0
    %2237 = vmatpush1.bf16.msra.mxu0 0
    %2238 = vmatprep.subr.bf16.mxu0 0
    %2239 = vmatpush1.bf16.msra.mxu0 0
    %2240 = vmatprep.subr.bf16.mxu0 0
    %2241 = vmatpush1.bf16.msra.mxu0 0
    %2242 = vmatprep.subr.bf16.mxu0 0
    %2243 = vmatpush1.bf16.msra.mxu0 0
    %2244 = vmatprep.subr.bf16.mxu0 0
    %2245 = vmatpush1.bf16.msra.mxu0 0
    %2246 = vmatprep.mubr.bf16.mxu0 0
    %2247 = vmatmul.mubr.bf16.gmra.mrb[0].mxu0 %v2213
    %v2248 = vpop.f32.mrb[0].mxu0
    %v2249 = vadd.f32 %v143, %v2248
    %v2250 = vpop.f32.mrb[0].mxu0
    %v2251 = vpop.f32.mrb[0].mxu0
    %v2252 = vpop.f32.mrb[0].mxu0
    %2253 = vdwg.mxu0
    %v2254 = vmul.f32 %v2078, 2.0
    %v2255 = vadd.f32 %v1992, %v2254
    %v2256 = vmul.f32 %v2163, 2.0
    %v2257 = vadd.f32 %v2255, %v2256
    %v2258 = vadd.f32 %v2257, %v2249
    %v2259 = vstv %s1913
    %v2260 = vmul.f32 %v2259, %v2258
    %v2261 = vadd.f32 %v1908, %v2260
    %s2262 = scalar_lea.vmem [#allocation13], 48
    %2263 = vst [vmem:[%s2262] sm:$0xff] %v2261
    %s2264 = sld [smem:[#allocation2 + $0x6]]
    %s2265 = sld [smem:[#allocation7 + $0x6]]
    %s2266 = sld [smem:[#allocation8 + $0x6]]
    %v2267 = vpack.c.bf16 %v2261, %v2261
    %2268 = vmatprep.subr.bf16.mxu0 0
    %2269 = vmatpush1.bf16.msra.mxu0 %v110
    %2270 = vmatprep.subr.bf16.mxu0 0
    %2271 = vmatpush1.bf16.msra.mxu0 %v111
    %2272 = vmatprep.subr.bf16.mxu0 0
    %2273 = vmatpush1.bf16.msra.mxu0 %v112
    %2274 = vmatprep.subr.bf16.mxu0 0
    %2275 = vmatpush1.bf16.msra.mxu0 %v113
    %2276 = vmatprep.subr.bf16.mxu0 0
    %2277 = vmatpush1.bf16.msra.mxu0 %v114
    %2278 = vmatprep.subr.bf16.mxu0 0
    %2279 = vmatpush1.bf16.msra.mxu0 %v115
    %2280 = vmatprep.subr.bf16.mxu0 0
    %2281 = vmatpush1.bf16.msra.mxu0 %v116
    %2282 = vmatprep.subr.bf16.mxu0 0
    %2283 = vmatpush1.bf16.msra.mxu0 %v117
    %2284 = vmatprep.subr.bf16.mxu0 0
    %2285 = vmatpush1.bf16.msra.mxu0 0
    %2286 = vmatprep.subr.bf16.mxu0 0
    %2287 = vmatpush1.bf16.msra.mxu0 0
    %2288 = vmatprep.subr.bf16.mxu0 0
    %2289 = vmatpush1.bf16.msra.mxu0 0
    %2290 = vmatprep.subr.bf16.mxu0 0
    %2291 = vmatpush1.bf16.msra.mxu0 0
    %2292 = vmatprep.subr.bf16.mxu0 0
    %2293 = vmatpush1.bf16.msra.mxu0 0
    %2294 = vmatprep.subr.bf16.mxu0 0
    %2295 = vmatpush1.bf16.msra.mxu0 0
    %2296 = vmatprep.subr.bf16.mxu0 0
    %2297 = vmatpush1.bf16.msra.mxu0 0
    %2298 = vmatprep.subr.bf16.mxu0 0
    %2299 = vmatpush1.bf16.msra.mxu0 0
    %2300 = vmatprep.mubr.bf16.mxu0 0
    %2301 = vmatmul.mubr.bf16.gmra.mrb[0].mxu0 %v2267
    %v2302 = vpop.f32.mrb[0].mxu0
    %v2303 = vadd.f32 %v142, %v2302
    %v2304 = vpop.f32.mrb[0].mxu0
    %v2305 = vpop.f32.mrb[0].mxu0
    %v2306 = vpop.f32.mrb[0].mxu0
    %2307 = vdwg.mxu0
    %v2308 = vtanh.pop %v2303
    %v2309 = vpack.c.bf16 %v2308, %v2308
    %2310 = vmatprep.subr.bf16.mxu0 0
    %2311 = vmatpush1.bf16.msra.mxu0 %v134
    %2312 = vmatprep.subr.bf16.mxu0 0
    %2313 = vmatpush1.bf16.msra.mxu0 %v135
    %2314 = vmatprep.subr.bf16.mxu0 0
    %2315 = vmatpush1.bf16.msra.mxu0 %v136
    %2316 = vmatprep.subr.bf16.mxu0 0
    %2317 = vmatpush1.bf16.msra.mxu0 %v137
    %2318 = vmatprep.subr.bf16.mxu0 0
    %2319 = vmatpush1.bf16.msra.mxu0 %v138
    %2320 = vmatprep.subr.bf16.mxu0 0
    %2321 = vmatpush1.bf16.msra.mxu0 %v139
    %2322 = vmatprep.subr.bf16.mxu0 0
    %2323 = vmatpush1.bf16.msra.mxu0 %v140
    %2324 = vmatprep.subr.bf16.mxu0 0
    %2325 = vmatpush1.bf16.msra.mxu0 %v141
    %2326 = vmatprep.subr.bf16.mxu0 0
    %2327 = vmatpush1.bf16.msra.mxu0 0
    %2328 = vmatprep.subr.bf16.mxu0 0
    %2329 = vmatpush1.bf16.msra.mxu0 0
    %2330 = vmatprep.subr.bf16.mxu0 0
    %2331 = vmatpush1.bf16.msra.mxu0 0
    %2332 = vmatprep.subr.bf16.mxu0 0
    %2333 = vmatpush1.bf16.msra.mxu0 0
    %2334 = vmatprep.subr.bf16.mxu0 0
    %2335 = vmatpush1.bf16.msra.mxu0 0
    %2336 = vmatprep.subr.bf16.mxu0 0
    %2337 = vmatpush1.bf16.msra.mxu0 0
    %2338 = vmatprep.subr.bf16.mxu0 0
    %2339 = vmatpush1.bf16.msra.mxu0 0
    %2340 = vmatprep.subr.bf16.mxu0 0
    %2341 = vmatpush1.bf16.msra.mxu0 0
    %2342 = vmatprep.mubr.bf16.mxu0 0
    %2343 = vmatmul.mubr.bf16.gmra.mrb[0].mxu0 %v2309
    %v2344 = vpop.f32.mrb[0].mxu0
    %v2345 = vadd.f32 %v143, %v2344
    %v2346 = vpop.f32.mrb[0].mxu0
    %v2347 = vpop.f32.mrb[0].mxu0
    %v2348 = vpop.f32.mrb[0].mxu0
    %2349 = vdwg.mxu0
    %v2350 = vstv %s2265
    %v2351 = vmul.f32 %v2350, %v2345
    %v2352 = vadd.f32 %v2261, %v2351
    %v2353 = vpack.c.bf16 %v2352, %v2352
    %2354 = vmatprep.subr.bf16.mxu0 0
    %2355 = vmatpush1.bf16.msra.mxu0 %v110
    %2356 = vmatprep.subr.bf16.mxu0 0
    %2357 = vmatpush1.bf16.msra.mxu0 %v111
    %2358 = vmatprep.subr.bf16.mxu0 0
    %2359 = vmatpush1.bf16.msra.mxu0 %v112
    %2360 = vmatprep.subr.bf16.mxu0 0
    %2361 = vmatpush1.bf16.msra.mxu0 %v113
    %2362 = vmatprep.subr.bf16.mxu0 0
    %2363 = vmatpush1.bf16.msra.mxu0 %v114
    %2364 = vmatprep.subr.bf16.mxu0 0
    %2365 = vmatpush1.bf16.msra.mxu0 %v115
    %2366 = vmatprep.subr.bf16.mxu0 0
    %2367 = vmatpush1.bf16.msra.mxu0 %v116
    %2368 = vmatprep.subr.bf16.mxu0 0
    %2369 = vmatpush1.bf16.msra.mxu0 %v117
    %2370 = vmatprep.subr.bf16.mxu0 0
    %2371 = vmatpush1.bf16.msra.mxu0 0
    %2372 = vmatprep.subr.bf16.mxu0 0
    %2373 = vmatpush1.bf16.msra.mxu0 0
    %2374 = vmatprep.subr.bf16.mxu0 0
    %2375 = vmatpush1.bf16.msra.mxu0 0
    %2376 = vmatprep.subr.bf16.mxu0 0
    %2377 = vmatpush1.bf16.msra.mxu0 0
    %2378 = vmatprep.subr.bf16.mxu0 0
    %2379 = vmatpush1.bf16.msra.mxu0 0
    %2380 = vmatprep.subr.bf16.mxu0 0
    %2381 = vmatpush1.bf16.msra.mxu0 0
    %2382 = vmatprep.subr.bf16.mxu0 0
    %2383 = vmatpush1.bf16.msra.mxu0 0
    %2384 = vmatprep.subr.bf16.mxu0 0
    %2385 = vmatpush1.bf16.msra.mxu0 0
    %2386 = vmatprep.mubr.bf16.mxu0 0
    %2387 = vmatmul.mubr.bf16.gmra.mrb[0].mxu0 %v2353
    %v2388 = vpop.f32.mrb[0].mxu0
    %v2389 = vadd.f32 %v142, %v2388
    %v2390 = vpop.f32.mrb[0].mxu0
    %v2391 = vpop.f32.mrb[0].mxu0
    %v2392 = vpop.f32.mrb[0].mxu0
    %2393 = vdwg.mxu0
    %v2394 = vtanh.pop %v2389
    %v2395 = vpack.c.bf16 %v2394, %v2394
    %2396 = vmatprep.subr.bf16.mxu0 0
    %2397 = vmatpush1.bf16.msra.mxu0 %v134
    %2398 = vmatprep.subr.bf16.mxu0 0
    %2399 = vmatpush1.bf16.msra.mxu0 %v135
    %2400 = vmatprep.subr.bf16.mxu0 0
    %2401 = vmatpush1.bf16.msra.mxu0 %v136
    %2402 = vmatprep.subr.bf16.mxu0 0
    %2403 = vmatpush1.bf16.msra.mxu0 %v137
    %2404 = vmatprep.subr.bf16.mxu0 0
    %2405 = vmatpush1.bf16.msra.mxu0 %v138
    %2406 = vmatprep.subr.bf16.mxu0 0
    %2407 = vmatpush1.bf16.msra.mxu0 %v139
    %2408 = vmatprep.subr.bf16.mxu0 0
    %2409 = vmatpush1.bf16.msra.mxu0 %v140
    %2410 = vmatprep.subr.bf16.mxu0 0
    %2411 = vmatpush1.bf16.msra.mxu0 %v141
    %2412 = vmatprep.subr.bf16.mxu0 0
    %2413 = vmatpush1.bf16.msra.mxu0 0
    %2414 = vmatprep.subr.bf16.mxu0 0
    %2415 = vmatpush1.bf16.msra.mxu0 0
    %2416 = vmatprep.subr.bf16.mxu0 0
    %2417 = vmatpush1.bf16.msra.mxu0 0
    %2418 = vmatprep.subr.bf16.mxu0 0
    %2419 = vmatpush1.bf16.msra.mxu0 0
    %2420 = vmatprep.subr.bf16.mxu0 0
    %2421 = vmatpush1.bf16.msra.mxu0 0
    %2422 = vmatprep.subr.bf16.mxu0 0
    %2423 = vmatpush1.bf16.msra.mxu0 0
    %2424 = vmatprep.subr.bf16.mxu0 0
    %2425 = vmatpush1.bf16.msra.mxu0 0
    %2426 = vmatprep.subr.bf16.mxu0 0
    %2427 = vmatpush1.bf16.msra.mxu0 0
    %2428 = vmatprep.mubr.bf16.mxu0 0
    %2429 = vmatmul.mubr.bf16.gmra.mrb[0].mxu0 %v2395
    %v2430 = vpop.f32.mrb[0].mxu0
    %v2431 = vadd.f32 %v143, %v2430
    %v2432 = vpop.f32.mrb[0].mxu0
    %v2433 = vpop.f32.mrb[0].mxu0
    %v2434 = vpop.f32.mrb[0].mxu0
    %2435 = vdwg.mxu0
    %v2436 = vmul.f32 %v2350, %v2431
    %v2437 = vadd.f32 %v2261, %v2436
    %v2438 = vpack.c.bf16 %v2437, %v2437
    %2439 = vmatprep.subr.bf16.mxu0 0
    %2440 = vmatpush1.bf16.msra.mxu0 %v110
    %2441 = vmatprep.subr.bf16.mxu0 0
    %2442 = vmatpush1.bf16.msra.mxu0 %v111
    %2443 = vmatprep.subr.bf16.mxu0 0
    %2444 = vmatpush1.bf16.msra.mxu0 %v112
    %2445 = vmatprep.subr.bf16.mxu0 0
    %2446 = vmatpush1.bf16.msra.mxu0 %v113
    %2447 = vmatprep.subr.bf16.mxu0 0
    %2448 = vmatpush1.bf16.msra.mxu0 %v114
    %2449 = vmatprep.subr.bf16.mxu0 0
    %2450 = vmatpush1.bf16.msra.mxu0 %v115
    %2451 = vmatprep.subr.bf16.mxu0 0
    %2452 = vmatpush1.bf16.msra.mxu0 %v116
    %2453 = vmatprep.subr.bf16.mxu0 0
    %2454 = vmatpush1.bf16.msra.mxu0 %v117
    %2455 = vmatprep.subr.bf16.mxu0 0
    %2456 = vmatpush1.bf16.msra.mxu0 0
    %2457 = vmatprep.subr.bf16.mxu0 0
    %2458 = vmatpush1.bf16.msra.mxu0 0
    %2459 = vmatprep.subr.bf16.mxu0 0
    %2460 = vmatpush1.bf16.msra.mxu0 0
    %2461 = vmatprep.subr.bf16.mxu0 0
    %2462 = vmatpush1.bf16.msra.mxu0 0
    %2463 = vmatprep.subr.bf16.mxu0 0
    %2464 = vmatpush1.bf16.msra.mxu0 0
    %2465 = vmatprep.subr.bf16.mxu0 0
    %2466 = vmatpush1.bf16.msra.mxu0 0
    %2467 = vmatprep.subr.bf16.mxu0 0
    %2468 = vmatpush1.bf16.msra.mxu0 0
    %2469 = vmatprep.subr.bf16.mxu0 0
    %2470 = vmatpush1.bf16.msra.mxu0 0
    %2471 = vmatprep.mubr.bf16.mxu0 0
    %2472 = vmatmul.mubr.bf16.gmra.mrb[0].mxu0 %v2438
    %v2473 = vpop.f32.mrb[0].mxu0
    %v2474 = vadd.f32 %v142, %v2473
    %v2475 = vpop.f32.mrb[0].mxu0
    %v2476 = vpop.f32.mrb[0].mxu0
    %v2477 = vpop.f32.mrb[0].mxu0
    %2478 = vdwg.mxu0
    %v2479 = vtanh.pop %v2474
    %v2480 = vpack.c.bf16 %v2479, %v2479
    %2481 = vmatprep.subr.bf16.mxu0 0
    %2482 = vmatpush1.bf16.msra.mxu0 %v134
    %2483 = vmatprep.subr.bf16.mxu0 0
    %2484 = vmatpush1.bf16.msra.mxu0 %v135
    %2485 = vmatprep.subr.bf16.mxu0 0
    %2486 = vmatpush1.bf16.msra.mxu0 %v136
    %2487 = vmatprep.subr.bf16.mxu0 0
    %2488 = vmatpush1.bf16.msra.mxu0 %v137
    %2489 = vmatprep.subr.bf16.mxu0 0
    %2490 = vmatpush1.bf16.msra.mxu0 %v138
    %2491 = vmatprep.subr.bf16.mxu0 0
    %2492 = vmatpush1.bf16.msra.mxu0 %v139
    %2493 = vmatprep.subr.bf16.mxu0 0
    %2494 = vmatpush1.bf16.msra.mxu0 %v140
    %2495 = vmatprep.subr.bf16.mxu0 0
    %2496 = vmatpush1.bf16.msra.mxu0 %v141
    %2497 = vmatprep.subr.bf16.mxu0 0
    %2498 = vmatpush1.bf16.msra.mxu0 0
    %2499 = vmatprep.subr.bf16.mxu0 0
    %2500 = vmatpush1.bf16.msra.mxu0 0
    %2501 = vmatprep.subr.bf16.mxu0 0
    %2502 = vmatpush1.bf16.msra.mxu0 0
    %2503 = vmatprep.subr.bf16.mxu0 0
    %2504 = vmatpush1.bf16.msra.mxu0 0
    %2505 = vmatprep.subr.bf16.mxu0 0
    %2506 = vmatpush1.bf16.msra.mxu0 0
    %2507 = vmatprep.subr.bf16.mxu0 0
    %2508 = vmatpush1.bf16.msra.mxu0 0
    %2509 = vmatprep.subr.bf16.mxu0 0
    %2510 = vmatpush1.bf16.msra.mxu0 0
    %2511 = vmatprep.subr.bf16.mxu0 0
    %2512 = vmatpush1.bf16.msra.mxu0 0
    %2513 = vmatprep.mubr.bf16.mxu0 0
    %2514 = vmatmul.mubr.bf16.gmra.mrb[0].mxu0 %v2480
    %v2515 = vpop.f32.mrb[0].mxu0
    %v2516 = vadd.f32 %v143, %v2515
    %v2517 = vpop.f32.mrb[0].mxu0
    %v2518 = vpop.f32.mrb[0].mxu0
    %v2519 = vpop.f32.mrb[0].mxu0
    %2520 = vdwg.mxu0
    %v2521 = vstv %s2264
    %v2522 = vmul.f32 %v2521, %v2516
    %v2523 = vadd.f32 %v2261, %v2522
    %v2524 = vpack.c.bf16 %v2523, %v2523
    %2525 = vmatprep.subr.bf16.mxu0 0
    %2526 = vmatpush1.bf16.msra.mxu0 %v110
    %2527 = vmatprep.subr.bf16.mxu0 0
    %2528 = vmatpush1.bf16.msra.mxu0 %v111
    %2529 = vmatprep.subr.bf16.mxu0 0
    %2530 = vmatpush1.bf16.msra.mxu0 %v112
    %2531 = vmatprep.subr.bf16.mxu0 0
    %2532 = vmatpush1.bf16.msra.mxu0 %v113
    %2533 = vmatprep.subr.bf16.mxu0 0
    %2534 = vmatpush1.bf16.msra.mxu0 %v114
    %2535 = vmatprep.subr.bf16.mxu0 0
    %2536 = vmatpush1.bf16.msra.mxu0 %v115
    %2537 = vmatprep.subr.bf16.mxu0 0
    %2538 = vmatpush1.bf16.msra.mxu0 %v116
    %2539 = vmatprep.subr.bf16.mxu0 0
    %2540 = vmatpush1.bf16.msra.mxu0 %v117
    %2541 = vmatprep.subr.bf16.mxu0 0
    %2542 = vmatpush1.bf16.msra.mxu0 0
    %2543 = vmatprep.subr.bf16.mxu0 0
    %2544 = vmatpush1.bf16.msra.mxu0 0
    %2545 = vmatprep.subr.bf16.mxu0 0
    %2546 = vmatpush1.bf16.msra.mxu0 0
    %2547 = vmatprep.subr.bf16.mxu0 0
    %2548 = vmatpush1.bf16.msra.mxu0 0
    %2549 = vmatprep.subr.bf16.mxu0 0
    %2550 = vmatpush1.bf16.msra.mxu0 0
    %2551 = vmatprep.subr.bf16.mxu0 0
    %2552 = vmatpush1.bf16.msra.mxu0 0
    %2553 = vmatprep.subr.bf16.mxu0 0
    %2554 = vmatpush1.bf16.msra.mxu0 0
    %2555 = vmatprep.subr.bf16.mxu0 0
    %2556 = vmatpush1.bf16.msra.mxu0 0
    %2557 = vmatprep.mubr.bf16.mxu0 0
    %2558 = vmatmul.mubr.bf16.gmra.mrb[0].mxu0 %v2524
    %v2559 = vpop.f32.mrb[0].mxu0
    %v2560 = vadd.f32 %v142, %v2559
    %v2561 = vpop.f32.mrb[0].mxu0
    %v2562 = vpop.f32.mrb[0].mxu0
    %v2563 = vpop.f32.mrb[0].mxu0
    %2564 = vdwg.mxu0
    %v2565 = vtanh.pop %v2560
    %v2566 = vpack.c.bf16 %v2565, %v2565
    %2567 = vmatprep.subr.bf16.mxu0 0
    %2568 = vmatpush1.bf16.msra.mxu0 %v134
    %2569 = vmatprep.subr.bf16.mxu0 0
    %2570 = vmatpush1.bf16.msra.mxu0 %v135
    %2571 = vmatprep.subr.bf16.mxu0 0
    %2572 = vmatpush1.bf16.msra.mxu0 %v136
    %2573 = vmatprep.subr.bf16.mxu0 0
    %2574 = vmatpush1.bf16.msra.mxu0 %v137
    %2575 = vmatprep.subr.bf16.mxu0 0
    %2576 = vmatpush1.bf16.msra.mxu0 %v138
    %2577 = vmatprep.subr.bf16.mxu0 0
    %2578 = vmatpush1.bf16.msra.mxu0 %v139
    %2579 = vmatprep.subr.bf16.mxu0 0
    %2580 = vmatpush1.bf16.msra.mxu0 %v140
    %2581 = vmatprep.subr.bf16.mxu0 0
    %2582 = vmatpush1.bf16.msra.mxu0 %v141
    %2583 = vmatprep.subr.bf16.mxu0 0
    %2584 = vmatpush1.bf16.msra.mxu0 0
    %2585 = vmatprep.subr.bf16.mxu0 0
    %2586 = vmatpush1.bf16.msra.mxu0 0
    %2587 = vmatprep.subr.bf16.mxu0 0
    %2588 = vmatpush1.bf16.msra.mxu0 0
    %2589 = vmatprep.subr.bf16.mxu0 0
    %2590 = vmatpush1.bf16.msra.mxu0 0
    %2591 = vmatprep.subr.bf16.mxu0 0
    %2592 = vmatpush1.bf16.msra.mxu0 0
    %2593 = vmatprep.subr.bf16.mxu0 0
    %2594 = vmatpush1.bf16.msra.mxu0 0
    %2595 = vmatprep.subr.bf16.mxu0 0
    %2596 = vmatpush1.bf16.msra.mxu0 0
    %2597 = vmatprep.subr.bf16.mxu0 0
    %2598 = vmatpush1.bf16.msra.mxu0 0
    %2599 = vmatprep.mubr.bf16.mxu0 0
    %2600 = vmatmul.mubr.bf16.gmra.mrb[0].mxu0 %v2566
    %v2601 = vpop.f32.mrb[0].mxu0
    %v2602 = vadd.f32 %v143, %v2601
    %v2603 = vpop.f32.mrb[0].mxu0
    %v2604 = vpop.f32.mrb[0].mxu0
    %v2605 = vpop.f32.mrb[0].mxu0
    %2606 = vdwg.mxu0
    %v2607 = vmul.f32 %v2431, 2.0
    %v2608 = vadd.f32 %v2345, %v2607
    %v2609 = vmul.f32 %v2516, 2.0
    %v2610 = vadd.f32 %v2608, %v2609
    %v2611 = vadd.f32 %v2610, %v2602
    %v2612 = vstv %s2266
    %v2613 = vmul.f32 %v2612, %v2611
    %v2614 = vadd.f32 %v2261, %v2613
    %s2615 = scalar_lea.vmem [#allocation13], 56
    %2616 = vst [vmem:[%s2615] sm:$0xff] %v2614
    // Predicated region
    $region54: #{tpu_custom_call.1} parent=1 // pred_check
      _
    $region55: #{tpu_custom_call.1} parent=1 // pred_check_branch
      %2618 = sbr.rel (0) target = $region57
    $region56: #{tpu_custom_call.1} parent=1 // pred_region
      %s2620 = ssub.s32 1024, 1024
      %2621 = vsyncadd [#allocation4], %s2620
      %s2622 = sshll.u32 [#allocation13], 4
      %s2623 = int_to_ptr.vmem [resolvable:$true] %s2622
      %2628 = dma.vmem_to_hbm [thread:$0]  %s2623, 1024, %s8, [#allocation4], 128, 128, 8
    $region57: #{tpu_custom_call.1} parent=1 // pred_fallthru
      _
    // Predicated region
    $region58: #{tpu_custom_call.1} parent=1 // pred_check
      _
    $region59: #{tpu_custom_call.1} parent=1 // pred_check_branch
      %2630 = sbr.rel (0) target = $region61
    $region60: #{tpu_custom_call.1} parent=1 // pred_region
      %2631 = dma.done [#allocation4], 1024
    $region61: #{tpu_custom_call.1} parent=1 // pred_fallthru
      _
    %2632 = vsyncpa [#allocation3], 1
    %2633 = vsyncpa [#allocation12], 1
    %2634 = vsyncpa [#allocation4], 1
    %2635 = vsyncpa [#allocation5], 1
    %2636 = vsyncpa [#allocation6], 1
    %2637 = vsyncpa [#allocation9], 1

</llo_original>
